<compile_context>
chip_gen: v7x
topology: tpu7x:2x2x1
jax: 0.10.0
libtpu: 0.0.40
codegen_flags: <defaults>
</compile_context>

<pallas_src>
import functools
import string

import jax
import jax.numpy as jnp
from jax.experimental import pallas as pl
from jax.experimental.pallas import tpu as pltpu

D_EMB = 256          # dim_embs
C_OUT = 128          # dim_conv_out per conv branch
C2 = 2 * C_OUT       # fused conv channels: [f3 | f6]
K3, K6 = 3, 6        # conv kernel sizes
PAD3, PAD6 = 2, 5    # conv paddings
MAXPAD = PAD6        # single shared left zero-pad


def _round_up(x, m):
    return (x + m - 1) // m * m


def convnet_kernel(x_ref, wc_ref, bc_ref, wl_ref, bl_ref, out_ref,
                   *, lout3, lout6):
    tb, lp, d = x_ref.shape
    c2 = wc_ref.shape[-1]
    m = tb * lp
    mout = m - 8                          # 8-aligned; >= (tb-1)*lp + lout6

    # Fold (batch, time) into the matmul M dimension.
    xflat = x_ref[...].reshape(m, d)      # bf16 (tb*lp, d)

    # Fused conv: 6 shifted tap matmuls with N = 256, f32 MXU accumulation.
    z = jnp.zeros((mout, c2), jnp.float32)
    for k in range(wc_ref.shape[0]):
        z = z + jnp.dot(xflat[k:k + mout, :], wc_ref[k],
                        preferred_element_type=jnp.float32)

    act = jnp.tanh(z + bc_ref[...])       # f32, (mout, c2)

    # Pad back to tb*lp rows (tile aligned) and fold time per example.
    act3d = jnp.concatenate(
        [act, jnp.zeros((8, c2), jnp.float32)], axis=0).reshape(tb, lp, c2)

    # Mask time positions past each branch's true output length with a value
    # below tanh's range so they can never win the global max-pool.
    tau = jax.lax.broadcasted_iota(jnp.int32, (tb, lp, c2), 1)
    ch = jax.lax.broadcasted_iota(jnp.int32, (tb, lp, c2), 2)
    limit = jnp.where(ch < (c2 // 2), lout3, lout6)
    act3d = jnp.where(tau < limit, act3d, -2.0)

    feat = jnp.max(act3d, axis=1)         # (tb, c2) == [f3 | f6]

    # Final linear (lane-dense, 128 padded class columns) + log_softmax.
    logits = jnp.dot(feat.astype(wl_ref.dtype), wl_ref[...],
                     preferred_element_type=jnp.float32) + bl_ref[...]
    mx = jnp.max(logits, axis=-1, keepdims=True)
    lse = jnp.log(jnp.sum(jnp.exp(logits - mx), axis=-1, keepdims=True)) + mx
    out_ref[...] = logits - lse


def convnet_forward(x_emb, w3, b3, w6, b6, wl, bl, *, tb=8):
    """x_emb: (B, L, D) f32 embedded sentences, already padded to equal L."""
    B, L, D = x_emb.shape
    NC = wl.shape[1]
    lout3 = L + 2 * PAD3 - K3 + 1         # PyTorch Conv1d output lengths
    lout6 = L + 2 * PAD6 - K6 + 1

    # Time layout: 5 leading zeros (shared conv pad), L real rows, >=8
    # trailing zeros; Lp a multiple of 8 so in-kernel reshapes are aligned.
    lp = _round_up(L + MAXPAD + 8, 8)
    b_pad = _round_up(B, tb)

    x_pad = jnp.zeros((b_pad, lp, D), jnp.bfloat16)
    x_pad = x_pad.at[:B, MAXPAD:MAXPAD + L, :].set(x_emb.astype(jnp.bfloat16))

    # Fused conv weights (6, D, 256): ch [0:128) = k3 (taps 3..5),
    # ch [128:256) = k6 (taps 0..5).
    wc = jnp.zeros((K6, D, C2), jnp.bfloat16)
    wc = wc.at[K6 - K3:, :, :C_OUT].set(w3.astype(jnp.bfloat16))
    wc = wc.at[:, :, C_OUT:].set(w6.astype(jnp.bfloat16))
    bc = jnp.concatenate([b3, b6], axis=-1).astype(jnp.float32)   # (1, 256)

    # Lane-dense final linear: pad classes to a multiple of 128; padded
    # columns get bias -1e30 so exp() underflows to 0 in the softmax.
    ncp = max(128, _round_up(NC, 128))
    wl_p = jnp.zeros((C2, ncp), jnp.bfloat16).at[:, :NC].set(
        wl.astype(jnp.bfloat16))
    bl_p = jnp.full((1, ncp), -1e30, jnp.float32).at[:, :NC].set(
        bl.astype(jnp.float32))

    kernel = functools.partial(convnet_kernel, lout3=lout3, lout6=lout6)

    out = pl.pallas_call(
        kernel,
        out_shape=jax.ShapeDtypeStruct((b_pad, ncp), jnp.float32),
        grid_spec=pltpu.PrefetchScalarGridSpec(
            num_scalar_prefetch=0,
            grid=(b_pad // tb,),
            in_specs=[
                pl.BlockSpec((tb, lp, D), lambda b: (b, 0, 0)),    # x
                pl.BlockSpec((K6, D, C2), lambda b: (0, 0, 0)),    # fused conv W
                pl.BlockSpec((1, C2), lambda b: (0, 0)),           # fused conv b
                pl.BlockSpec((C2, ncp), lambda b: (0, 0)),         # linear W
                pl.BlockSpec((1, ncp), lambda b: (0, 0)),          # linear b
            ],
            out_specs=pl.BlockSpec((tb, ncp), lambda b: (b, 0)),
        ),
        compiler_params=pltpu.CompilerParams(
            dimension_semantics=("parallel",)),
    )(x_pad, wc, bc, wl_p, bl_p)

    return out[:B, :NC]


def convnet_reference(x_emb, w3, b3, w6, b6, wl, bl):
    """Pure-JAX f32 reference matching the PyTorch forward."""
    B, L, D = x_emb.shape

    def conv_tanh(w, b, pad):
        K = w.shape[0]
        lout = L + 2 * pad - K + 1
        xp = jnp.pad(x_emb, ((0, 0), (pad, pad), (0, 0)))
        y = jnp.zeros((B, lout, w.shape[-1]), jnp.float32) + b[None]
        for k in range(K):
            y = y + jnp.einsum('bld,dc->blc', xp[:, k:k + lout, :], w[k])
        return jnp.tanh(y)

    f3 = jnp.max(conv_tanh(w3, b3, PAD3), axis=1)
    f6 = jnp.max(conv_tanh(w6, b6, PAD6), axis=1)
    feat = jnp.concatenate([f3, f6], axis=-1)
    logits = feat @ wl + bl
    return jax.nn.log_softmax(logits, axis=-1)


if __name__ == "__main__":
    # vocabulary identical to the PyTorch module
    all_chars_ls = list(string.ascii_lowercase + string.digits +
                        string.punctuation + string.whitespace + "’")
    vocab = len(all_chars_ls)
    num_classes = 10

    key = jax.random.PRNGKey(0)
    k_e, k_w3, k_b3, k_w6, k_b6, k_wl, k_bl = jax.random.split(key, 7)
    E = jax.random.uniform(k_e, (vocab, D_EMB), jnp.float32)
    # PyTorch Conv1d weight is (C_out, C_in, K); stored here as (K, C_in, C_out)
    w3 = 0.05 * jax.random.normal(k_w3, (K3, D_EMB, C_OUT), jnp.float32)
    b3 = 0.05 * jax.random.normal(k_b3, (1, C_OUT), jnp.float32)
    w6 = 0.05 * jax.random.normal(k_w6, (K6, D_EMB, C_OUT), jnp.float32)
    b6 = 0.05 * jax.random.normal(k_b6, (1, C_OUT), jnp.float32)
    # PyTorch Linear weight is (num_classes, 2*C_OUT); stored transposed
    wl = 0.05 * jax.random.normal(k_wl, (2 * C_OUT, num_classes), jnp.float32)
    bl = 0.05 * jax.random.normal(k_bl, (1, num_classes), jnp.float32)

    # batch of equal-length sentences; char->index + embedding gather is host
    # glue mirroring the python loop in the PyTorch module
    # TODO(synk): ragged-length batches (Utils.pad_list_of_tensors) are handled
    # by host-side zero-padding of the embedded tensors to the max length.
    sentences = ["hello tpu!", "pallas ok."]
    idx = jnp.array([[all_chars_ls.index(c) for c in s] for s in sentences],
                    dtype=jnp.int32)                      # (B, L) = (2, 10)
    x_emb = jnp.take(E, idx, axis=0)                      # (B, 10, 256)

    out = convnet_forward(x_emb, w3, b3, w6, b6, wl, bl)
    jax.block_until_ready(out)

    assert out.shape == (2, num_classes)
    # rows of log_softmax must exponentiate-sum to 1
    assert jnp.allclose(jnp.sum(jnp.exp(out), axis=-1), 1.0, atol=1e-4)
    # and match the pure-JAX f32 reference up to bf16-matmul tolerance
    ref = convnet_reference(x_emb, w3, b3, w6, b6, wl, bl)
    assert jnp.allclose(out, ref, atol=0.1)
    print("KERNEL_OK")
</pallas_src>

<mosaic_0001>
module attributes {stable_mosaic.version = 11 : i64} {
  func.func @convnet_kernel(%arg0: i32, %arg1: memref<8x24x256xbf16, #tpu.memory_space<vmem>>, %arg2: memref<6x256x256xbf16, #tpu.memory_space<vmem>>, %arg3: memref<1x256xf32, #tpu.memory_space<vmem>>, %arg4: memref<256x128xbf16, #tpu.memory_space<vmem>>, %arg5: memref<1x128xf32, #tpu.memory_space<vmem>>, %arg6: memref<8x128xf32, #tpu.memory_space<vmem>>) attributes {dimension_semantics = [#tpu.dimension_semantics<parallel>], iteration_bounds = array<i64: 1>, scalar_prefetch = 0 : i64, scratch_operands = 0 : i64, tpu.core_type = #tpu.core_type<tc>, window_params = [{transform_indices = @transform_0, window_bounds = array<i64: 8, 24, 256>}, {pipeline_mode = #tpu.pipeline_mode<synchronous>, transform_indices = @transform_1, window_bounds = array<i64: 6, 256, 256>}, {pipeline_mode = #tpu.pipeline_mode<synchronous>, transform_indices = @transform_2, window_bounds = array<i64: 1, 256>}, {pipeline_mode = #tpu.pipeline_mode<synchronous>, transform_indices = @transform_3, window_bounds = array<i64: 256, 128>}, {pipeline_mode = #tpu.pipeline_mode<synchronous>, transform_indices = @transform_4, window_bounds = array<i64: 1, 128>}, {transform_indices = @transform_5, window_bounds = array<i64: 8, 128>}]} {
    %c0 = arith.constant 0 : index
    %c0_0 = arith.constant 0 : index
    %c0_1 = arith.constant 0 : index
    %0 = vector.load %arg1[%c0, %c0_0, %c0_1] : memref<8x24x256xbf16, #tpu.memory_space<vmem>>, vector<8x24x256xbf16>
    %1 = vector.shape_cast %0 : vector<8x24x256xbf16> to vector<192x256xbf16>
    %cst = arith.constant 0.000000e+00 : f32
    %2 = vector.broadcast %cst : f32 to vector<184x256xf32>
    %3 = vector.extract_strided_slice %1 {offsets = [0, 0], sizes = [184, 256], strides = [1, 1]} : vector<192x256xbf16> to vector<184x256xbf16>
    %c0_2 = arith.constant 0 : index
    %c0_3 = arith.constant 0 : index
    %c0_4 = arith.constant 0 : index
    %4 = vector.load %arg2[%c0_2, %c0_3, %c0_4] : memref<6x256x256xbf16, #tpu.memory_space<vmem>>, vector<1x256x256xbf16>
    %5 = vector.shape_cast %4 : vector<1x256x256xbf16> to vector<256x256xbf16>
    %cst_5 = arith.constant dense<0.000000e+00> : vector<184x256xf32>
    %6 = tpu.matmul %3, %5, %cst_5 {dimension_numbers = #tpu.dot_dimension_numbers<[1], [0], [0], [1], [0, 0, 1, 1], [], []>} : vector<184x256xbf16>, vector<256x256xbf16>, vector<184x256xf32> -> vector<184x256xf32>
    %7 = arith.addf %2, %6 : vector<184x256xf32>
    %8 = vector.extract_strided_slice %1 {offsets = [1, 0], sizes = [184, 256], strides = [1, 1]} : vector<192x256xbf16> to vector<184x256xbf16>
    %c1 = arith.constant 1 : index
    %c0_6 = arith.constant 0 : index
    %c0_7 = arith.constant 0 : index
    %9 = vector.load %arg2[%c1, %c0_6, %c0_7] : memref<6x256x256xbf16, #tpu.memory_space<vmem>>, vector<1x256x256xbf16>
    %10 = vector.shape_cast %9 : vector<1x256x256xbf16> to vector<256x256xbf16>
    %cst_8 = arith.constant dense<0.000000e+00> : vector<184x256xf32>
    %11 = tpu.matmul %8, %10, %cst_8 {dimension_numbers = #tpu.dot_dimension_numbers<[1], [0], [0], [1], [0, 0, 1, 1], [], []>} : vector<184x256xbf16>, vector<256x256xbf16>, vector<184x256xf32> -> vector<184x256xf32>
    %12 = arith.addf %7, %11 : vector<184x256xf32>
    %13 = vector.extract_strided_slice %1 {offsets = [2, 0], sizes = [184, 256], strides = [1, 1]} : vector<192x256xbf16> to vector<184x256xbf16>
    %c2 = arith.constant 2 : index
    %c0_9 = arith.constant 0 : index
    %c0_10 = arith.constant 0 : index
    %14 = vector.load %arg2[%c2, %c0_9, %c0_10] : memref<6x256x256xbf16, #tpu.memory_space<vmem>>, vector<1x256x256xbf16>
    %15 = vector.shape_cast %14 : vector<1x256x256xbf16> to vector<256x256xbf16>
    %cst_11 = arith.constant dense<0.000000e+00> : vector<184x256xf32>
    %16 = tpu.matmul %13, %15, %cst_11 {dimension_numbers = #tpu.dot_dimension_numbers<[1], [0], [0], [1], [0, 0, 1, 1], [], []>} : vector<184x256xbf16>, vector<256x256xbf16>, vector<184x256xf32> -> vector<184x256xf32>
    %17 = arith.addf %12, %16 : vector<184x256xf32>
    %18 = vector.extract_strided_slice %1 {offsets = [3, 0], sizes = [184, 256], strides = [1, 1]} : vector<192x256xbf16> to vector<184x256xbf16>
    %c3 = arith.constant 3 : index
    %c0_12 = arith.constant 0 : index
    %c0_13 = arith.constant 0 : index
    %19 = vector.load %arg2[%c3, %c0_12, %c0_13] : memref<6x256x256xbf16, #tpu.memory_space<vmem>>, vector<1x256x256xbf16>
    %20 = vector.shape_cast %19 : vector<1x256x256xbf16> to vector<256x256xbf16>
    %cst_14 = arith.constant dense<0.000000e+00> : vector<184x256xf32>
    %21 = tpu.matmul %18, %20, %cst_14 {dimension_numbers = #tpu.dot_dimension_numbers<[1], [0], [0], [1], [0, 0, 1, 1], [], []>} : vector<184x256xbf16>, vector<256x256xbf16>, vector<184x256xf32> -> vector<184x256xf32>
    %22 = arith.addf %17, %21 : vector<184x256xf32>
    %23 = vector.extract_strided_slice %1 {offsets = [4, 0], sizes = [184, 256], strides = [1, 1]} : vector<192x256xbf16> to vector<184x256xbf16>
    %c4 = arith.constant 4 : index
    %c0_15 = arith.constant 0 : index
    %c0_16 = arith.constant 0 : index
    %24 = vector.load %arg2[%c4, %c0_15, %c0_16] : memref<6x256x256xbf16, #tpu.memory_space<vmem>>, vector<1x256x256xbf16>
    %25 = vector.shape_cast %24 : vector<1x256x256xbf16> to vector<256x256xbf16>
    %cst_17 = arith.constant dense<0.000000e+00> : vector<184x256xf32>
    %26 = tpu.matmul %23, %25, %cst_17 {dimension_numbers = #tpu.dot_dimension_numbers<[1], [0], [0], [1], [0, 0, 1, 1], [], []>} : vector<184x256xbf16>, vector<256x256xbf16>, vector<184x256xf32> -> vector<184x256xf32>
    %27 = arith.addf %22, %26 : vector<184x256xf32>
    %28 = vector.extract_strided_slice %1 {offsets = [5, 0], sizes = [184, 256], strides = [1, 1]} : vector<192x256xbf16> to vector<184x256xbf16>
    %c5 = arith.constant 5 : index
    %c0_18 = arith.constant 0 : index
    %c0_19 = arith.constant 0 : index
    %29 = vector.load %arg2[%c5, %c0_18, %c0_19] : memref<6x256x256xbf16, #tpu.memory_space<vmem>>, vector<1x256x256xbf16>
    %30 = vector.shape_cast %29 : vector<1x256x256xbf16> to vector<256x256xbf16>
    %cst_20 = arith.constant dense<0.000000e+00> : vector<184x256xf32>
    %31 = tpu.matmul %28, %30, %cst_20 {dimension_numbers = #tpu.dot_dimension_numbers<[1], [0], [0], [1], [0, 0, 1, 1], [], []>} : vector<184x256xbf16>, vector<256x256xbf16>, vector<184x256xf32> -> vector<184x256xf32>
    %32 = arith.addf %27, %31 : vector<184x256xf32>
    %c0_21 = arith.constant 0 : index
    %c0_22 = arith.constant 0 : index
    %33 = vector.load %arg3[%c0_21, %c0_22] : memref<1x256xf32, #tpu.memory_space<vmem>>, vector<1x256xf32>
    %34 = vector.broadcast %33 : vector<1x256xf32> to vector<184x256xf32>
    %35 = arith.addf %32, %34 : vector<184x256xf32>
    %36 = math.tanh %35 : vector<184x256xf32>
    %cst_23 = arith.constant 0.000000e+00 : f32
    %37 = vector.broadcast %cst_23 : f32 to vector<8x256xf32>
    %38 = tpu.concatenate %36, %37 in 0 : vector<184x256xf32>, vector<8x256xf32> -> vector<192x256xf32>
    %39 = vector.shape_cast %38 : vector<192x256xf32> to vector<8x24x256xf32>
    %40 = tpu.iota {dimensions = array<i32: 1>} : vector<8x24x256xi32>
    %41 = tpu.iota {dimensions = array<i32: 2>} : vector<8x24x256xi32>
    %c128_i32 = arith.constant 128 : i32
    %42 = vector.broadcast %c128_i32 : i32 to vector<8x24x256xi32>
    %43 = arith.cmpi slt, %41, %42 : vector<8x24x256xi32>
    %c12_i32 = arith.constant 12 : i32
    %c15_i32 = arith.constant 15 : i32
    %44 = vector.broadcast %c12_i32 : i32 to vector<8x24x256xi32>
    %45 = vector.broadcast %c15_i32 : i32 to vector<8x24x256xi32>
    %46 = arith.select %43, %44, %45 : vector<8x24x256xi1>, vector<8x24x256xi32>
    %47 = arith.cmpi slt, %40, %46 : vector<8x24x256xi32>
    %cst_24 = arith.constant -2.000000e+00 : f32
    %48 = vector.broadcast %cst_24 : f32 to vector<8x24x256xf32>
    %49 = arith.select %47, %39, %48 : vector<8x24x256xi1>, vector<8x24x256xf32>
    %cst_25 = arith.constant dense<0xFF800000> : vector<8x256xf32>
    %50 = vector.multi_reduction <maximumf>, %49, %cst_25 [1] : vector<8x24x256xf32> to vector<8x256xf32>
    %51 = arith.truncf %50 : vector<8x256xf32> to vector<8x256xbf16>
    %c0_26 = arith.constant 0 : index
    %c0_27 = arith.constant 0 : index
    %52 = vector.load %arg4[%c0_26, %c0_27] : memref<256x128xbf16, #tpu.memory_space<vmem>>, vector<256x128xbf16>
    %cst_28 = arith.constant dense<0.000000e+00> : vector<8x128xf32>
    %53 = tpu.matmul %51, %52, %cst_28 {dimension_numbers = #tpu.dot_dimension_numbers<[1], [0], [0], [1], [0, 0, 1, 1], [], []>} : vector<8x256xbf16>, vector<256x128xbf16>, vector<8x128xf32> -> vector<8x128xf32>
    %c0_29 = arith.constant 0 : index
    %c0_30 = arith.constant 0 : index
    %54 = vector.load %arg5[%c0_29, %c0_30] : memref<1x128xf32, #tpu.memory_space<vmem>>, vector<1x128xf32>
    %55 = vector.broadcast %54 : vector<1x128xf32> to vector<8x128xf32>
    %56 = arith.addf %53, %55 : vector<8x128xf32>
    %cst_31 = arith.constant dense<0xFF800000> : vector<8xf32>
    %57 = vector.multi_reduction <maximumf>, %56, %cst_31 [1] : vector<8x128xf32> to vector<8xf32>
    %58 = vector.shape_cast %57 : vector<8xf32> to vector<8x1xf32>
    %59 = vector.broadcast %58 : vector<8x1xf32> to vector<8x128xf32>
    %60 = arith.subf %56, %59 : vector<8x128xf32>
    %61 = math.exp %60 : vector<8x128xf32>
    %cst_32 = arith.constant dense<0.000000e+00> : vector<8xf32>
    %62 = vector.multi_reduction <add>, %61, %cst_32 [1] : vector<8x128xf32> to vector<8xf32>
    %63 = vector.shape_cast %62 : vector<8xf32> to vector<8x1xf32>
    %64 = math.log %63 : vector<8x1xf32>
    %65 = arith.addf %64, %58 : vector<8x1xf32>
    %66 = vector.broadcast %65 : vector<8x1xf32> to vector<8x128xf32>
    %67 = arith.subf %56, %66 : vector<8x128xf32>
    %c0_33 = arith.constant 0 : index
    %c0_34 = arith.constant 0 : index
    %68 = vector.load %arg6[%c0_33, %c0_34] : memref<8x128xf32, #tpu.memory_space<vmem>>, vector<8x128xf32>
    tpu.vector_store %arg6[%c0_33, %c0_34], %67 {strides = array<i32>} : memref<8x128xf32, #tpu.memory_space<vmem>>, vector<8x128xf32>,
    return
  }
  func.func @transform_0(%arg0: i32) -> (i32, i32, i32) {
    %c0_i32 = arith.constant 0 : i32
    %c0_i32_0 = arith.constant 0 : i32
    %c0_i32_1 = arith.constant 0 : i32
    return %arg0, %c0_i32, %c0_i32_0 : i32, i32, i32
  }
  func.func @transform_1(%arg0: i32) -> (i32, i32, i32) {
    %c0_i32 = arith.constant 0 : i32
    %c0_i32_0 = arith.constant 0 : i32
    %c0_i32_1 = arith.constant 0 : i32
    %c0_i32_2 = arith.constant 0 : i32
    return %c0_i32, %c0_i32_0, %c0_i32_1 : i32, i32, i32
  }
  func.func @transform_2(%arg0: i32) -> (i32, i32) {
    %c0_i32 = arith.constant 0 : i32
    %c0_i32_0 = arith.constant 0 : i32
    %c0_i32_1 = arith.constant 0 : i32
    return %c0_i32, %c0_i32_0 : i32, i32
  }
  func.func @transform_3(%arg0: i32) -> (i32, i32) {
    %c0_i32 = arith.constant 0 : i32
    %c0_i32_0 = arith.constant 0 : i32
    %c0_i32_1 = arith.constant 0 : i32
    return %c0_i32, %c0_i32_0 : i32, i32
  }
  func.func @transform_4(%arg0: i32) -> (i32, i32) {
    %c0_i32 = arith.constant 0 : i32
    %c0_i32_0 = arith.constant 0 : i32
    %c0_i32_1 = arith.constant 0 : i32
    return %c0_i32, %c0_i32_0 : i32, i32
  }
  func.func @transform_5(%arg0: i32) -> (i32, i32) {
    %c0_i32 = arith.constant 0 : i32
    %c0_i32_0 = arith.constant 0 : i32
    return %arg0, %c0_i32 : i32, i32
  }
}

</mosaic_0001>

<llo_original>
// kernel: tpu_custom_call.1
$region0: #{tpu_custom_call.1}
  #allocation0 [shape = 'u32[]', space=smem, size = 0x4, offset = 0x4, fixed_abs, tag = 'smem constant byte address 0x4 - core index']
  #allocation1 [shape = 'u32[144,128]{1,0:T(1,128)}', space=vmem, size = 0x12000, scoped, tag = 'internal scratch']
  %s0 = inlined_call_operand.hbm [shape: bf16[8,24,256], index: 0, kind: input, shape index: {}]
  %s1 = inlined_call_operand.hbm [shape: bf16[6,256,256], index: 1, kind: input, shape index: {}]
  %s2 = inlined_call_operand.vmem [shape: f32[1,256], index: 2, kind: input, shape index: {}]
  %s3 = inlined_call_operand.hbm [shape: bf16[256,128], index: 3, kind: input, shape index: {}]
  %s4 = inlined_call_operand.vmem [shape: f32[1,128], index: 4, kind: input, shape index: {}]
  %s5 = inlined_call_operand.hbm [shape: f32[8,128], index: 5, kind: output, shape index: {}]
  %s6 = sld [smem:[#allocation0]]
  $region42: #{tpu_custom_call.1} parent=0
    _
  %s8 = ssub.s32 1, %s6
  %s9 = scalar_select 0, %s8, %s6
  $region1: #{tpu_custom_call.1} parent=0
    #allocation2 [shape = 'u8[98304]{0}', space=vmem, size = 0x18000, scoped, tag = 'input window, operand 0, single buffered']
    #allocation3 [shape = 's32[1]{0}', space=sflag, size = 0x4, scoped, tag = 'scoped memory for tpu_custom_call.1']
    #allocation4 [shape = 's32[1]{0}', space=sflag, size = 0x4, scoped, tag = 'scoped memory for tpu_custom_call.1']
    #allocation5 [shape = 'u8[786432]{0}', space=vmem, size = 0xc0000, scoped, tag = 'input window, operand 1, single buffered']
    #allocation6 [shape = 's32[1]{0}', space=sflag, size = 0x4, scoped, tag = 'scoped memory for tpu_custom_call.1']
    #allocation7 [shape = 'u8[65536]{0}', space=vmem, size = 0x10000, scoped, tag = 'input window, operand 3, single buffered']
    #allocation8 [shape = 'u8[4096]{0}', space=vmem, size = 0x1000, scoped, tag = 'output window, operand 0, single buffered']
    %10 = vsyncpa [#allocation3], 0
    %11 = vsyncpa [#allocation6], 0
    %12 = vsyncpa [#allocation4], 0
    // Predicated region
    $region2: #{tpu_custom_call.1} parent=1 // pred_check
      _
    $region3: #{tpu_custom_call.1} parent=1 // pred_check_branch
      %14 = sbr.rel (0) target = $region5
    $region4: #{tpu_custom_call.1} parent=1 // pred_region
      %s16 = ssub.s32 3072, 3072
      %17 = vsyncadd [#allocation3], %s16
      %s18 = sshll.u32 [#allocation2], 4
      %s19 = int_to_ptr.vmem [resolvable:$true] %s18
      %24 = dma.hbm_to_vmem [thread:$0]  %s0, 3072, %s19, [#allocation3], 128, 128, 8
    $region5: #{tpu_custom_call.1} parent=1 // pred_fallthru
      _
    // Predicated region
    $region6: #{tpu_custom_call.1} parent=1 // pred_check
      _
    $region7: #{tpu_custom_call.1} parent=1 // pred_check_branch
      %26 = sbr.rel (0) target = $region9
    $region8: #{tpu_custom_call.1} parent=1 // pred_region
      %s28 = ssub.s32 24576, 24576
      %29 = vsyncadd [#allocation6], %s28
      %s30 = sshll.u32 [#allocation5], 4
      %s31 = int_to_ptr.vmem [resolvable:$true] %s30
      %36 = dma.hbm_to_vmem [thread:$0]  %s1, 24576, %s31, [#allocation6], 128, 128, 8
    $region9: #{tpu_custom_call.1} parent=1 // pred_fallthru
      _
    // Predicated region
    $region10: #{tpu_custom_call.1} parent=1 // pred_check
      _
    $region11: #{tpu_custom_call.1} parent=1 // pred_check_branch
      %38 = sbr.rel (0) target = $region13
    $region12: #{tpu_custom_call.1} parent=1 // pred_region
      _
    $region13: #{tpu_custom_call.1} parent=1 // pred_fallthru
      _
    // Predicated region
    $region14: #{tpu_custom_call.1} parent=1 // pred_check
      _
    $region15: #{tpu_custom_call.1} parent=1 // pred_check_branch
      %40 = sbr.rel (0) target = $region17
    $region16: #{tpu_custom_call.1} parent=1 // pred_region
      %s42 = ssub.s32 2048, 2048
      %43 = vsyncadd [#allocation6], %s42
      %s44 = sshll.u32 [#allocation7], 4
      %s45 = int_to_ptr.vmem [resolvable:$true] %s44
      %50 = dma.hbm_to_vmem [thread:$0]  %s3, 2048, %s45, [#allocation6], 64, 64, 4
    $region17: #{tpu_custom_call.1} parent=1 // pred_fallthru
      _
    // Predicated region
    $region18: #{tpu_custom_call.1} parent=1 // pred_check
      _
    $region19: #{tpu_custom_call.1} parent=1 // pred_check_branch
      %52 = sbr.rel (0) target = $region21
    $region20: #{tpu_custom_call.1} parent=1 // pred_region
      _
    $region21: #{tpu_custom_call.1} parent=1 // pred_fallthru
      _
    // Predicated region
    $region22: #{tpu_custom_call.1} parent=1 // pred_check
      _
    $region23: #{tpu_custom_call.1} parent=1 // pred_check_branch
      %54 = sbr.rel (0) target = $region25
    $region24: #{tpu_custom_call.1} parent=1 // pred_region
      %55 = dma.done [#allocation3], 3072
    $region25: #{tpu_custom_call.1} parent=1 // pred_fallthru
      _
    // Predicated region
    $region26: #{tpu_custom_call.1} parent=1 // pred_check
      _
    $region27: #{tpu_custom_call.1} parent=1 // pred_check_branch
      %57 = sbr.rel (0) target = $region29
    $region28: #{tpu_custom_call.1} parent=1 // pred_region
      %58 = dma.done [#allocation6], 24576
    $region29: #{tpu_custom_call.1} parent=1 // pred_fallthru
      _
    // Predicated region
    $region30: #{tpu_custom_call.1} parent=1 // pred_check
      _
    $region31: #{tpu_custom_call.1} parent=1 // pred_check_branch
      %60 = sbr.rel (0) target = $region33
    $region32: #{tpu_custom_call.1} parent=1 // pred_region
      %61 = dma.done [#allocation6], 2048
    $region33: #{tpu_custom_call.1} parent=1 // pred_fallthru
      _
    %v63 = vld [vmem:[#allocation2] sm:$0xff]
    %v64 = vld [vmem:[#allocation2 + $0x8] sm:$0xff]
    %v65 = vld [vmem:[#allocation2 + $0x10] sm:$0xff]
    %v66 = vld [vmem:[#allocation2 + $0x18] sm:$0xff]
    %v67 = vld [vmem:[#allocation2 + $0x20] sm:$0xff]
    %v68 = vld [vmem:[#allocation2 + $0x28] sm:$0xff]
    %v69 = vld [vmem:[#allocation2 + $0x30] sm:$0xff]
    %v70 = vld [vmem:[#allocation2 + $0x38] sm:$0xff]
    %v71 = vld [vmem:[#allocation2 + $0x40] sm:$0xff]
    %v72 = vld [vmem:[#allocation2 + $0x48] sm:$0xff]
    %v73 = vld [vmem:[#allocation2 + $0x50] sm:$0xff]
    %v74 = vld [vmem:[#allocation2 + $0x58] sm:$0xff]
    %v75 = vld [vmem:[#allocation2 + $0x60] sm:$0xff]
    %v76 = vld [vmem:[#allocation2 + $0x68] sm:$0xff]
    %v77 = vld [vmem:[#allocation2 + $0x70] sm:$0xff]
    %v78 = vld [vmem:[#allocation2 + $0x78] sm:$0xff]
    %v79 = vld [vmem:[#allocation2 + $0x80] sm:$0xff]
    %v80 = vld [vmem:[#allocation2 + $0x88] sm:$0xff]
    %v81 = vld [vmem:[#allocation2 + $0x90] sm:$0xff]
    %v82 = vld [vmem:[#allocation2 + $0x98] sm:$0xff]
    %v83 = vld [vmem:[#allocation2 + $0xa0] sm:$0xff]
    %v84 = vld [vmem:[#allocation2 + $0xa8] sm:$0xff]
    %v85 = vld [vmem:[#allocation2 + $0xb0] sm:$0xff]
    %v86 = vld [vmem:[#allocation2 + $0xb8] sm:$0xff]
    %v87 = vld [vmem:[#allocation5] sm:$0xff]
    %v88 = vld [vmem:[#allocation5 + $0x8] sm:$0xff]
    %v89 = vld [vmem:[#allocation5 + $0x10] sm:$0xff]
    %v90 = vld [vmem:[#allocation5 + $0x18] sm:$0xff]
    %v91 = vld [vmem:[#allocation5 + $0x20] sm:$0xff]
    %v92 = vld [vmem:[#allocation5 + $0x28] sm:$0xff]
    %v93 = vld [vmem:[#allocation5 + $0x30] sm:$0xff]
    %v94 = vld [vmem:[#allocation5 + $0x38] sm:$0xff]
    %v95 = vld [vmem:[#allocation5 + $0x40] sm:$0xff]
    %v96 = vld [vmem:[#allocation5 + $0x48] sm:$0xff]
    %v97 = vld [vmem:[#allocation5 + $0x50] sm:$0xff]
    %v98 = vld [vmem:[#allocation5 + $0x58] sm:$0xff]
    %v99 = vld [vmem:[#allocation5 + $0x60] sm:$0xff]
    %v100 = vld [vmem:[#allocation5 + $0x68] sm:$0xff]
    %v101 = vld [vmem:[#allocation5 + $0x70] sm:$0xff]
    %v102 = vld [vmem:[#allocation5 + $0x78] sm:$0xff]
    %v103 = vld [vmem:[#allocation5 + $0x80] sm:$0xff]
    %v104 = vld [vmem:[#allocation5 + $0x88] sm:$0xff]
    %v105 = vld [vmem:[#allocation5 + $0x90] sm:$0xff]
    %v106 = vld [vmem:[#allocation5 + $0x98] sm:$0xff]
    %v107 = vld [vmem:[#allocation5 + $0xa0] sm:$0xff]
    %v108 = vld [vmem:[#allocation5 + $0xa8] sm:$0xff]
    %v109 = vld [vmem:[#allocation5 + $0xb0] sm:$0xff]
    %v110 = vld [vmem:[#allocation5 + $0xb8] sm:$0xff]
    %v111 = vld [vmem:[#allocation5 + $0xc0] sm:$0xff]
    %v112 = vld [vmem:[#allocation5 + $0xc8] sm:$0xff]
    %v113 = vld [vmem:[#allocation5 + $0xd0] sm:$0xff]
    %v114 = vld [vmem:[#allocation5 + $0xd8] sm:$0xff]
    %v115 = vld [vmem:[#allocation5 + $0xe0] sm:$0xff]
    %v116 = vld [vmem:[#allocation5 + $0xe8] sm:$0xff]
    %v117 = vld [vmem:[#allocation5 + $0xf0] sm:$0xff]
    %v118 = vld [vmem:[#allocation5 + $0xf8] sm:$0xff]
    %s119 = scalar_lea.vmem [#allocation5], 256
    %v120 = vld [vmem:[%s119] sm:$0xff]
    %v121 = vld [vmem:[%s119 + $0x8] sm:$0xff]
    %v122 = vld [vmem:[%s119 + $0x10] sm:$0xff]
    %v123 = vld [vmem:[%s119 + $0x18] sm:$0xff]
    %v124 = vld [vmem:[%s119 + $0x20] sm:$0xff]
    %v125 = vld [vmem:[%s119 + $0x28] sm:$0xff]
    %v126 = vld [vmem:[%s119 + $0x30] sm:$0xff]
    %v127 = vld [vmem:[%s119 + $0x38] sm:$0xff]
    %v128 = vld [vmem:[%s119 + $0x40] sm:$0xff]
    %v129 = vld [vmem:[%s119 + $0x48] sm:$0xff]
    %v130 = vld [vmem:[%s119 + $0x50] sm:$0xff]
    %v131 = vld [vmem:[%s119 + $0x58] sm:$0xff]
    %v132 = vld [vmem:[%s119 + $0x60] sm:$0xff]
    %v133 = vld [vmem:[%s119 + $0x68] sm:$0xff]
    %v134 = vld [vmem:[%s119 + $0x70] sm:$0xff]
    %v135 = vld [vmem:[%s119 + $0x78] sm:$0xff]
    %v136 = vld [vmem:[%s119 + $0x80] sm:$0xff]
    %v137 = vld [vmem:[%s119 + $0x88] sm:$0xff]
    %v138 = vld [vmem:[%s119 + $0x90] sm:$0xff]
    %v139 = vld [vmem:[%s119 + $0x98] sm:$0xff]
    %v140 = vld [vmem:[%s119 + $0xa0] sm:$0xff]
    %v141 = vld [vmem:[%s119 + $0xa8] sm:$0xff]
    %v142 = vld [vmem:[%s119 + $0xb0] sm:$0xff]
    %v143 = vld [vmem:[%s119 + $0xb8] sm:$0xff]
    %v144 = vld [vmem:[%s119 + $0xc0] sm:$0xff]
    %v145 = vld [vmem:[%s119 + $0xc8] sm:$0xff]
    %v146 = vld [vmem:[%s119 + $0xd0] sm:$0xff]
    %v147 = vld [vmem:[%s119 + $0xd8] sm:$0xff]
    %v148 = vld [vmem:[%s119 + $0xe0] sm:$0xff]
    %v149 = vld [vmem:[%s119 + $0xe8] sm:$0xff]
    %v150 = vld [vmem:[%s119 + $0xf0] sm:$0xff]
    %v151 = vld [vmem:[%s119 + $0xf8] sm:$0xff]
    %v176 = vunpack.c.l.b16 %v63
    %v177 = vunpack.c.h.b16 %v63
    %v178 = vunpack.c.l.b16 %v64
    %v179 = vunpack.c.h.b16 %v64
    %v180 = vunpack.c.l.b16 %v65
    %v181 = vunpack.c.h.b16 %v65
    %v182 = vunpack.c.l.b16 %v66
    %v183 = vunpack.c.h.b16 %v66
    %v184 = vunpack.c.l.b16 %v67
    %v185 = vunpack.c.h.b16 %v67
    %v186 = vunpack.c.l.b16 %v68
    %v187 = vunpack.c.h.b16 %v68
    %v188 = vunpack.c.l.b16 %v69
    %v189 = vunpack.c.h.b16 %v69
    %v190 = vunpack.c.l.b16 %v70
    %v191 = vunpack.c.h.b16 %v70
    %v192 = vunpack.c.l.b16 %v71
    %v193 = vunpack.c.h.b16 %v71
    %v194 = vunpack.c.l.b16 %v72
    %v195 = vunpack.c.h.b16 %v72
    %v196 = vunpack.c.l.b16 %v73
    %v197 = vunpack.c.h.b16 %v73
    %v198 = vunpack.c.l.b16 %v74
    %v199 = vunpack.c.h.b16 %v74
    %v200 = vunpack.c.l.b16 %v75
    %v201 = vunpack.c.h.b16 %v75
    %v202 = vunpack.c.l.b16 %v76
    %v203 = vunpack.c.h.b16 %v76
    %v204 = vunpack.c.l.b16 %v77
    %v205 = vunpack.c.h.b16 %v77
    %v206 = vunpack.c.l.b16 %v78
    %v207 = vunpack.c.h.b16 %v78
    %v208 = vunpack.c.l.b16 %v79
    %v209 = vunpack.c.h.b16 %v79
    %v210 = vunpack.c.l.b16 %v80
    %v211 = vunpack.c.h.b16 %v80
    %v212 = vunpack.c.l.b16 %v81
    %v213 = vunpack.c.h.b16 %v81
    %v214 = vunpack.c.l.b16 %v82
    %v215 = vunpack.c.h.b16 %v82
    %v216 = vunpack.c.l.b16 %v83
    %v217 = vunpack.c.h.b16 %v83
    %v218 = vunpack.c.l.b16 %v84
    %v219 = vunpack.c.h.b16 %v84
    %v220 = vunpack.c.l.b16 %v85
    %v221 = vunpack.c.h.b16 %v85
    %v222 = vunpack.c.l.b16 %v86
    %v223 = vunpack.c.h.b16 %v86
    %v224 = vpack.c.b16 %v178, %v176
    %v225 = vpack.c.b16 %v179, %v177
    %v226 = vpack.c.b16 %v182, %v180
    %v227 = vpack.c.b16 %v183, %v181
    %v228 = vpack.c.b16 %v186, %v184
    %v229 = vpack.c.b16 %v187, %v185
    %v230 = vpack.c.b16 %v190, %v188
    %v231 = vpack.c.b16 %v191, %v189
    %v232 = vpack.c.b16 %v194, %v192
    %v233 = vpack.c.b16 %v195, %v193
    %v234 = vpack.c.b16 %v198, %v196
    %v235 = vpack.c.b16 %v199, %v197
    %v236 = vpack.c.b16 %v202, %v200
    %v237 = vpack.c.b16 %v203, %v201
    %v238 = vpack.c.b16 %v206, %v204
    %v239 = vpack.c.b16 %v207, %v205
    %v240 = vpack.c.b16 %v210, %v208
    %v241 = vpack.c.b16 %v211, %v209
    %v242 = vpack.c.b16 %v214, %v212
    %v243 = vpack.c.b16 %v215, %v213
    %v244 = vpack.c.b16 %v218, %v216
    %v245 = vpack.c.b16 %v219, %v217
    %v246 = vpack.c.b16 %v222, %v220
    %v247 = vpack.c.b16 %v223, %v221
    %vm248 = vsmask.f32 7424
    %v250 = vshrl.u32 %v224, 16
    %v252 = vshll.u32 %v224, 16
    %v254 = vrot.slane %v252, 1
    %v255 = vor.u32 %v250, %v254
    %v257 = vshll.u32 %v226, 16
    %v259 = vrot.slane %v257, 1
    %v260 = vsel %vm248, %v255, %v259
    %v262 = vshrl.u32 %v225, 16
    %v264 = vshll.u32 %v225, 16
    %v266 = vrot.slane %v264, 1
    %v267 = vor.u32 %v262, %v266
    %v269 = vshll.u32 %v227, 16
    %v271 = vrot.slane %v269, 1
    %v272 = vsel %vm248, %v267, %v271
    %v273 = vshrl.u32 %v226, 16
    %v275 = vor.u32 %v273, %v259
    %v277 = vshll.u32 %v228, 16
    %v279 = vrot.slane %v277, 1
    %v280 = vsel %vm248, %v275, %v279
    %v281 = vshrl.u32 %v227, 16
    %v283 = vor.u32 %v281, %v271
    %v285 = vshll.u32 %v229, 16
    %v287 = vrot.slane %v285, 1
    %v288 = vsel %vm248, %v283, %v287
    %v289 = vshrl.u32 %v228, 16
    %v291 = vor.u32 %v289, %v279
    %v293 = vshll.u32 %v230, 16
    %v295 = vrot.slane %v293, 1
    %v296 = vsel %vm248, %v291, %v295
    %v297 = vshrl.u32 %v229, 16
    %v299 = vor.u32 %v297, %v287
    %v301 = vshll.u32 %v231, 16
    %v303 = vrot.slane %v301, 1
    %v304 = vsel %vm248, %v299, %v303
    %v305 = vshrl.u32 %v230, 16
    %v307 = vor.u32 %v305, %v295
    %v309 = vshll.u32 %v232, 16
    %v311 = vrot.slane %v309, 1
    %v312 = vsel %vm248, %v307, %v311
    %v313 = vshrl.u32 %v231, 16
    %v315 = vor.u32 %v313, %v303
    %v317 = vshll.u32 %v233, 16
    %v319 = vrot.slane %v317, 1
    %v320 = vsel %vm248, %v315, %v319
    %v321 = vshrl.u32 %v232, 16
    %v323 = vor.u32 %v321, %v311
    %v325 = vshll.u32 %v234, 16
    %v327 = vrot.slane %v325, 1
    %v328 = vsel %vm248, %v323, %v327
    %v329 = vshrl.u32 %v233, 16
    %v331 = vor.u32 %v329, %v319
    %v333 = vshll.u32 %v235, 16
    %v335 = vrot.slane %v333, 1
    %v336 = vsel %vm248, %v331, %v335
    %v337 = vshrl.u32 %v234, 16
    %v339 = vor.u32 %v337, %v327
    %v341 = vshll.u32 %v236, 16
    %v343 = vrot.slane %v341, 1
    %v344 = vsel %vm248, %v339, %v343
    %v345 = vshrl.u32 %v235, 16
    %v347 = vor.u32 %v345, %v335
    %v349 = vshll.u32 %v237, 16
    %v351 = vrot.slane %v349, 1
    %v352 = vsel %vm248, %v347, %v351
    %v353 = vshrl.u32 %v236, 16
    %v355 = vor.u32 %v353, %v343
    %v357 = vshll.u32 %v238, 16
    %v359 = vrot.slane %v357, 1
    %v360 = vsel %vm248, %v355, %v359
    %v361 = vshrl.u32 %v237, 16
    %v363 = vor.u32 %v361, %v351
    %v365 = vshll.u32 %v239, 16
    %v367 = vrot.slane %v365, 1
    %v368 = vsel %vm248, %v363, %v367
    %v369 = vshrl.u32 %v238, 16
    %v371 = vor.u32 %v369, %v359
    %v373 = vshll.u32 %v240, 16
    %v375 = vrot.slane %v373, 1
    %v376 = vsel %vm248, %v371, %v375
    %v377 = vshrl.u32 %v239, 16
    %v379 = vor.u32 %v377, %v367
    %v381 = vshll.u32 %v241, 16
    %v383 = vrot.slane %v381, 1
    %v384 = vsel %vm248, %v379, %v383
    %v385 = vshrl.u32 %v240, 16
    %v387 = vor.u32 %v385, %v375
    %v389 = vshll.u32 %v242, 16
    %v391 = vrot.slane %v389, 1
    %v392 = vsel %vm248, %v387, %v391
    %v393 = vshrl.u32 %v241, 16
    %v395 = vor.u32 %v393, %v383
    %v397 = vshll.u32 %v243, 16
    %v399 = vrot.slane %v397, 1
    %v400 = vsel %vm248, %v395, %v399
    %v401 = vshrl.u32 %v242, 16
    %v403 = vor.u32 %v401, %v391
    %v405 = vshll.u32 %v244, 16
    %v407 = vrot.slane %v405, 1
    %v408 = vsel %vm248, %v403, %v407
    %v409 = vshrl.u32 %v243, 16
    %v411 = vor.u32 %v409, %v399
    %v413 = vshll.u32 %v245, 16
    %v415 = vrot.slane %v413, 1
    %v416 = vsel %vm248, %v411, %v415
    %v417 = vshrl.u32 %v244, 16
    %v419 = vor.u32 %v417, %v407
    %v421 = vshll.u32 %v246, 16
    %v423 = vrot.slane %v421, 1
    %v424 = vsel %vm248, %v419, %v423
    %v425 = vshrl.u32 %v245, 16
    %v427 = vor.u32 %v425, %v415
    %v429 = vshll.u32 %v247, 16
    %v431 = vrot.slane %v429, 1
    %v432 = vsel %vm248, %v427, %v431
    %v433 = vshrl.u32 %v246, 16
    %v435 = vor.u32 %v433, %v423
    %v436 = vshrl.u32 %v247, 16
    %v438 = vor.u32 %v436, %v431
    %v495 = vunpack.c.l.b16 %v120
    %v496 = vunpack.c.h.b16 %v120
    %v497 = vunpack.c.l.b16 %v121
    %v498 = vunpack.c.h.b16 %v121
    %v499 = vunpack.c.l.b16 %v122
    %v500 = vunpack.c.h.b16 %v122
    %v501 = vunpack.c.l.b16 %v123
    %v502 = vunpack.c.h.b16 %v123
    %v503 = vunpack.c.l.b16 %v124
    %v504 = vunpack.c.h.b16 %v124
    %v505 = vunpack.c.l.b16 %v125
    %v506 = vunpack.c.h.b16 %v125
    %v507 = vunpack.c.l.b16 %v126
    %v508 = vunpack.c.h.b16 %v126
    %v509 = vunpack.c.l.b16 %v127
    %v510 = vunpack.c.h.b16 %v127
    %v511 = vunpack.c.l.b16 %v128
    %v512 = vunpack.c.h.b16 %v128
    %v513 = vunpack.c.l.b16 %v129
    %v514 = vunpack.c.h.b16 %v129
    %v515 = vunpack.c.l.b16 %v130
    %v516 = vunpack.c.h.b16 %v130
    %v517 = vunpack.c.l.b16 %v131
    %v518 = vunpack.c.h.b16 %v131
    %v519 = vunpack.c.l.b16 %v132
    %v520 = vunpack.c.h.b16 %v132
    %v521 = vunpack.c.l.b16 %v133
    %v522 = vunpack.c.h.b16 %v133
    %v523 = vunpack.c.l.b16 %v134
    %v524 = vunpack.c.h.b16 %v134
    %v525 = vunpack.c.l.b16 %v135
    %v526 = vunpack.c.h.b16 %v135
    %v527 = vunpack.c.l.b16 %v136
    %v528 = vunpack.c.h.b16 %v136
    %v529 = vunpack.c.l.b16 %v137
    %v530 = vunpack.c.h.b16 %v137
    %v531 = vunpack.c.l.b16 %v138
    %v532 = vunpack.c.h.b16 %v138
    %v533 = vunpack.c.l.b16 %v139
    %v534 = vunpack.c.h.b16 %v139
    %v535 = vunpack.c.l.b16 %v140
    %v536 = vunpack.c.h.b16 %v140
    %v537 = vunpack.c.l.b16 %v141
    %v538 = vunpack.c.h.b16 %v141
    %v539 = vunpack.c.l.b16 %v142
    %v540 = vunpack.c.h.b16 %v142
    %v541 = vunpack.c.l.b16 %v143
    %v542 = vunpack.c.h.b16 %v143
    %v543 = vunpack.c.l.b16 %v144
    %v544 = vunpack.c.h.b16 %v144
    %v545 = vunpack.c.l.b16 %v145
    %v546 = vunpack.c.h.b16 %v145
    %v547 = vunpack.c.l.b16 %v146
    %v548 = vunpack.c.h.b16 %v146
    %v549 = vunpack.c.l.b16 %v147
    %v550 = vunpack.c.h.b16 %v147
    %v551 = vunpack.c.l.b16 %v148
    %v552 = vunpack.c.h.b16 %v148
    %v553 = vunpack.c.l.b16 %v149
    %v554 = vunpack.c.h.b16 %v149
    %v555 = vunpack.c.l.b16 %v150
    %v556 = vunpack.c.h.b16 %v150
    %v557 = vunpack.c.l.b16 %v151
    %v558 = vunpack.c.h.b16 %v151
    %v559 = vpack.c.b16 %v497, %v495
    %v560 = vpack.c.b16 %v498, %v496
    %v561 = vpack.c.b16 %v501, %v499
    %v562 = vpack.c.b16 %v502, %v500
    %v563 = vpack.c.b16 %v505, %v503
    %v564 = vpack.c.b16 %v506, %v504
    %v565 = vpack.c.b16 %v509, %v507
    %v566 = vpack.c.b16 %v510, %v508
    %v567 = vpack.c.b16 %v513, %v511
    %v568 = vpack.c.b16 %v514, %v512
    %v569 = vpack.c.b16 %v517, %v515
    %v570 = vpack.c.b16 %v518, %v516
    %v571 = vpack.c.b16 %v521, %v519
    %v572 = vpack.c.b16 %v522, %v520
    %v573 = vpack.c.b16 %v525, %v523
    %v574 = vpack.c.b16 %v526, %v524
    %v575 = vpack.c.b16 %v529, %v527
    %v576 = vpack.c.b16 %v530, %v528
    %v577 = vpack.c.b16 %v533, %v531
    %v578 = vpack.c.b16 %v534, %v532
    %v579 = vpack.c.b16 %v537, %v535
    %v580 = vpack.c.b16 %v538, %v536
    %v581 = vpack.c.b16 %v541, %v539
    %v582 = vpack.c.b16 %v542, %v540
    %v583 = vpack.c.b16 %v545, %v543
    %v584 = vpack.c.b16 %v546, %v544
    %v585 = vpack.c.b16 %v549, %v547
    %v586 = vpack.c.b16 %v550, %v548
    %v587 = vpack.c.b16 %v553, %v551
    %v588 = vpack.c.b16 %v554, %v552
    %v589 = vpack.c.b16 %v557, %v555
    %v590 = vpack.c.b16 %v558, %v556
    %623 = vmatprep.subr.bf16.mxu0 %v560
    %624 = vmatpush1.bf16.msra.mxu0 %v559
    %625 = vmatprep.subr.bf16.mxu0 %v562
    %626 = vmatpush1.bf16.msra.mxu0 %v561
    %627 = vmatprep.subr.bf16.mxu0 %v564
    %628 = vmatpush1.bf16.msra.mxu0 %v563
    %629 = vmatprep.subr.bf16.mxu0 %v566
    %630 = vmatpush1.bf16.msra.mxu0 %v565
    %631 = vmatprep.subr.bf16.mxu0 %v568
    %632 = vmatpush1.bf16.msra.mxu0 %v567
    %633 = vmatprep.subr.bf16.mxu0 %v570
    %634 = vmatpush1.bf16.msra.mxu0 %v569
    %635 = vmatprep.subr.bf16.mxu0 %v572
    %636 = vmatpush1.bf16.msra.mxu0 %v571
    %637 = vmatprep.subr.bf16.mxu0 %v574
    %638 = vmatpush1.bf16.msra.mxu0 %v573
    %639 = vmatprep.subr.bf16.mxu0 %v576
    %640 = vmatpush1.bf16.msra.mxu0 %v575
    %641 = vmatprep.subr.bf16.mxu0 %v578
    %642 = vmatpush1.bf16.msra.mxu0 %v577
    %643 = vmatprep.subr.bf16.mxu0 %v580
    %644 = vmatpush1.bf16.msra.mxu0 %v579
    %645 = vmatprep.subr.bf16.mxu0 %v582
    %646 = vmatpush1.bf16.msra.mxu0 %v581
    %647 = vmatprep.subr.bf16.mxu0 %v584
    %648 = vmatpush1.bf16.msra.mxu0 %v583
    %649 = vmatprep.subr.bf16.mxu0 %v586
    %650 = vmatpush1.bf16.msra.mxu0 %v585
    %651 = vmatprep.subr.bf16.mxu0 %v588
    %652 = vmatpush1.bf16.msra.mxu0 %v587
    %653 = vmatprep.subr.bf16.mxu0 %v590
    %654 = vmatpush1.bf16.msra.mxu0 %v589
    %655 = vmatprep.mubr.bf16.mxu0 %v272
    %656 = vmatmul.mubr.bf16.gmra.mrb[0].mxu0 %v260
    %v657 = vpop.f32.mrb[0].mxu0
    %v658 = vadd.f32 0.0, %v657
    %v659 = vpop.f32.mrb[0].mxu0
    %v660 = vadd.f32 0.0, %v659
    %v661 = vpop.f32.mrb[0].mxu0
    %v662 = vadd.f32 0.0, %v661
    %v663 = vpop.f32.mrb[0].mxu0
    %v664 = vadd.f32 0.0, %v663
    %665 = vmatprep.mubr.bf16.mxu0 %v288
    %666 = vmatmul.mubr.bf16.gmra.mrb[0].mxu0 %v280
    %v667 = vpop.f32.mrb[0].mxu0
    %v668 = vadd.f32 0.0, %v667
    %v669 = vpop.f32.mrb[0].mxu0
    %v670 = vadd.f32 0.0, %v669
    %v671 = vpop.f32.mrb[0].mxu0
    %v672 = vadd.f32 0.0, %v671
    %v673 = vpop.f32.mrb[0].mxu0
    %v674 = vadd.f32 0.0, %v673
    %675 = vmatprep.mubr.bf16.mxu0 %v304
    %676 = vmatmul.mubr.bf16.gmra.mrb[0].mxu0 %v296
    %v677 = vpop.f32.mrb[0].mxu0
    %v678 = vadd.f32 0.0, %v677
    %v679 = vpop.f32.mrb[0].mxu0
    %v680 = vadd.f32 0.0, %v679
    %v681 = vpop.f32.mrb[0].mxu0
    %v682 = vadd.f32 0.0, %v681
    %v683 = vpop.f32.mrb[0].mxu0
    %v684 = vadd.f32 0.0, %v683
    %685 = vmatprep.mubr.bf16.mxu0 %v320
    %686 = vmatmul.mubr.bf16.gmra.mrb[0].mxu0 %v312
    %v687 = vpop.f32.mrb[0].mxu0
    %v688 = vadd.f32 0.0, %v687
    %v689 = vpop.f32.mrb[0].mxu0
    %v690 = vadd.f32 0.0, %v689
    %v691 = vpop.f32.mrb[0].mxu0
    %v692 = vadd.f32 0.0, %v691
    %v693 = vpop.f32.mrb[0].mxu0
    %v694 = vadd.f32 0.0, %v693
    %695 = vmatprep.mubr.bf16.mxu0 %v336
    %696 = vmatmul.mubr.bf16.gmra.mrb[0].mxu0 %v328
    %v697 = vpop.f32.mrb[0].mxu0
    %v698 = vadd.f32 0.0, %v697
    %v699 = vpop.f32.mrb[0].mxu0
    %v700 = vadd.f32 0.0, %v699
    %v701 = vpop.f32.mrb[0].mxu0
    %v702 = vadd.f32 0.0, %v701
    %v703 = vpop.f32.mrb[0].mxu0
    %v704 = vadd.f32 0.0, %v703
    %705 = vmatprep.mubr.bf16.mxu0 %v352
    %706 = vmatmul.mubr.bf16.gmra.mrb[0].mxu0 %v344
    %v707 = vpop.f32.mrb[0].mxu0
    %v708 = vadd.f32 0.0, %v707
    %v709 = vpop.f32.mrb[0].mxu0
    %v710 = vadd.f32 0.0, %v709
    %v711 = vpop.f32.mrb[0].mxu0
    %v712 = vadd.f32 0.0, %v711
    %v713 = vpop.f32.mrb[0].mxu0
    %v714 = vadd.f32 0.0, %v713
    %715 = vmatprep.mubr.bf16.mxu0 %v368
    %716 = vmatmul.mubr.bf16.gmra.mrb[0].mxu0 %v360
    %v717 = vpop.f32.mrb[0].mxu0
    %v718 = vadd.f32 0.0, %v717
    %v719 = vpop.f32.mrb[0].mxu0
    %v720 = vadd.f32 0.0, %v719
    %v721 = vpop.f32.mrb[0].mxu0
    %v722 = vadd.f32 0.0, %v721
    %v723 = vpop.f32.mrb[0].mxu0
    %v724 = vadd.f32 0.0, %v723
    %725 = vmatprep.mubr.bf16.mxu0 %v384
    %726 = vmatmul.mubr.bf16.gmra.mrb[0].mxu0 %v376
    %v727 = vpop.f32.mrb[0].mxu0
    %v728 = vadd.f32 0.0, %v727
    %v729 = vpop.f32.mrb[0].mxu0
    %v730 = vadd.f32 0.0, %v729
    %v731 = vpop.f32.mrb[0].mxu0
    %v732 = vadd.f32 0.0, %v731
    %v733 = vpop.f32.mrb[0].mxu0
    %v734 = vadd.f32 0.0, %v733
    %735 = vmatprep.mubr.bf16.mxu0 %v400
    %736 = vmatmul.mubr.bf16.gmra.mrb[0].mxu0 %v392
    %v737 = vpop.f32.mrb[0].mxu0
    %v738 = vadd.f32 0.0, %v737
    %v739 = vpop.f32.mrb[0].mxu0
    %v740 = vadd.f32 0.0, %v739
    %v741 = vpop.f32.mrb[0].mxu0
    %v742 = vadd.f32 0.0, %v741
    %v743 = vpop.f32.mrb[0].mxu0
    %v744 = vadd.f32 0.0, %v743
    %745 = vmatprep.mubr.bf16.mxu0 %v416
    %746 = vmatmul.mubr.bf16.gmra.mrb[0].mxu0 %v408
    %v747 = vpop.f32.mrb[0].mxu0
    %v748 = vadd.f32 0.0, %v747
    %v749 = vpop.f32.mrb[0].mxu0
    %v750 = vadd.f32 0.0, %v749
    %v751 = vpop.f32.mrb[0].mxu0
    %v752 = vadd.f32 0.0, %v751
    %v753 = vpop.f32.mrb[0].mxu0
    %v754 = vadd.f32 0.0, %v753
    %755 = vmatprep.mubr.bf16.mxu0 %v432
    %756 = vmatmul.mubr.bf16.gmra.mrb[0].mxu0 %v424
    %v757 = vpop.f32.mrb[0].mxu0
    %v758 = vadd.f32 0.0, %v757
    %v759 = vpop.f32.mrb[0].mxu0
    %v760 = vadd.f32 0.0, %v759
    %v761 = vpop.f32.mrb[0].mxu0
    %v762 = vadd.f32 0.0, %v761
    %v763 = vpop.f32.mrb[0].mxu0
    %v764 = vadd.f32 0.0, %v763
    %765 = vmatprep.mubr.bf16.mxu0 %v438
    %766 = vmatmul.mubr.bf16.gmra.mrb[0].mxu0 %v435
    %v767 = vpop.f32.mrb[0].mxu0
    %v768 = vadd.f32 0.0, %v767
    %v769 = vpop.f32.mrb[0].mxu0
    %v770 = vadd.f32 0.0, %v769
    %v771 = vpop.f32.mrb[0].mxu0
    %v772 = vpop.f32.mrb[0].mxu0
    %773 = vdwg.mxu0
    %v774 = vpack.c.b16 %v220, %v220
    %v775 = vpack.c.b16 %v221, %v221
    %v832 = vunpack.c.l.b16 %v87
    %v833 = vunpack.c.h.b16 %v87
    %v834 = vunpack.c.l.b16 %v88
    %v835 = vunpack.c.h.b16 %v88
    %v836 = vunpack.c.l.b16 %v89
    %v837 = vunpack.c.h.b16 %v89
    %v838 = vunpack.c.l.b16 %v90
    %v839 = vunpack.c.h.b16 %v90
    %v840 = vunpack.c.l.b16 %v91
    %v841 = vunpack.c.h.b16 %v91
    %v842 = vunpack.c.l.b16 %v92
    %v843 = vunpack.c.h.b16 %v92
    %v844 = vunpack.c.l.b16 %v93
    %v845 = vunpack.c.h.b16 %v93
    %v846 = vunpack.c.l.b16 %v94
    %v847 = vunpack.c.h.b16 %v94
    %v848 = vunpack.c.l.b16 %v95
    %v849 = vunpack.c.h.b16 %v95
    %v850 = vunpack.c.l.b16 %v96
    %v851 = vunpack.c.h.b16 %v96
    %v852 = vunpack.c.l.b16 %v97
    %v853 = vunpack.c.h.b16 %v97
    %v854 = vunpack.c.l.b16 %v98
    %v855 = vunpack.c.h.b16 %v98
    %v856 = vunpack.c.l.b16 %v99
    %v857 = vunpack.c.h.b16 %v99
    %v858 = vunpack.c.l.b16 %v100
    %v859 = vunpack.c.h.b16 %v100
    %v860 = vunpack.c.l.b16 %v101
    %v861 = vunpack.c.h.b16 %v101
    %v862 = vunpack.c.l.b16 %v102
    %v863 = vunpack.c.h.b16 %v102
    %v864 = vunpack.c.l.b16 %v103
    %v865 = vunpack.c.h.b16 %v103
    %v866 = vunpack.c.l.b16 %v104
    %v867 = vunpack.c.h.b16 %v104
    %v868 = vunpack.c.l.b16 %v105
    %v869 = vunpack.c.h.b16 %v105
    %v870 = vunpack.c.l.b16 %v106
    %v871 = vunpack.c.h.b16 %v106
    %v872 = vunpack.c.l.b16 %v107
    %v873 = vunpack.c.h.b16 %v107
    %v874 = vunpack.c.l.b16 %v108
    %v875 = vunpack.c.h.b16 %v108
    %v876 = vunpack.c.l.b16 %v109
    %v877 = vunpack.c.h.b16 %v109
    %v878 = vunpack.c.l.b16 %v110
    %v879 = vunpack.c.h.b16 %v110
    %v880 = vunpack.c.l.b16 %v111
    %v881 = vunpack.c.h.b16 %v111
    %v882 = vunpack.c.l.b16 %v112
    %v883 = vunpack.c.h.b16 %v112
    %v884 = vunpack.c.l.b16 %v113
    %v885 = vunpack.c.h.b16 %v113
    %v886 = vunpack.c.l.b16 %v114
    %v887 = vunpack.c.h.b16 %v114
    %v888 = vunpack.c.l.b16 %v115
    %v889 = vunpack.c.h.b16 %v115
    %v890 = vunpack.c.l.b16 %v116
    %v891 = vunpack.c.h.b16 %v116
    %v892 = vunpack.c.l.b16 %v117
    %v893 = vunpack.c.h.b16 %v117
    %v894 = vunpack.c.l.b16 %v118
    %v895 = vunpack.c.h.b16 %v118
    %v896 = vpack.c.b16 %v834, %v832
    %v897 = vpack.c.b16 %v835, %v833
    %v898 = vpack.c.b16 %v838, %v836
    %v899 = vpack.c.b16 %v839, %v837
    %v900 = vpack.c.b16 %v842, %v840
    %v901 = vpack.c.b16 %v843, %v841
    %v902 = vpack.c.b16 %v846, %v844
    %v903 = vpack.c.b16 %v847, %v845
    %v904 = vpack.c.b16 %v850, %v848
    %v905 = vpack.c.b16 %v851, %v849
    %v906 = vpack.c.b16 %v854, %v852
    %v907 = vpack.c.b16 %v855, %v853
    %v908 = vpack.c.b16 %v858, %v856
    %v909 = vpack.c.b16 %v859, %v857
    %v910 = vpack.c.b16 %v862, %v860
    %v911 = vpack.c.b16 %v863, %v861
    %v912 = vpack.c.b16 %v866, %v864
    %v913 = vpack.c.b16 %v867, %v865
    %v914 = vpack.c.b16 %v870, %v868
    %v915 = vpack.c.b16 %v871, %v869
    %v916 = vpack.c.b16 %v874, %v872
    %v917 = vpack.c.b16 %v875, %v873
    %v918 = vpack.c.b16 %v878, %v876
    %v919 = vpack.c.b16 %v879, %v877
    %v920 = vpack.c.b16 %v882, %v880
    %v921 = vpack.c.b16 %v883, %v881
    %v922 = vpack.c.b16 %v886, %v884
    %v923 = vpack.c.b16 %v887, %v885
    %v924 = vpack.c.b16 %v890, %v888
    %v925 = vpack.c.b16 %v891, %v889
    %v926 = vpack.c.b16 %v894, %v892
    %v927 = vpack.c.b16 %v895, %v893
    %960 = vmatprep.subr.bf16.mxu0 %v897
    %961 = vmatpush1.bf16.msra.mxu0 %v896
    %962 = vmatprep.subr.bf16.mxu0 %v899
    %963 = vmatpush1.bf16.msra.mxu0 %v898
    %964 = vmatprep.subr.bf16.mxu0 %v901
    %965 = vmatpush1.bf16.msra.mxu0 %v900
    %966 = vmatprep.subr.bf16.mxu0 %v903
    %967 = vmatpush1.bf16.msra.mxu0 %v902
    %968 = vmatprep.subr.bf16.mxu0 %v905
    %969 = vmatpush1.bf16.msra.mxu0 %v904
    %970 = vmatprep.subr.bf16.mxu0 %v907
    %971 = vmatpush1.bf16.msra.mxu0 %v906
    %972 = vmatprep.subr.bf16.mxu0 %v909
    %973 = vmatpush1.bf16.msra.mxu0 %v908
    %974 = vmatprep.subr.bf16.mxu0 %v911
    %975 = vmatpush1.bf16.msra.mxu0 %v910
    %976 = vmatprep.subr.bf16.mxu0 %v913
    %977 = vmatpush1.bf16.msra.mxu0 %v912
    %978 = vmatprep.subr.bf16.mxu0 %v915
    %979 = vmatpush1.bf16.msra.mxu0 %v914
    %980 = vmatprep.subr.bf16.mxu0 %v917
    %981 = vmatpush1.bf16.msra.mxu0 %v916
    %982 = vmatprep.subr.bf16.mxu0 %v919
    %983 = vmatpush1.bf16.msra.mxu0 %v918
    %984 = vmatprep.subr.bf16.mxu0 %v921
    %985 = vmatpush1.bf16.msra.mxu0 %v920
    %986 = vmatprep.subr.bf16.mxu0 %v923
    %987 = vmatpush1.bf16.msra.mxu0 %v922
    %988 = vmatprep.subr.bf16.mxu0 %v925
    %989 = vmatpush1.bf16.msra.mxu0 %v924
    %990 = vmatprep.subr.bf16.mxu0 %v927
    %991 = vmatpush1.bf16.msra.mxu0 %v926
    %992 = vmatprep.mubr.bf16.mxu0 %v225
    %993 = vmatmul.mubr.bf16.gmra.mrb[0].mxu0 %v224
    %v994 = vpop.f32.mrb[0].mxu0
    %v995 = vadd.f32 %v658, %v994
    %v996 = vpop.f32.mrb[0].mxu0
    %v997 = vadd.f32 %v660, %v996
    %v998 = vpop.f32.mrb[0].mxu0
    %v999 = vadd.f32 %v662, %v998
    %v1000 = vpop.f32.mrb[0].mxu0
    %v1001 = vadd.f32 %v664, %v1000
    %1002 = vmatprep.mubr.bf16.mxu0 %v227
    %1003 = vmatmul.mubr.bf16.gmra.mrb[0].mxu0 %v226
    %v1004 = vpop.f32.mrb[0].mxu0
    %v1005 = vadd.f32 %v668, %v1004
    %v1006 = vpop.f32.mrb[0].mxu0
    %v1007 = vadd.f32 %v670, %v1006
    %v1008 = vpop.f32.mrb[0].mxu0
    %v1009 = vadd.f32 %v672, %v1008
    %v1010 = vpop.f32.mrb[0].mxu0
    %v1011 = vadd.f32 %v674, %v1010
    %1012 = vmatprep.mubr.bf16.mxu0 %v229
    %1013 = vmatmul.mubr.bf16.gmra.mrb[0].mxu0 %v228
    %v1014 = vpop.f32.mrb[0].mxu0
    %v1015 = vadd.f32 %v678, %v1014
    %v1016 = vpop.f32.mrb[0].mxu0
    %v1017 = vadd.f32 %v680, %v1016
    %v1018 = vpop.f32.mrb[0].mxu0
    %v1019 = vadd.f32 %v682, %v1018
    %v1020 = vpop.f32.mrb[0].mxu0
    %v1021 = vadd.f32 %v684, %v1020
    %1022 = vmatprep.mubr.bf16.mxu0 %v231
    %1023 = vmatmul.mubr.bf16.gmra.mrb[0].mxu0 %v230
    %v1024 = vpop.f32.mrb[0].mxu0
    %v1025 = vadd.f32 %v688, %v1024
    %v1026 = vpop.f32.mrb[0].mxu0
    %v1027 = vadd.f32 %v690, %v1026
    %v1028 = vpop.f32.mrb[0].mxu0
    %v1029 = vadd.f32 %v692, %v1028
    %v1030 = vpop.f32.mrb[0].mxu0
    %v1031 = vadd.f32 %v694, %v1030
    %1032 = vmatprep.mubr.bf16.mxu0 %v233
    %1033 = vmatmul.mubr.bf16.gmra.mrb[0].mxu0 %v232
    %v1034 = vpop.f32.mrb[0].mxu0
    %v1035 = vadd.f32 %v698, %v1034
    %v1036 = vpop.f32.mrb[0].mxu0
    %v1037 = vadd.f32 %v700, %v1036
    %v1038 = vpop.f32.mrb[0].mxu0
    %v1039 = vadd.f32 %v702, %v1038
    %v1040 = vpop.f32.mrb[0].mxu0
    %v1041 = vadd.f32 %v704, %v1040
    %1042 = vmatprep.mubr.bf16.mxu0 %v235
    %1043 = vmatmul.mubr.bf16.gmra.mrb[0].mxu0 %v234
    %v1044 = vpop.f32.mrb[0].mxu0
    %v1045 = vadd.f32 %v708, %v1044
    %v1046 = vpop.f32.mrb[0].mxu0
    %v1047 = vadd.f32 %v710, %v1046
    %v1048 = vpop.f32.mrb[0].mxu0
    %v1049 = vadd.f32 %v712, %v1048
    %v1050 = vpop.f32.mrb[0].mxu0
    %v1051 = vadd.f32 %v714, %v1050
    %1052 = vmatprep.mubr.bf16.mxu0 %v237
    %1053 = vmatmul.mubr.bf16.gmra.mrb[0].mxu0 %v236
    %v1054 = vpop.f32.mrb[0].mxu0
    %v1055 = vadd.f32 %v718, %v1054
    %v1056 = vpop.f32.mrb[0].mxu0
    %v1057 = vadd.f32 %v720, %v1056
    %v1058 = vpop.f32.mrb[0].mxu0
    %v1059 = vadd.f32 %v722, %v1058
    %v1060 = vpop.f32.mrb[0].mxu0
    %v1061 = vadd.f32 %v724, %v1060
    %1062 = vmatprep.mubr.bf16.mxu0 %v239
    %1063 = vmatmul.mubr.bf16.gmra.mrb[0].mxu0 %v238
    %v1064 = vpop.f32.mrb[0].mxu0
    %v1065 = vadd.f32 %v728, %v1064
    %v1066 = vpop.f32.mrb[0].mxu0
    %v1067 = vadd.f32 %v730, %v1066
    %v1068 = vpop.f32.mrb[0].mxu0
    %v1069 = vadd.f32 %v732, %v1068
    %v1070 = vpop.f32.mrb[0].mxu0
    %v1071 = vadd.f32 %v734, %v1070
    %1072 = vmatprep.mubr.bf16.mxu0 %v241
    %1073 = vmatmul.mubr.bf16.gmra.mrb[0].mxu0 %v240
    %v1074 = vpop.f32.mrb[0].mxu0
    %v1075 = vadd.f32 %v738, %v1074
    %v1076 = vpop.f32.mrb[0].mxu0
    %v1077 = vadd.f32 %v740, %v1076
    %v1078 = vpop.f32.mrb[0].mxu0
    %v1079 = vadd.f32 %v742, %v1078
    %v1080 = vpop.f32.mrb[0].mxu0
    %v1081 = vadd.f32 %v744, %v1080
    %1082 = vmatprep.mubr.bf16.mxu0 %v243
    %1083 = vmatmul.mubr.bf16.gmra.mrb[0].mxu0 %v242
    %v1084 = vpop.f32.mrb[0].mxu0
    %v1085 = vadd.f32 %v748, %v1084
    %v1086 = vpop.f32.mrb[0].mxu0
    %v1087 = vadd.f32 %v750, %v1086
    %v1088 = vpop.f32.mrb[0].mxu0
    %v1089 = vadd.f32 %v752, %v1088
    %v1090 = vpop.f32.mrb[0].mxu0
    %v1091 = vadd.f32 %v754, %v1090
    %1092 = vmatprep.mubr.bf16.mxu0 %v245
    %1093 = vmatmul.mubr.bf16.gmra.mrb[0].mxu0 %v244
    %v1094 = vpop.f32.mrb[0].mxu0
    %v1095 = vadd.f32 %v758, %v1094
    %v1096 = vpop.f32.mrb[0].mxu0
    %v1097 = vadd.f32 %v760, %v1096
    %v1098 = vpop.f32.mrb[0].mxu0
    %v1099 = vadd.f32 %v762, %v1098
    %v1100 = vpop.f32.mrb[0].mxu0
    %v1101 = vadd.f32 %v764, %v1100
    %1102 = vmatprep.mubr.bf16.mxu0 %v775
    %1103 = vmatmul.mubr.bf16.gmra.mrb[0].mxu0 %v774
    %v1104 = vpop.f32.mrb[0].mxu0
    %v1105 = vadd.f32 %v768, %v1104
    %v1106 = vpop.f32.mrb[0].mxu0
    %v1107 = vadd.f32 %v770, %v1106
    %v1108 = vpop.f32.mrb[0].mxu0
    %v1109 = vpop.f32.mrb[0].mxu0
    %1110 = vdwg.mxu0
    %s1111 = scalar_lea.vmem [#allocation5], 512
    %v1112 = vld [vmem:[%s1111] sm:$0xff]
    %v1113 = vld [vmem:[%s1111 + $0x8] sm:$0xff]
    %v1114 = vld [vmem:[%s1111 + $0x10] sm:$0xff]
    %v1115 = vld [vmem:[%s1111 + $0x18] sm:$0xff]
    %v1116 = vld [vmem:[%s1111 + $0x20] sm:$0xff]
    %v1117 = vld [vmem:[%s1111 + $0x28] sm:$0xff]
    %v1118 = vld [vmem:[%s1111 + $0x30] sm:$0xff]
    %v1119 = vld [vmem:[%s1111 + $0x38] sm:$0xff]
    %v1120 = vld [vmem:[%s1111 + $0x40] sm:$0xff]
    %v1121 = vld [vmem:[%s1111 + $0x48] sm:$0xff]
    %v1122 = vld [vmem:[%s1111 + $0x50] sm:$0xff]
    %v1123 = vld [vmem:[%s1111 + $0x58] sm:$0xff]
    %v1124 = vld [vmem:[%s1111 + $0x60] sm:$0xff]
    %v1125 = vld [vmem:[%s1111 + $0x68] sm:$0xff]
    %v1126 = vld [vmem:[%s1111 + $0x70] sm:$0xff]
    %v1127 = vld [vmem:[%s1111 + $0x78] sm:$0xff]
    %v1128 = vld [vmem:[%s1111 + $0x80] sm:$0xff]
    %v1129 = vld [vmem:[%s1111 + $0x88] sm:$0xff]
    %v1130 = vld [vmem:[%s1111 + $0x90] sm:$0xff]
    %v1131 = vld [vmem:[%s1111 + $0x98] sm:$0xff]
    %v1132 = vld [vmem:[%s1111 + $0xa0] sm:$0xff]
    %v1133 = vld [vmem:[%s1111 + $0xa8] sm:$0xff]
    %v1134 = vld [vmem:[%s1111 + $0xb0] sm:$0xff]
    %v1135 = vld [vmem:[%s1111 + $0xb8] sm:$0xff]
    %v1136 = vld [vmem:[%s1111 + $0xc0] sm:$0xff]
    %v1137 = vld [vmem:[%s1111 + $0xc8] sm:$0xff]
    %v1138 = vld [vmem:[%s1111 + $0xd0] sm:$0xff]
    %v1139 = vld [vmem:[%s1111 + $0xd8] sm:$0xff]
    %v1140 = vld [vmem:[%s1111 + $0xe0] sm:$0xff]
    %v1141 = vld [vmem:[%s1111 + $0xe8] sm:$0xff]
    %v1142 = vld [vmem:[%s1111 + $0xf0] sm:$0xff]
    %v1143 = vld [vmem:[%s1111 + $0xf8] sm:$0xff]
    %vm1144 = vcmask 1046528
    %v1145 = vrot.slane %v224, 1
    %v1146 = vrot.slane %v226, 1
    %v1147 = vsel %vm1144, %v1145, %v1146
    %v1148 = vrot.slane %v225, 1
    %v1149 = vrot.slane %v227, 1
    %v1150 = vsel %vm1144, %v1148, %v1149
    %v1151 = vrot.slane %v228, 1
    %v1152 = vsel %vm1144, %v1146, %v1151
    %v1153 = vrot.slane %v229, 1
    %v1154 = vsel %vm1144, %v1149, %v1153
    %v1155 = vrot.slane %v230, 1
    %v1156 = vsel %vm1144, %v1151, %v1155
    %v1157 = vrot.slane %v231, 1
    %v1158 = vsel %vm1144, %v1153, %v1157
    %v1159 = vrot.slane %v232, 1
    %v1160 = vsel %vm1144, %v1155, %v1159
    %v1161 = vrot.slane %v233, 1
    %v1162 = vsel %vm1144, %v1157, %v1161
    %v1163 = vrot.slane %v234, 1
    %v1164 = vsel %vm1144, %v1159, %v1163
    %v1165 = vrot.slane %v235, 1
    %v1166 = vsel %vm1144, %v1161, %v1165
    %v1167 = vrot.slane %v236, 1
    %v1168 = vsel %vm1144, %v1163, %v1167
    %v1169 = vrot.slane %v237, 1
    %v1170 = vsel %vm1144, %v1165, %v1169
    %v1171 = vrot.slane %v238, 1
    %v1172 = vsel %vm1144, %v1167, %v1171
    %v1173 = vrot.slane %v239, 1
    %v1174 = vsel %vm1144, %v1169, %v1173
    %v1175 = vrot.slane %v240, 1
    %v1176 = vsel %vm1144, %v1171, %v1175
    %v1177 = vrot.slane %v241, 1
    %v1178 = vsel %vm1144, %v1173, %v1177
    %v1179 = vrot.slane %v242, 1
    %v1180 = vsel %vm1144, %v1175, %v1179
    %v1181 = vrot.slane %v243, 1
    %v1182 = vsel %vm1144, %v1177, %v1181
    %v1183 = vrot.slane %v244, 1
    %v1184 = vsel %vm1144, %v1179, %v1183
    %v1185 = vrot.slane %v245, 1
    %v1186 = vsel %vm1144, %v1181, %v1185
    %v1187 = vrot.slane %v246, 1
    %v1188 = vsel %vm1144, %v1183, %v1187
    %v1189 = vrot.slane %v247, 1
    %v1190 = vsel %vm1144, %v1185, %v1189
    %v1247 = vunpack.c.l.b16 %v1112
    %v1248 = vunpack.c.h.b16 %v1112
    %v1249 = vunpack.c.l.b16 %v1113
    %v1250 = vunpack.c.h.b16 %v1113
    %v1251 = vunpack.c.l.b16 %v1114
    %v1252 = vunpack.c.h.b16 %v1114
    %v1253 = vunpack.c.l.b16 %v1115
    %v1254 = vunpack.c.h.b16 %v1115
    %v1255 = vunpack.c.l.b16 %v1116
    %v1256 = vunpack.c.h.b16 %v1116
    %v1257 = vunpack.c.l.b16 %v1117
    %v1258 = vunpack.c.h.b16 %v1117
    %v1259 = vunpack.c.l.b16 %v1118
    %v1260 = vunpack.c.h.b16 %v1118
    %v1261 = vunpack.c.l.b16 %v1119
    %v1262 = vunpack.c.h.b16 %v1119
    %v1263 = vunpack.c.l.b16 %v1120
    %v1264 = vunpack.c.h.b16 %v1120
    %v1265 = vunpack.c.l.b16 %v1121
    %v1266 = vunpack.c.h.b16 %v1121
    %v1267 = vunpack.c.l.b16 %v1122
    %v1268 = vunpack.c.h.b16 %v1122
    %v1269 = vunpack.c.l.b16 %v1123
    %v1270 = vunpack.c.h.b16 %v1123
    %v1271 = vunpack.c.l.b16 %v1124
    %v1272 = vunpack.c.h.b16 %v1124
    %v1273 = vunpack.c.l.b16 %v1125
    %v1274 = vunpack.c.h.b16 %v1125
    %v1275 = vunpack.c.l.b16 %v1126
    %v1276 = vunpack.c.h.b16 %v1126
    %v1277 = vunpack.c.l.b16 %v1127
    %v1278 = vunpack.c.h.b16 %v1127
    %v1279 = vunpack.c.l.b16 %v1128
    %v1280 = vunpack.c.h.b16 %v1128
    %v1281 = vunpack.c.l.b16 %v1129
    %v1282 = vunpack.c.h.b16 %v1129
    %v1283 = vunpack.c.l.b16 %v1130
    %v1284 = vunpack.c.h.b16 %v1130
    %v1285 = vunpack.c.l.b16 %v1131
    %v1286 = vunpack.c.h.b16 %v1131
    %v1287 = vunpack.c.l.b16 %v1132
    %v1288 = vunpack.c.h.b16 %v1132
    %v1289 = vunpack.c.l.b16 %v1133
    %v1290 = vunpack.c.h.b16 %v1133
    %v1291 = vunpack.c.l.b16 %v1134
    %v1292 = vunpack.c.h.b16 %v1134
    %v1293 = vunpack.c.l.b16 %v1135
    %v1294 = vunpack.c.h.b16 %v1135
    %v1295 = vunpack.c.l.b16 %v1136
    %v1296 = vunpack.c.h.b16 %v1136
    %v1297 = vunpack.c.l.b16 %v1137
    %v1298 = vunpack.c.h.b16 %v1137
    %v1299 = vunpack.c.l.b16 %v1138
    %v1300 = vunpack.c.h.b16 %v1138
    %v1301 = vunpack.c.l.b16 %v1139
    %v1302 = vunpack.c.h.b16 %v1139
    %v1303 = vunpack.c.l.b16 %v1140
    %v1304 = vunpack.c.h.b16 %v1140
    %v1305 = vunpack.c.l.b16 %v1141
    %v1306 = vunpack.c.h.b16 %v1141
    %v1307 = vunpack.c.l.b16 %v1142
    %v1308 = vunpack.c.h.b16 %v1142
    %v1309 = vunpack.c.l.b16 %v1143
    %v1310 = vunpack.c.h.b16 %v1143
    %v1311 = vpack.c.b16 %v1249, %v1247
    %v1312 = vpack.c.b16 %v1250, %v1248
    %v1313 = vpack.c.b16 %v1253, %v1251
    %v1314 = vpack.c.b16 %v1254, %v1252
    %v1315 = vpack.c.b16 %v1257, %v1255
    %v1316 = vpack.c.b16 %v1258, %v1256
    %v1317 = vpack.c.b16 %v1261, %v1259
    %v1318 = vpack.c.b16 %v1262, %v1260
    %v1319 = vpack.c.b16 %v1265, %v1263
    %v1320 = vpack.c.b16 %v1266, %v1264
    %v1321 = vpack.c.b16 %v1269, %v1267
    %v1322 = vpack.c.b16 %v1270, %v1268
    %v1323 = vpack.c.b16 %v1273, %v1271
    %v1324 = vpack.c.b16 %v1274, %v1272
    %v1325 = vpack.c.b16 %v1277, %v1275
    %v1326 = vpack.c.b16 %v1278, %v1276
    %v1327 = vpack.c.b16 %v1281, %v1279
    %v1328 = vpack.c.b16 %v1282, %v1280
    %v1329 = vpack.c.b16 %v1285, %v1283
    %v1330 = vpack.c.b16 %v1286, %v1284
    %v1331 = vpack.c.b16 %v1289, %v1287
    %v1332 = vpack.c.b16 %v1290, %v1288
    %v1333 = vpack.c.b16 %v1293, %v1291
    %v1334 = vpack.c.b16 %v1294, %v1292
    %v1335 = vpack.c.b16 %v1297, %v1295
    %v1336 = vpack.c.b16 %v1298, %v1296
    %v1337 = vpack.c.b16 %v1301, %v1299
    %v1338 = vpack.c.b16 %v1302, %v1300
    %v1339 = vpack.c.b16 %v1305, %v1303
    %v1340 = vpack.c.b16 %v1306, %v1304
    %v1341 = vpack.c.b16 %v1309, %v1307
    %v1342 = vpack.c.b16 %v1310, %v1308
    %1375 = vmatprep.subr.bf16.mxu0 %v1312
    %1376 = vmatpush1.bf16.msra.mxu0 %v1311
    %1377 = vmatprep.subr.bf16.mxu0 %v1314
    %1378 = vmatpush1.bf16.msra.mxu0 %v1313
    %1379 = vmatprep.subr.bf16.mxu0 %v1316
    %1380 = vmatpush1.bf16.msra.mxu0 %v1315
    %1381 = vmatprep.subr.bf16.mxu0 %v1318
    %1382 = vmatpush1.bf16.msra.mxu0 %v1317
    %1383 = vmatprep.subr.bf16.mxu0 %v1320
    %1384 = vmatpush1.bf16.msra.mxu0 %v1319
    %1385 = vmatprep.subr.bf16.mxu0 %v1322
    %1386 = vmatpush1.bf16.msra.mxu0 %v1321
    %1387 = vmatprep.subr.bf16.mxu0 %v1324
    %1388 = vmatpush1.bf16.msra.mxu0 %v1323
    %1389 = vmatprep.subr.bf16.mxu0 %v1326
    %1390 = vmatpush1.bf16.msra.mxu0 %v1325
    %1391 = vmatprep.subr.bf16.mxu0 %v1328
    %1392 = vmatpush1.bf16.msra.mxu0 %v1327
    %1393 = vmatprep.subr.bf16.mxu0 %v1330
    %1394 = vmatpush1.bf16.msra.mxu0 %v1329
    %1395 = vmatprep.subr.bf16.mxu0 %v1332
    %1396 = vmatpush1.bf16.msra.mxu0 %v1331
    %1397 = vmatprep.subr.bf16.mxu0 %v1334
    %1398 = vmatpush1.bf16.msra.mxu0 %v1333
    %1399 = vmatprep.subr.bf16.mxu0 %v1336
    %1400 = vmatpush1.bf16.msra.mxu0 %v1335
    %1401 = vmatprep.subr.bf16.mxu0 %v1338
    %1402 = vmatpush1.bf16.msra.mxu0 %v1337
    %1403 = vmatprep.subr.bf16.mxu0 %v1340
    %1404 = vmatpush1.bf16.msra.mxu0 %v1339
    %1405 = vmatprep.subr.bf16.mxu0 %v1342
    %1406 = vmatpush1.bf16.msra.mxu0 %v1341
    %1407 = vmatprep.mubr.bf16.mxu0 %v1150
    %1408 = vmatmul.mubr.bf16.gmra.mrb[0].mxu0 %v1147
    %v1409 = vpop.f32.mrb[0].mxu0
    %v1410 = vadd.f32 0.0, %v1409
    %v1411 = vpop.f32.mrb[0].mxu0
    %v1412 = vadd.f32 0.0, %v1411
    %v1413 = vpop.f32.mrb[0].mxu0
    %v1414 = vadd.f32 0.0, %v1413
    %v1415 = vpop.f32.mrb[0].mxu0
    %v1416 = vadd.f32 0.0, %v1415
    %1417 = vmatprep.mubr.bf16.mxu0 %v1154
    %1418 = vmatmul.mubr.bf16.gmra.mrb[0].mxu0 %v1152
    %v1419 = vpop.f32.mrb[0].mxu0
    %v1420 = vadd.f32 0.0, %v1419
    %v1421 = vpop.f32.mrb[0].mxu0
    %v1422 = vadd.f32 0.0, %v1421
    %v1423 = vpop.f32.mrb[0].mxu0
    %v1424 = vadd.f32 0.0, %v1423
    %v1425 = vpop.f32.mrb[0].mxu0
    %v1426 = vadd.f32 0.0, %v1425
    %1427 = vmatprep.mubr.bf16.mxu0 %v1158
    %1428 = vmatmul.mubr.bf16.gmra.mrb[0].mxu0 %v1156
    %v1429 = vpop.f32.mrb[0].mxu0
    %v1430 = vadd.f32 0.0, %v1429
    %v1431 = vpop.f32.mrb[0].mxu0
    %v1432 = vadd.f32 0.0, %v1431
    %v1433 = vpop.f32.mrb[0].mxu0
    %v1434 = vadd.f32 0.0, %v1433
    %v1435 = vpop.f32.mrb[0].mxu0
    %v1436 = vadd.f32 0.0, %v1435
    %1437 = vmatprep.mubr.bf16.mxu0 %v1162
    %1438 = vmatmul.mubr.bf16.gmra.mrb[0].mxu0 %v1160
    %v1439 = vpop.f32.mrb[0].mxu0
    %v1440 = vadd.f32 0.0, %v1439
    %v1441 = vpop.f32.mrb[0].mxu0
    %v1442 = vadd.f32 0.0, %v1441
    %v1443 = vpop.f32.mrb[0].mxu0
    %v1444 = vadd.f32 0.0, %v1443
    %v1445 = vpop.f32.mrb[0].mxu0
    %v1446 = vadd.f32 0.0, %v1445
    %1447 = vmatprep.mubr.bf16.mxu0 %v1166
    %1448 = vmatmul.mubr.bf16.gmra.mrb[0].mxu0 %v1164
    %v1449 = vpop.f32.mrb[0].mxu0
    %v1450 = vadd.f32 0.0, %v1449
    %v1451 = vpop.f32.mrb[0].mxu0
    %v1452 = vadd.f32 0.0, %v1451
    %v1453 = vpop.f32.mrb[0].mxu0
    %v1454 = vadd.f32 0.0, %v1453
    %v1455 = vpop.f32.mrb[0].mxu0
    %v1456 = vadd.f32 0.0, %v1455
    %1457 = vmatprep.mubr.bf16.mxu0 %v1170
    %1458 = vmatmul.mubr.bf16.gmra.mrb[0].mxu0 %v1168
    %v1459 = vpop.f32.mrb[0].mxu0
    %v1460 = vadd.f32 0.0, %v1459
    %v1461 = vpop.f32.mrb[0].mxu0
    %v1462 = vadd.f32 0.0, %v1461
    %v1463 = vpop.f32.mrb[0].mxu0
    %v1464 = vadd.f32 0.0, %v1463
    %v1465 = vpop.f32.mrb[0].mxu0
    %v1466 = vadd.f32 0.0, %v1465
    %1467 = vmatprep.mubr.bf16.mxu0 %v1174
    %1468 = vmatmul.mubr.bf16.gmra.mrb[0].mxu0 %v1172
    %v1469 = vpop.f32.mrb[0].mxu0
    %v1470 = vadd.f32 0.0, %v1469
    %v1471 = vpop.f32.mrb[0].mxu0
    %v1472 = vadd.f32 0.0, %v1471
    %v1473 = vpop.f32.mrb[0].mxu0
    %v1474 = vadd.f32 0.0, %v1473
    %v1475 = vpop.f32.mrb[0].mxu0
    %v1476 = vadd.f32 0.0, %v1475
    %1477 = vmatprep.mubr.bf16.mxu0 %v1178
    %1478 = vmatmul.mubr.bf16.gmra.mrb[0].mxu0 %v1176
    %v1479 = vpop.f32.mrb[0].mxu0
    %v1480 = vadd.f32 0.0, %v1479
    %v1481 = vpop.f32.mrb[0].mxu0
    %v1482 = vadd.f32 0.0, %v1481
    %v1483 = vpop.f32.mrb[0].mxu0
    %v1484 = vadd.f32 0.0, %v1483
    %v1485 = vpop.f32.mrb[0].mxu0
    %v1486 = vadd.f32 0.0, %v1485
    %1487 = vmatprep.mubr.bf16.mxu0 %v1182
    %1488 = vmatmul.mubr.bf16.gmra.mrb[0].mxu0 %v1180
    %v1489 = vpop.f32.mrb[0].mxu0
    %v1490 = vadd.f32 0.0, %v1489
    %v1491 = vpop.f32.mrb[0].mxu0
    %v1492 = vadd.f32 0.0, %v1491
    %v1493 = vpop.f32.mrb[0].mxu0
    %v1494 = vadd.f32 0.0, %v1493
    %v1495 = vpop.f32.mrb[0].mxu0
    %v1496 = vadd.f32 0.0, %v1495
    %1497 = vmatprep.mubr.bf16.mxu0 %v1186
    %1498 = vmatmul.mubr.bf16.gmra.mrb[0].mxu0 %v1184
    %v1499 = vpop.f32.mrb[0].mxu0
    %v1500 = vadd.f32 0.0, %v1499
    %v1501 = vpop.f32.mrb[0].mxu0
    %v1502 = vadd.f32 0.0, %v1501
    %v1503 = vpop.f32.mrb[0].mxu0
    %v1504 = vadd.f32 0.0, %v1503
    %v1505 = vpop.f32.mrb[0].mxu0
    %v1506 = vadd.f32 0.0, %v1505
    %1507 = vmatprep.mubr.bf16.mxu0 %v1190
    %1508 = vmatmul.mubr.bf16.gmra.mrb[0].mxu0 %v1188
    %v1509 = vpop.f32.mrb[0].mxu0
    %v1510 = vadd.f32 0.0, %v1509
    %v1511 = vpop.f32.mrb[0].mxu0
    %v1512 = vadd.f32 0.0, %v1511
    %v1513 = vpop.f32.mrb[0].mxu0
    %v1514 = vadd.f32 0.0, %v1513
    %v1515 = vpop.f32.mrb[0].mxu0
    %v1516 = vadd.f32 0.0, %v1515
    %1517 = vmatprep.mubr.bf16.mxu0 %v1189
    %1518 = vmatmul.mubr.bf16.gmra.mrb[0].mxu0 %v1187
    %v1519 = vpop.f32.mrb[0].mxu0
    %v1520 = vadd.f32 0.0, %v1519
    %v1521 = vpop.f32.mrb[0].mxu0
    %v1522 = vadd.f32 0.0, %v1521
    %v1523 = vpop.f32.mrb[0].mxu0
    %v1524 = vpop.f32.mrb[0].mxu0
    %1525 = vdwg.mxu0
    %v1526 = vadd.f32 %v995, %v1410
    %v1527 = vadd.f32 %v997, %v1412
    %v1528 = vadd.f32 %v999, %v1414
    %v1529 = vadd.f32 %v1001, %v1416
    %v1530 = vadd.f32 %v1005, %v1420
    %v1531 = vadd.f32 %v1007, %v1422
    %v1532 = vadd.f32 %v1009, %v1424
    %v1533 = vadd.f32 %v1011, %v1426
    %v1534 = vadd.f32 %v1015, %v1430
    %v1535 = vadd.f32 %v1017, %v1432
    %v1536 = vadd.f32 %v1019, %v1434
    %v1537 = vadd.f32 %v1021, %v1436
    %v1538 = vadd.f32 %v1025, %v1440
    %v1539 = vadd.f32 %v1027, %v1442
    %v1540 = vadd.f32 %v1029, %v1444
    %v1541 = vadd.f32 %v1031, %v1446
    %v1542 = vadd.f32 %v1035, %v1450
    %v1543 = vadd.f32 %v1037, %v1452
    %v1544 = vadd.f32 %v1039, %v1454
    %v1545 = vadd.f32 %v1041, %v1456
    %v1546 = vadd.f32 %v1045, %v1460
    %v1547 = vadd.f32 %v1047, %v1462
    %v1548 = vadd.f32 %v1049, %v1464
    %v1549 = vadd.f32 %v1051, %v1466
    %v1550 = vadd.f32 %v1055, %v1470
    %v1551 = vadd.f32 %v1057, %v1472
    %v1552 = vadd.f32 %v1059, %v1474
    %v1553 = vadd.f32 %v1061, %v1476
    %v1554 = vadd.f32 %v1065, %v1480
    %v1555 = vadd.f32 %v1067, %v1482
    %v1556 = vadd.f32 %v1069, %v1484
    %v1557 = vadd.f32 %v1071, %v1486
    %v1558 = vadd.f32 %v1075, %v1490
    %v1559 = vadd.f32 %v1077, %v1492
    %v1560 = vadd.f32 %v1079, %v1494
    %v1561 = vadd.f32 %v1081, %v1496
    %v1562 = vadd.f32 %v1085, %v1500
    %v1563 = vadd.f32 %v1087, %v1502
    %v1564 = vadd.f32 %v1089, %v1504
    %v1565 = vadd.f32 %v1091, %v1506
    %v1566 = vadd.f32 %v1095, %v1510
    %v1567 = vadd.f32 %v1097, %v1512
    %v1568 = vadd.f32 %v1099, %v1514
    %v1569 = vadd.f32 %v1101, %v1516
    %v1570 = vadd.f32 %v1105, %v1520
    %v1571 = vadd.f32 %v1107, %v1522
    %s1572 = scalar_lea.vmem [#allocation5], 768
    %v1573 = vld [vmem:[%s1572] sm:$0xff]
    %v1574 = vld [vmem:[%s1572 + $0x8] sm:$0xff]
    %v1575 = vld [vmem:[%s1572 + $0x10] sm:$0xff]
    %v1576 = vld [vmem:[%s1572 + $0x18] sm:$0xff]
    %v1577 = vld [vmem:[%s1572 + $0x20] sm:$0xff]
    %v1578 = vld [vmem:[%s1572 + $0x28] sm:$0xff]
    %v1579 = vld [vmem:[%s1572 + $0x30] sm:$0xff]
    %v1580 = vld [vmem:[%s1572 + $0x38] sm:$0xff]
    %v1581 = vld [vmem:[%s1572 + $0x40] sm:$0xff]
    %v1582 = vld [vmem:[%s1572 + $0x48] sm:$0xff]
    %v1583 = vld [vmem:[%s1572 + $0x50] sm:$0xff]
    %v1584 = vld [vmem:[%s1572 + $0x58] sm:$0xff]
    %v1585 = vld [vmem:[%s1572 + $0x60] sm:$0xff]
    %v1586 = vld [vmem:[%s1572 + $0x68] sm:$0xff]
    %v1587 = vld [vmem:[%s1572 + $0x70] sm:$0xff]
    %v1588 = vld [vmem:[%s1572 + $0x78] sm:$0xff]
    %v1589 = vld [vmem:[%s1572 + $0x80] sm:$0xff]
    %v1590 = vld [vmem:[%s1572 + $0x88] sm:$0xff]
    %v1591 = vld [vmem:[%s1572 + $0x90] sm:$0xff]
    %v1592 = vld [vmem:[%s1572 + $0x98] sm:$0xff]
    %v1593 = vld [vmem:[%s1572 + $0xa0] sm:$0xff]
    %v1594 = vld [vmem:[%s1572 + $0xa8] sm:$0xff]
    %v1595 = vld [vmem:[%s1572 + $0xb0] sm:$0xff]
    %v1596 = vld [vmem:[%s1572 + $0xb8] sm:$0xff]
    %v1597 = vld [vmem:[%s1572 + $0xc0] sm:$0xff]
    %v1598 = vld [vmem:[%s1572 + $0xc8] sm:$0xff]
    %v1599 = vld [vmem:[%s1572 + $0xd0] sm:$0xff]
    %v1600 = vld [vmem:[%s1572 + $0xd8] sm:$0xff]
    %v1601 = vld [vmem:[%s1572 + $0xe0] sm:$0xff]
    %v1602 = vld [vmem:[%s1572 + $0xe8] sm:$0xff]
    %v1603 = vld [vmem:[%s1572 + $0xf0] sm:$0xff]
    %v1604 = vld [vmem:[%s1572 + $0xf8] sm:$0xff]
    %vm1605 = vsmask.f32 6400
    %v1606 = vrot.slane %v250, 1
    %v1607 = vrot.slane %v252, 2
    %v1608 = vor.u32 %v1606, %v1607
    %v1609 = vrot.slane %v273, 1
    %v1610 = vrot.slane %v257, 2
    %v1611 = vor.u32 %v1609, %v1610
    %v1612 = vsel %vm1605, %v1608, %v1611
    %v1613 = vrot.slane %v262, 1
    %v1614 = vrot.slane %v264, 2
    %v1615 = vor.u32 %v1613, %v1614
    %v1616 = vrot.slane %v281, 1
    %v1617 = vrot.slane %v269, 2
    %v1618 = vor.u32 %v1616, %v1617
    %v1619 = vsel %vm1605, %v1615, %v1618
    %v1620 = vrot.slane %v289, 1
    %v1621 = vrot.slane %v277, 2
    %v1622 = vor.u32 %v1620, %v1621
    %v1623 = vsel %vm1605, %v1611, %v1622
    %v1624 = vrot.slane %v297, 1
    %v1625 = vrot.slane %v285, 2
    %v1626 = vor.u32 %v1624, %v1625
    %v1627 = vsel %vm1605, %v1618, %v1626
    %v1628 = vrot.slane %v305, 1
    %v1629 = vrot.slane %v293, 2
    %v1630 = vor.u32 %v1628, %v1629
    %v1631 = vsel %vm1605, %v1622, %v1630
    %v1632 = vrot.slane %v313, 1
    %v1633 = vrot.slane %v301, 2
    %v1634 = vor.u32 %v1632, %v1633
    %v1635 = vsel %vm1605, %v1626, %v1634
    %v1636 = vrot.slane %v321, 1
    %v1637 = vrot.slane %v309, 2
    %v1638 = vor.u32 %v1636, %v1637
    %v1639 = vsel %vm1605, %v1630, %v1638
    %v1640 = vrot.slane %v329, 1
    %v1641 = vrot.slane %v317, 2
    %v1642 = vor.u32 %v1640, %v1641
    %v1643 = vsel %vm1605, %v1634, %v1642
    %v1644 = vrot.slane %v337, 1
    %v1645 = vrot.slane %v325, 2
    %v1646 = vor.u32 %v1644, %v1645
    %v1647 = vsel %vm1605, %v1638, %v1646
    %v1648 = vrot.slane %v345, 1
    %v1649 = vrot.slane %v333, 2
    %v1650 = vor.u32 %v1648, %v1649
    %v1651 = vsel %vm1605, %v1642, %v1650
    %v1652 = vrot.slane %v353, 1
    %v1653 = vrot.slane %v341, 2
    %v1654 = vor.u32 %v1652, %v1653
    %v1655 = vsel %vm1605, %v1646, %v1654
    %v1656 = vrot.slane %v361, 1
    %v1657 = vrot.slane %v349, 2
    %v1658 = vor.u32 %v1656, %v1657
    %v1659 = vsel %vm1605, %v1650, %v1658
    %v1660 = vrot.slane %v369, 1
    %v1661 = vrot.slane %v357, 2
    %v1662 = vor.u32 %v1660, %v1661
    %v1663 = vsel %vm1605, %v1654, %v1662
    %v1664 = vrot.slane %v377, 1
    %v1665 = vrot.slane %v365, 2
    %v1666 = vor.u32 %v1664, %v1665
    %v1667 = vsel %vm1605, %v1658, %v1666
    %v1668 = vrot.slane %v385, 1
    %v1669 = vrot.slane %v373, 2
    %v1670 = vor.u32 %v1668, %v1669
    %v1671 = vsel %vm1605, %v1662, %v1670
    %v1672 = vrot.slane %v393, 1
    %v1673 = vrot.slane %v381, 2
    %v1674 = vor.u32 %v1672, %v1673
    %v1675 = vsel %vm1605, %v1666, %v1674
    %v1676 = vrot.slane %v401, 1
    %v1677 = vrot.slane %v389, 2
    %v1678 = vor.u32 %v1676, %v1677
    %v1679 = vsel %vm1605, %v1670, %v1678
    %v1680 = vrot.slane %v409, 1
    %v1681 = vrot.slane %v397, 2
    %v1682 = vor.u32 %v1680, %v1681
    %v1683 = vsel %vm1605, %v1674, %v1682
    %v1684 = vrot.slane %v417, 1
    %v1685 = vrot.slane %v405, 2
    %v1686 = vor.u32 %v1684, %v1685
    %v1687 = vsel %vm1605, %v1678, %v1686
    %v1688 = vrot.slane %v425, 1
    %v1689 = vrot.slane %v413, 2
    %v1690 = vor.u32 %v1688, %v1689
    %v1691 = vsel %vm1605, %v1682, %v1690
    %v1692 = vrot.slane %v433, 1
    %v1693 = vrot.slane %v421, 2
    %v1694 = vor.u32 %v1692, %v1693
    %v1695 = vsel %vm1605, %v1686, %v1694
    %v1696 = vrot.slane %v436, 1
    %v1697 = vrot.slane %v429, 2
    %v1698 = vor.u32 %v1696, %v1697
    %v1699 = vsel %vm1605, %v1690, %v1698
    %v1756 = vunpack.c.l.b16 %v1573
    %v1757 = vunpack.c.h.b16 %v1573
    %v1758 = vunpack.c.l.b16 %v1574
    %v1759 = vunpack.c.h.b16 %v1574
    %v1760 = vunpack.c.l.b16 %v1575
    %v1761 = vunpack.c.h.b16 %v1575
    %v1762 = vunpack.c.l.b16 %v1576
    %v1763 = vunpack.c.h.b16 %v1576
    %v1764 = vunpack.c.l.b16 %v1577
    %v1765 = vunpack.c.h.b16 %v1577
    %v1766 = vunpack.c.l.b16 %v1578
    %v1767 = vunpack.c.h.b16 %v1578
    %v1768 = vunpack.c.l.b16 %v1579
    %v1769 = vunpack.c.h.b16 %v1579
    %v1770 = vunpack.c.l.b16 %v1580
    %v1771 = vunpack.c.h.b16 %v1580
    %v1772 = vunpack.c.l.b16 %v1581
    %v1773 = vunpack.c.h.b16 %v1581
    %v1774 = vunpack.c.l.b16 %v1582
    %v1775 = vunpack.c.h.b16 %v1582
    %v1776 = vunpack.c.l.b16 %v1583
    %v1777 = vunpack.c.h.b16 %v1583
    %v1778 = vunpack.c.l.b16 %v1584
    %v1779 = vunpack.c.h.b16 %v1584
    %v1780 = vunpack.c.l.b16 %v1585
    %v1781 = vunpack.c.h.b16 %v1585
    %v1782 = vunpack.c.l.b16 %v1586
    %v1783 = vunpack.c.h.b16 %v1586
    %v1784 = vunpack.c.l.b16 %v1587
    %v1785 = vunpack.c.h.b16 %v1587
    %v1786 = vunpack.c.l.b16 %v1588
    %v1787 = vunpack.c.h.b16 %v1588
    %v1788 = vunpack.c.l.b16 %v1589
    %v1789 = vunpack.c.h.b16 %v1589
    %v1790 = vunpack.c.l.b16 %v1590
    %v1791 = vunpack.c.h.b16 %v1590
    %v1792 = vunpack.c.l.b16 %v1591
    %v1793 = vunpack.c.h.b16 %v1591
    %v1794 = vunpack.c.l.b16 %v1592
    %v1795 = vunpack.c.h.b16 %v1592
    %v1796 = vunpack.c.l.b16 %v1593
    %v1797 = vunpack.c.h.b16 %v1593
    %v1798 = vunpack.c.l.b16 %v1594
    %v1799 = vunpack.c.h.b16 %v1594
    %v1800 = vunpack.c.l.b16 %v1595
    %v1801 = vunpack.c.h.b16 %v1595
    %v1802 = vunpack.c.l.b16 %v1596
    %v1803 = vunpack.c.h.b16 %v1596
    %v1804 = vunpack.c.l.b16 %v1597
    %v1805 = vunpack.c.h.b16 %v1597
    %v1806 = vunpack.c.l.b16 %v1598
    %v1807 = vunpack.c.h.b16 %v1598
    %v1808 = vunpack.c.l.b16 %v1599
    %v1809 = vunpack.c.h.b16 %v1599
    %v1810 = vunpack.c.l.b16 %v1600
    %v1811 = vunpack.c.h.b16 %v1600
    %v1812 = vunpack.c.l.b16 %v1601
    %v1813 = vunpack.c.h.b16 %v1601
    %v1814 = vunpack.c.l.b16 %v1602
    %v1815 = vunpack.c.h.b16 %v1602
    %v1816 = vunpack.c.l.b16 %v1603
    %v1817 = vunpack.c.h.b16 %v1603
    %v1818 = vunpack.c.l.b16 %v1604
    %v1819 = vunpack.c.h.b16 %v1604
    %v1820 = vpack.c.b16 %v1758, %v1756
    %v1821 = vpack.c.b16 %v1759, %v1757
    %v1822 = vpack.c.b16 %v1762, %v1760
    %v1823 = vpack.c.b16 %v1763, %v1761
    %v1824 = vpack.c.b16 %v1766, %v1764
    %v1825 = vpack.c.b16 %v1767, %v1765
    %v1826 = vpack.c.b16 %v1770, %v1768
    %v1827 = vpack.c.b16 %v1771, %v1769
    %v1828 = vpack.c.b16 %v1774, %v1772
    %v1829 = vpack.c.b16 %v1775, %v1773
    %v1830 = vpack.c.b16 %v1778, %v1776
    %v1831 = vpack.c.b16 %v1779, %v1777
    %v1832 = vpack.c.b16 %v1782, %v1780
    %v1833 = vpack.c.b16 %v1783, %v1781
    %v1834 = vpack.c.b16 %v1786, %v1784
    %v1835 = vpack.c.b16 %v1787, %v1785
    %v1836 = vpack.c.b16 %v1790, %v1788
    %v1837 = vpack.c.b16 %v1791, %v1789
    %v1838 = vpack.c.b16 %v1794, %v1792
    %v1839 = vpack.c.b16 %v1795, %v1793
    %v1840 = vpack.c.b16 %v1798, %v1796
    %v1841 = vpack.c.b16 %v1799, %v1797
    %v1842 = vpack.c.b16 %v1802, %v1800
    %v1843 = vpack.c.b16 %v1803, %v1801
    %v1844 = vpack.c.b16 %v1806, %v1804
    %v1845 = vpack.c.b16 %v1807, %v1805
    %v1846 = vpack.c.b16 %v1810, %v1808
    %v1847 = vpack.c.b16 %v1811, %v1809
    %v1848 = vpack.c.b16 %v1814, %v1812
    %v1849 = vpack.c.b16 %v1815, %v1813
    %v1850 = vpack.c.b16 %v1818, %v1816
    %v1851 = vpack.c.b16 %v1819, %v1817
    %1884 = vmatprep.subr.bf16.mxu0 %v1821
    %1885 = vmatpush1.bf16.msra.mxu0 %v1820
    %1886 = vmatprep.subr.bf16.mxu0 %v1823
    %1887 = vmatpush1.bf16.msra.mxu0 %v1822
    %1888 = vmatprep.subr.bf16.mxu0 %v1825
    %1889 = vmatpush1.bf16.msra.mxu0 %v1824
    %1890 = vmatprep.subr.bf16.mxu0 %v1827
    %1891 = vmatpush1.bf16.msra.mxu0 %v1826
    %1892 = vmatprep.subr.bf16.mxu0 %v1829
    %1893 = vmatpush1.bf16.msra.mxu0 %v1828
    %1894 = vmatprep.subr.bf16.mxu0 %v1831
    %1895 = vmatpush1.bf16.msra.mxu0 %v1830
    %1896 = vmatprep.subr.bf16.mxu0 %v1833
    %1897 = vmatpush1.bf16.msra.mxu0 %v1832
    %1898 = vmatprep.subr.bf16.mxu0 %v1835
    %1899 = vmatpush1.bf16.msra.mxu0 %v1834
    %1900 = vmatprep.subr.bf16.mxu0 %v1837
    %1901 = vmatpush1.bf16.msra.mxu0 %v1836
    %1902 = vmatprep.subr.bf16.mxu0 %v1839
    %1903 = vmatpush1.bf16.msra.mxu0 %v1838
    %1904 = vmatprep.subr.bf16.mxu0 %v1841
    %1905 = vmatpush1.bf16.msra.mxu0 %v1840
    %1906 = vmatprep.subr.bf16.mxu0 %v1843
    %1907 = vmatpush1.bf16.msra.mxu0 %v1842
    %1908 = vmatprep.subr.bf16.mxu0 %v1845
    %1909 = vmatpush1.bf16.msra.mxu0 %v1844
    %1910 = vmatprep.subr.bf16.mxu0 %v1847
    %1911 = vmatpush1.bf16.msra.mxu0 %v1846
    %1912 = vmatprep.subr.bf16.mxu0 %v1849
    %1913 = vmatpush1.bf16.msra.mxu0 %v1848
    %1914 = vmatprep.subr.bf16.mxu0 %v1851
    %1915 = vmatpush1.bf16.msra.mxu0 %v1850
    %1916 = vmatprep.mubr.bf16.mxu0 %v1619
    %1917 = vmatmul.mubr.bf16.gmra.mrb[0].mxu0 %v1612
    %v1918 = vpop.f32.mrb[0].mxu0
    %v1919 = vadd.f32 0.0, %v1918
    %v1920 = vpop.f32.mrb[0].mxu0
    %v1921 = vadd.f32 0.0, %v1920
    %v1922 = vpop.f32.mrb[0].mxu0
    %v1923 = vadd.f32 0.0, %v1922
    %v1924 = vpop.f32.mrb[0].mxu0
    %v1925 = vadd.f32 0.0, %v1924
    %1926 = vmatprep.mubr.bf16.mxu0 %v1627
    %1927 = vmatmul.mubr.bf16.gmra.mrb[0].mxu0 %v1623
    %v1928 = vpop.f32.mrb[0].mxu0
    %v1929 = vadd.f32 0.0, %v1928
    %v1930 = vpop.f32.mrb[0].mxu0
    %v1931 = vadd.f32 0.0, %v1930
    %v1932 = vpop.f32.mrb[0].mxu0
    %v1933 = vadd.f32 0.0, %v1932
    %v1934 = vpop.f32.mrb[0].mxu0
    %v1935 = vadd.f32 0.0, %v1934
    %1936 = vmatprep.mubr.bf16.mxu0 %v1635
    %1937 = vmatmul.mubr.bf16.gmra.mrb[0].mxu0 %v1631
    %v1938 = vpop.f32.mrb[0].mxu0
    %v1939 = vadd.f32 0.0, %v1938
    %v1940 = vpop.f32.mrb[0].mxu0
    %v1941 = vadd.f32 0.0, %v1940
    %v1942 = vpop.f32.mrb[0].mxu0
    %v1943 = vadd.f32 0.0, %v1942
    %v1944 = vpop.f32.mrb[0].mxu0
    %v1945 = vadd.f32 0.0, %v1944
    %1946 = vmatprep.mubr.bf16.mxu0 %v1643
    %1947 = vmatmul.mubr.bf16.gmra.mrb[0].mxu0 %v1639
    %v1948 = vpop.f32.mrb[0].mxu0
    %v1949 = vadd.f32 0.0, %v1948
    %v1950 = vpop.f32.mrb[0].mxu0
    %v1951 = vadd.f32 0.0, %v1950
    %v1952 = vpop.f32.mrb[0].mxu0
    %v1953 = vadd.f32 0.0, %v1952
    %v1954 = vpop.f32.mrb[0].mxu0
    %v1955 = vadd.f32 0.0, %v1954
    %1956 = vmatprep.mubr.bf16.mxu0 %v1651
    %1957 = vmatmul.mubr.bf16.gmra.mrb[0].mxu0 %v1647
    %v1958 = vpop.f32.mrb[0].mxu0
    %v1959 = vadd.f32 0.0, %v1958
    %v1960 = vpop.f32.mrb[0].mxu0
    %v1961 = vadd.f32 0.0, %v1960
    %v1962 = vpop.f32.mrb[0].mxu0
    %v1963 = vadd.f32 0.0, %v1962
    %v1964 = vpop.f32.mrb[0].mxu0
    %v1965 = vadd.f32 0.0, %v1964
    %1966 = vmatprep.mubr.bf16.mxu0 %v1659
    %1967 = vmatmul.mubr.bf16.gmra.mrb[0].mxu0 %v1655
    %v1968 = vpop.f32.mrb[0].mxu0
    %v1969 = vadd.f32 0.0, %v1968
    %v1970 = vpop.f32.mrb[0].mxu0
    %v1971 = vadd.f32 0.0, %v1970
    %v1972 = vpop.f32.mrb[0].mxu0
    %v1973 = vadd.f32 0.0, %v1972
    %v1974 = vpop.f32.mrb[0].mxu0
    %v1975 = vadd.f32 0.0, %v1974
    %1976 = vmatprep.mubr.bf16.mxu0 %v1667
    %1977 = vmatmul.mubr.bf16.gmra.mrb[0].mxu0 %v1663
    %v1978 = vpop.f32.mrb[0].mxu0
    %v1979 = vadd.f32 0.0, %v1978
    %v1980 = vpop.f32.mrb[0].mxu0
    %v1981 = vadd.f32 0.0, %v1980
    %v1982 = vpop.f32.mrb[0].mxu0
    %v1983 = vadd.f32 0.0, %v1982
    %v1984 = vpop.f32.mrb[0].mxu0
    %v1985 = vadd.f32 0.0, %v1984
    %1986 = vmatprep.mubr.bf16.mxu0 %v1675
    %1987 = vmatmul.mubr.bf16.gmra.mrb[0].mxu0 %v1671
    %v1988 = vpop.f32.mrb[0].mxu0
    %v1989 = vadd.f32 0.0, %v1988
    %v1990 = vpop.f32.mrb[0].mxu0
    %v1991 = vadd.f32 0.0, %v1990
    %v1992 = vpop.f32.mrb[0].mxu0
    %v1993 = vadd.f32 0.0, %v1992
    %v1994 = vpop.f32.mrb[0].mxu0
    %v1995 = vadd.f32 0.0, %v1994
    %1996 = vmatprep.mubr.bf16.mxu0 %v1683
    %1997 = vmatmul.mubr.bf16.gmra.mrb[0].mxu0 %v1679
    %v1998 = vpop.f32.mrb[0].mxu0
    %v1999 = vadd.f32 0.0, %v1998
    %v2000 = vpop.f32.mrb[0].mxu0
    %v2001 = vadd.f32 0.0, %v2000
    %v2002 = vpop.f32.mrb[0].mxu0
    %v2003 = vadd.f32 0.0, %v2002
    %v2004 = vpop.f32.mrb[0].mxu0
    %v2005 = vadd.f32 0.0, %v2004
    %2006 = vmatprep.mubr.bf16.mxu0 %v1691
    %2007 = vmatmul.mubr.bf16.gmra.mrb[0].mxu0 %v1687
    %v2008 = vpop.f32.mrb[0].mxu0
    %v2009 = vadd.f32 0.0, %v2008
    %v2010 = vpop.f32.mrb[0].mxu0
    %v2011 = vadd.f32 0.0, %v2010
    %v2012 = vpop.f32.mrb[0].mxu0
    %v2013 = vadd.f32 0.0, %v2012
    %v2014 = vpop.f32.mrb[0].mxu0
    %v2015 = vadd.f32 0.0, %v2014
    %2016 = vmatprep.mubr.bf16.mxu0 %v1699
    %2017 = vmatmul.mubr.bf16.gmra.mrb[0].mxu0 %v1695
    %v2018 = vpop.f32.mrb[0].mxu0
    %v2019 = vadd.f32 0.0, %v2018
    %v2020 = vpop.f32.mrb[0].mxu0
    %v2021 = vadd.f32 0.0, %v2020
    %v2022 = vpop.f32.mrb[0].mxu0
    %v2023 = vadd.f32 0.0, %v2022
    %v2024 = vpop.f32.mrb[0].mxu0
    %v2025 = vadd.f32 0.0, %v2024
    %2026 = vmatprep.mubr.bf16.mxu0 %v1698
    %2027 = vmatmul.mubr.bf16.gmra.mrb[0].mxu0 %v1694
    %v2028 = vpop.f32.mrb[0].mxu0
    %v2029 = vadd.f32 0.0, %v2028
    %v2030 = vpop.f32.mrb[0].mxu0
    %v2031 = vadd.f32 0.0, %v2030
    %v2032 = vpop.f32.mrb[0].mxu0
    %v2033 = vpop.f32.mrb[0].mxu0
    %2034 = vdwg.mxu0
    %v2035 = vadd.f32 %v1526, %v1919
    %v2036 = vadd.f32 %v1527, %v1921
    %v2037 = vadd.f32 %v1528, %v1923
    %v2038 = vadd.f32 %v1529, %v1925
    %v2039 = vadd.f32 %v1530, %v1929
    %v2040 = vadd.f32 %v1531, %v1931
    %v2041 = vadd.f32 %v1532, %v1933
    %v2042 = vadd.f32 %v1533, %v1935
    %v2043 = vadd.f32 %v1534, %v1939
    %v2044 = vadd.f32 %v1535, %v1941
    %v2045 = vadd.f32 %v1536, %v1943
    %v2046 = vadd.f32 %v1537, %v1945
    %v2047 = vadd.f32 %v1538, %v1949
    %v2048 = vadd.f32 %v1539, %v1951
    %v2049 = vadd.f32 %v1540, %v1953
    %v2050 = vadd.f32 %v1541, %v1955
    %v2051 = vadd.f32 %v1542, %v1959
    %v2052 = vadd.f32 %v1543, %v1961
    %v2053 = vadd.f32 %v1544, %v1963
    %v2054 = vadd.f32 %v1545, %v1965
    %v2055 = vadd.f32 %v1546, %v1969
    %v2056 = vadd.f32 %v1547, %v1971
    %v2057 = vadd.f32 %v1548, %v1973
    %v2058 = vadd.f32 %v1549, %v1975
    %v2059 = vadd.f32 %v1550, %v1979
    %v2060 = vadd.f32 %v1551, %v1981
    %v2061 = vadd.f32 %v1552, %v1983
    %v2062 = vadd.f32 %v1553, %v1985
    %v2063 = vadd.f32 %v1554, %v1989
    %v2064 = vadd.f32 %v1555, %v1991
    %v2065 = vadd.f32 %v1556, %v1993
    %v2066 = vadd.f32 %v1557, %v1995
    %v2067 = vadd.f32 %v1558, %v1999
    %v2068 = vadd.f32 %v1559, %v2001
    %v2069 = vadd.f32 %v1560, %v2003
    %v2070 = vadd.f32 %v1561, %v2005
    %v2071 = vadd.f32 %v1562, %v2009
    %v2072 = vadd.f32 %v1563, %v2011
    %v2073 = vadd.f32 %v1564, %v2013
    %v2074 = vadd.f32 %v1565, %v2015
    %v2075 = vadd.f32 %v1566, %v2019
    %v2076 = vadd.f32 %v1567, %v2021
    %v2077 = vadd.f32 %v1568, %v2023
    %v2078 = vadd.f32 %v1569, %v2025
    %v2079 = vadd.f32 %v1570, %v2029
    %v2080 = vadd.f32 %v1571, %v2031
    %s2081 = scalar_lea.vmem [#allocation5], 1024
    %v2082 = vld [vmem:[%s2081] sm:$0xff]
    %v2083 = vld [vmem:[%s2081 + $0x8] sm:$0xff]
    %v2084 = vld [vmem:[%s2081 + $0x10] sm:$0xff]
    %v2085 = vld [vmem:[%s2081 + $0x18] sm:$0xff]
    %v2086 = vld [vmem:[%s2081 + $0x20] sm:$0xff]
    %v2087 = vld [vmem:[%s2081 + $0x28] sm:$0xff]
    %v2088 = vld [vmem:[%s2081 + $0x30] sm:$0xff]
    %v2089 = vld [vmem:[%s2081 + $0x38] sm:$0xff]
    %v2090 = vld [vmem:[%s2081 + $0x40] sm:$0xff]
    %v2091 = vld [vmem:[%s2081 + $0x48] sm:$0xff]
    %v2092 = vld [vmem:[%s2081 + $0x50] sm:$0xff]
    %v2093 = vld [vmem:[%s2081 + $0x58] sm:$0xff]
    %v2094 = vld [vmem:[%s2081 + $0x60] sm:$0xff]
    %v2095 = vld [vmem:[%s2081 + $0x68] sm:$0xff]
    %v2096 = vld [vmem:[%s2081 + $0x70] sm:$0xff]
    %v2097 = vld [vmem:[%s2081 + $0x78] sm:$0xff]
    %v2098 = vld [vmem:[%s2081 + $0x80] sm:$0xff]
    %v2099 = vld [vmem:[%s2081 + $0x88] sm:$0xff]
    %v2100 = vld [vmem:[%s2081 + $0x90] sm:$0xff]
    %v2101 = vld [vmem:[%s2081 + $0x98] sm:$0xff]
    %v2102 = vld [vmem:[%s2081 + $0xa0] sm:$0xff]
    %v2103 = vld [vmem:[%s2081 + $0xa8] sm:$0xff]
    %v2104 = vld [vmem:[%s2081 + $0xb0] sm:$0xff]
    %v2105 = vld [vmem:[%s2081 + $0xb8] sm:$0xff]
    %v2106 = vld [vmem:[%s2081 + $0xc0] sm:$0xff]
    %v2107 = vld [vmem:[%s2081 + $0xc8] sm:$0xff]
    %v2108 = vld [vmem:[%s2081 + $0xd0] sm:$0xff]
    %v2109 = vld [vmem:[%s2081 + $0xd8] sm:$0xff]
    %v2110 = vld [vmem:[%s2081 + $0xe0] sm:$0xff]
    %v2111 = vld [vmem:[%s2081 + $0xe8] sm:$0xff]
    %v2112 = vld [vmem:[%s2081 + $0xf0] sm:$0xff]
    %v2113 = vld [vmem:[%s2081 + $0xf8] sm:$0xff]
    %vm2114 = vcmask 1045504
    %v2115 = vrot.slane %v224, 2
    %v2116 = vrot.slane %v226, 2
    %v2117 = vsel %vm2114, %v2115, %v2116
    %v2118 = vrot.slane %v225, 2
    %v2119 = vrot.slane %v227, 2
    %v2120 = vsel %vm2114, %v2118, %v2119
    %v2121 = vrot.slane %v228, 2
    %v2122 = vsel %vm2114, %v2116, %v2121
    %v2123 = vrot.slane %v229, 2
    %v2124 = vsel %vm2114, %v2119, %v2123
    %v2125 = vrot.slane %v230, 2
    %v2126 = vsel %vm2114, %v2121, %v2125
    %v2127 = vrot.slane %v231, 2
    %v2128 = vsel %vm2114, %v2123, %v2127
    %v2129 = vrot.slane %v232, 2
    %v2130 = vsel %vm2114, %v2125, %v2129
    %v2131 = vrot.slane %v233, 2
    %v2132 = vsel %vm2114, %v2127, %v2131
    %v2133 = vrot.slane %v234, 2
    %v2134 = vsel %vm2114, %v2129, %v2133
    %v2135 = vrot.slane %v235, 2
    %v2136 = vsel %vm2114, %v2131, %v2135
    %v2137 = vrot.slane %v236, 2
    %v2138 = vsel %vm2114, %v2133, %v2137
    %v2139 = vrot.slane %v237, 2
    %v2140 = vsel %vm2114, %v2135, %v2139
    %v2141 = vrot.slane %v238, 2
    %v2142 = vsel %vm2114, %v2137, %v2141
    %v2143 = vrot.slane %v239, 2
    %v2144 = vsel %vm2114, %v2139, %v2143
    %v2145 = vrot.slane %v240, 2
    %v2146 = vsel %vm2114, %v2141, %v2145
    %v2147 = vrot.slane %v241, 2
    %v2148 = vsel %vm2114, %v2143, %v2147
    %v2149 = vrot.slane %v242, 2
    %v2150 = vsel %vm2114, %v2145, %v2149
    %v2151 = vrot.slane %v243, 2
    %v2152 = vsel %vm2114, %v2147, %v2151
    %v2153 = vrot.slane %v244, 2
    %v2154 = vsel %vm2114, %v2149, %v2153
    %v2155 = vrot.slane %v245, 2
    %v2156 = vsel %vm2114, %v2151, %v2155
    %v2157 = vrot.slane %v246, 2
    %v2158 = vsel %vm2114, %v2153, %v2157
    %v2159 = vrot.slane %v247, 2
    %v2160 = vsel %vm2114, %v2155, %v2159
    %v2217 = vunpack.c.l.b16 %v2082
    %v2218 = vunpack.c.h.b16 %v2082
    %v2219 = vunpack.c.l.b16 %v2083
    %v2220 = vunpack.c.h.b16 %v2083
    %v2221 = vunpack.c.l.b16 %v2084
    %v2222 = vunpack.c.h.b16 %v2084
    %v2223 = vunpack.c.l.b16 %v2085
    %v2224 = vunpack.c.h.b16 %v2085
    %v2225 = vunpack.c.l.b16 %v2086
    %v2226 = vunpack.c.h.b16 %v2086
    %v2227 = vunpack.c.l.b16 %v2087
    %v2228 = vunpack.c.h.b16 %v2087
    %v2229 = vunpack.c.l.b16 %v2088
    %v2230 = vunpack.c.h.b16 %v2088
    %v2231 = vunpack.c.l.b16 %v2089
    %v2232 = vunpack.c.h.b16 %v2089
    %v2233 = vunpack.c.l.b16 %v2090
    %v2234 = vunpack.c.h.b16 %v2090
    %v2235 = vunpack.c.l.b16 %v2091
    %v2236 = vunpack.c.h.b16 %v2091
    %v2237 = vunpack.c.l.b16 %v2092
    %v2238 = vunpack.c.h.b16 %v2092
    %v2239 = vunpack.c.l.b16 %v2093
    %v2240 = vunpack.c.h.b16 %v2093
    %v2241 = vunpack.c.l.b16 %v2094
    %v2242 = vunpack.c.h.b16 %v2094
    %v2243 = vunpack.c.l.b16 %v2095
    %v2244 = vunpack.c.h.b16 %v2095
    %v2245 = vunpack.c.l.b16 %v2096
    %v2246 = vunpack.c.h.b16 %v2096
    %v2247 = vunpack.c.l.b16 %v2097
    %v2248 = vunpack.c.h.b16 %v2097
    %v2249 = vunpack.c.l.b16 %v2098
    %v2250 = vunpack.c.h.b16 %v2098
    %v2251 = vunpack.c.l.b16 %v2099
    %v2252 = vunpack.c.h.b16 %v2099
    %v2253 = vunpack.c.l.b16 %v2100
    %v2254 = vunpack.c.h.b16 %v2100
    %v2255 = vunpack.c.l.b16 %v2101
    %v2256 = vunpack.c.h.b16 %v2101
    %v2257 = vunpack.c.l.b16 %v2102
    %v2258 = vunpack.c.h.b16 %v2102
    %v2259 = vunpack.c.l.b16 %v2103
    %v2260 = vunpack.c.h.b16 %v2103
    %v2261 = vunpack.c.l.b16 %v2104
    %v2262 = vunpack.c.h.b16 %v2104
    %v2263 = vunpack.c.l.b16 %v2105
    %v2264 = vunpack.c.h.b16 %v2105
    %v2265 = vunpack.c.l.b16 %v2106
    %v2266 = vunpack.c.h.b16 %v2106
    %v2267 = vunpack.c.l.b16 %v2107
    %v2268 = vunpack.c.h.b16 %v2107
    %v2269 = vunpack.c.l.b16 %v2108
    %v2270 = vunpack.c.h.b16 %v2108
    %v2271 = vunpack.c.l.b16 %v2109
    %v2272 = vunpack.c.h.b16 %v2109
    %v2273 = vunpack.c.l.b16 %v2110
    %v2274 = vunpack.c.h.b16 %v2110
    %v2275 = vunpack.c.l.b16 %v2111
    %v2276 = vunpack.c.h.b16 %v2111
    %v2277 = vunpack.c.l.b16 %v2112
    %v2278 = vunpack.c.h.b16 %v2112
    %v2279 = vunpack.c.l.b16 %v2113
    %v2280 = vunpack.c.h.b16 %v2113
    %v2281 = vpack.c.b16 %v2219, %v2217
    %v2282 = vpack.c.b16 %v2220, %v2218
    %v2283 = vpack.c.b16 %v2223, %v2221
    %v2284 = vpack.c.b16 %v2224, %v2222
    %v2285 = vpack.c.b16 %v2227, %v2225
    %v2286 = vpack.c.b16 %v2228, %v2226
    %v2287 = vpack.c.b16 %v2231, %v2229
    %v2288 = vpack.c.b16 %v2232, %v2230
    %v2289 = vpack.c.b16 %v2235, %v2233
    %v2290 = vpack.c.b16 %v2236, %v2234
    %v2291 = vpack.c.b16 %v2239, %v2237
    %v2292 = vpack.c.b16 %v2240, %v2238
    %v2293 = vpack.c.b16 %v2243, %v2241
    %v2294 = vpack.c.b16 %v2244, %v2242
    %v2295 = vpack.c.b16 %v2247, %v2245
    %v2296 = vpack.c.b16 %v2248, %v2246
    %v2297 = vpack.c.b16 %v2251, %v2249
    %v2298 = vpack.c.b16 %v2252, %v2250
    %v2299 = vpack.c.b16 %v2255, %v2253
    %v2300 = vpack.c.b16 %v2256, %v2254
    %v2301 = vpack.c.b16 %v2259, %v2257
    %v2302 = vpack.c.b16 %v2260, %v2258
    %v2303 = vpack.c.b16 %v2263, %v2261
    %v2304 = vpack.c.b16 %v2264, %v2262
    %v2305 = vpack.c.b16 %v2267, %v2265
    %v2306 = vpack.c.b16 %v2268, %v2266
    %v2307 = vpack.c.b16 %v2271, %v2269
    %v2308 = vpack.c.b16 %v2272, %v2270
    %v2309 = vpack.c.b16 %v2275, %v2273
    %v2310 = vpack.c.b16 %v2276, %v2274
    %v2311 = vpack.c.b16 %v2279, %v2277
    %v2312 = vpack.c.b16 %v2280, %v2278
    %2345 = vmatprep.subr.bf16.mxu0 %v2282
    %2346 = vmatpush1.bf16.msra.mxu0 %v2281
    %2347 = vmatprep.subr.bf16.mxu0 %v2284
    %2348 = vmatpush1.bf16.msra.mxu0 %v2283
    %2349 = vmatprep.subr.bf16.mxu0 %v2286
    %2350 = vmatpush1.bf16.msra.mxu0 %v2285
    %2351 = vmatprep.subr.bf16.mxu0 %v2288
    %2352 = vmatpush1.bf16.msra.mxu0 %v2287
    %2353 = vmatprep.subr.bf16.mxu0 %v2290
    %2354 = vmatpush1.bf16.msra.mxu0 %v2289
    %2355 = vmatprep.subr.bf16.mxu0 %v2292
    %2356 = vmatpush1.bf16.msra.mxu0 %v2291
    %2357 = vmatprep.subr.bf16.mxu0 %v2294
    %2358 = vmatpush1.bf16.msra.mxu0 %v2293
    %2359 = vmatprep.subr.bf16.mxu0 %v2296
    %2360 = vmatpush1.bf16.msra.mxu0 %v2295
    %2361 = vmatprep.subr.bf16.mxu0 %v2298
    %2362 = vmatpush1.bf16.msra.mxu0 %v2297
    %2363 = vmatprep.subr.bf16.mxu0 %v2300
    %2364 = vmatpush1.bf16.msra.mxu0 %v2299
    %2365 = vmatprep.subr.bf16.mxu0 %v2302
    %2366 = vmatpush1.bf16.msra.mxu0 %v2301
    %2367 = vmatprep.subr.bf16.mxu0 %v2304
    %2368 = vmatpush1.bf16.msra.mxu0 %v2303
    %2369 = vmatprep.subr.bf16.mxu0 %v2306
    %2370 = vmatpush1.bf16.msra.mxu0 %v2305
    %2371 = vmatprep.subr.bf16.mxu0 %v2308
    %2372 = vmatpush1.bf16.msra.mxu0 %v2307
    %2373 = vmatprep.subr.bf16.mxu0 %v2310
    %2374 = vmatpush1.bf16.msra.mxu0 %v2309
    %2375 = vmatprep.subr.bf16.mxu0 %v2312
    %2376 = vmatpush1.bf16.msra.mxu0 %v2311
    %2377 = vmatprep.mubr.bf16.mxu0 %v2120
    %2378 = vmatmul.mubr.bf16.gmra.mrb[0].mxu0 %v2117
    %v2379 = vpop.f32.mrb[0].mxu0
    %v2380 = vadd.f32 0.0, %v2379
    %v2381 = vpop.f32.mrb[0].mxu0
    %v2382 = vadd.f32 0.0, %v2381
    %v2383 = vpop.f32.mrb[0].mxu0
    %v2384 = vadd.f32 0.0, %v2383
    %v2385 = vpop.f32.mrb[0].mxu0
    %v2386 = vadd.f32 0.0, %v2385
    %2387 = vmatprep.mubr.bf16.mxu0 %v2124
    %2388 = vmatmul.mubr.bf16.gmra.mrb[0].mxu0 %v2122
    %v2389 = vpop.f32.mrb[0].mxu0
    %v2390 = vadd.f32 0.0, %v2389
    %v2391 = vpop.f32.mrb[0].mxu0
    %v2392 = vadd.f32 0.0, %v2391
    %v2393 = vpop.f32.mrb[0].mxu0
    %v2394 = vadd.f32 0.0, %v2393
    %v2395 = vpop.f32.mrb[0].mxu0
    %v2396 = vadd.f32 0.0, %v2395
    %2397 = vmatprep.mubr.bf16.mxu0 %v2128
    %2398 = vmatmul.mubr.bf16.gmra.mrb[0].mxu0 %v2126
    %v2399 = vpop.f32.mrb[0].mxu0
    %v2400 = vadd.f32 0.0, %v2399
    %v2401 = vpop.f32.mrb[0].mxu0
    %v2402 = vadd.f32 0.0, %v2401
    %v2403 = vpop.f32.mrb[0].mxu0
    %v2404 = vadd.f32 0.0, %v2403
    %v2405 = vpop.f32.mrb[0].mxu0
    %v2406 = vadd.f32 0.0, %v2405
    %2407 = vmatprep.mubr.bf16.mxu0 %v2132
    %2408 = vmatmul.mubr.bf16.gmra.mrb[0].mxu0 %v2130
    %v2409 = vpop.f32.mrb[0].mxu0
    %v2410 = vadd.f32 0.0, %v2409
    %v2411 = vpop.f32.mrb[0].mxu0
    %v2412 = vadd.f32 0.0, %v2411
    %v2413 = vpop.f32.mrb[0].mxu0
    %v2414 = vadd.f32 0.0, %v2413
    %v2415 = vpop.f32.mrb[0].mxu0
    %v2416 = vadd.f32 0.0, %v2415
    %2417 = vmatprep.mubr.bf16.mxu0 %v2136
    %2418 = vmatmul.mubr.bf16.gmra.mrb[0].mxu0 %v2134
    %v2419 = vpop.f32.mrb[0].mxu0
    %v2420 = vadd.f32 0.0, %v2419
    %v2421 = vpop.f32.mrb[0].mxu0
    %v2422 = vadd.f32 0.0, %v2421
    %v2423 = vpop.f32.mrb[0].mxu0
    %v2424 = vadd.f32 0.0, %v2423
    %v2425 = vpop.f32.mrb[0].mxu0
    %v2426 = vadd.f32 0.0, %v2425
    %2427 = vmatprep.mubr.bf16.mxu0 %v2140
    %2428 = vmatmul.mubr.bf16.gmra.mrb[0].mxu0 %v2138
    %v2429 = vpop.f32.mrb[0].mxu0
    %v2430 = vadd.f32 0.0, %v2429
    %v2431 = vpop.f32.mrb[0].mxu0
    %v2432 = vadd.f32 0.0, %v2431
    %v2433 = vpop.f32.mrb[0].mxu0
    %v2434 = vadd.f32 0.0, %v2433
    %v2435 = vpop.f32.mrb[0].mxu0
    %v2436 = vadd.f32 0.0, %v2435
    %2437 = vmatprep.mubr.bf16.mxu0 %v2144
    %2438 = vmatmul.mubr.bf16.gmra.mrb[0].mxu0 %v2142
    %v2439 = vpop.f32.mrb[0].mxu0
    %v2440 = vadd.f32 0.0, %v2439
    %v2441 = vpop.f32.mrb[0].mxu0
    %v2442 = vadd.f32 0.0, %v2441
    %v2443 = vpop.f32.mrb[0].mxu0
    %v2444 = vadd.f32 0.0, %v2443
    %v2445 = vpop.f32.mrb[0].mxu0
    %v2446 = vadd.f32 0.0, %v2445
    %2447 = vmatprep.mubr.bf16.mxu0 %v2148
    %2448 = vmatmul.mubr.bf16.gmra.mrb[0].mxu0 %v2146
    %v2449 = vpop.f32.mrb[0].mxu0
    %v2450 = vadd.f32 0.0, %v2449
    %v2451 = vpop.f32.mrb[0].mxu0
    %v2452 = vadd.f32 0.0, %v2451
    %v2453 = vpop.f32.mrb[0].mxu0
    %v2454 = vadd.f32 0.0, %v2453
    %v2455 = vpop.f32.mrb[0].mxu0
    %v2456 = vadd.f32 0.0, %v2455
    %2457 = vmatprep.mubr.bf16.mxu0 %v2152
    %2458 = vmatmul.mubr.bf16.gmra.mrb[0].mxu0 %v2150
    %v2459 = vpop.f32.mrb[0].mxu0
    %v2460 = vadd.f32 0.0, %v2459
    %v2461 = vpop.f32.mrb[0].mxu0
    %v2462 = vadd.f32 0.0, %v2461
    %v2463 = vpop.f32.mrb[0].mxu0
    %v2464 = vadd.f32 0.0, %v2463
    %v2465 = vpop.f32.mrb[0].mxu0
    %v2466 = vadd.f32 0.0, %v2465
    %2467 = vmatprep.mubr.bf16.mxu0 %v2156
    %2468 = vmatmul.mubr.bf16.gmra.mrb[0].mxu0 %v2154
    %v2469 = vpop.f32.mrb[0].mxu0
    %v2470 = vadd.f32 0.0, %v2469
    %v2471 = vpop.f32.mrb[0].mxu0
    %v2472 = vadd.f32 0.0, %v2471
    %v2473 = vpop.f32.mrb[0].mxu0
    %v2474 = vadd.f32 0.0, %v2473
    %v2475 = vpop.f32.mrb[0].mxu0
    %v2476 = vadd.f32 0.0, %v2475
    %2477 = vmatprep.mubr.bf16.mxu0 %v2160
    %2478 = vmatmul.mubr.bf16.gmra.mrb[0].mxu0 %v2158
    %v2479 = vpop.f32.mrb[0].mxu0
    %v2480 = vadd.f32 0.0, %v2479
    %v2481 = vpop.f32.mrb[0].mxu0
    %v2482 = vadd.f32 0.0, %v2481
    %v2483 = vpop.f32.mrb[0].mxu0
    %v2484 = vadd.f32 0.0, %v2483
    %v2485 = vpop.f32.mrb[0].mxu0
    %v2486 = vadd.f32 0.0, %v2485
    %2487 = vmatprep.mubr.bf16.mxu0 %v2159
    %2488 = vmatmul.mubr.bf16.gmra.mrb[0].mxu0 %v2157
    %v2489 = vpop.f32.mrb[0].mxu0
    %v2490 = vadd.f32 0.0, %v2489
    %v2491 = vpop.f32.mrb[0].mxu0
    %v2492 = vadd.f32 0.0, %v2491
    %v2493 = vpop.f32.mrb[0].mxu0
    %v2494 = vpop.f32.mrb[0].mxu0
    %2495 = vdwg.mxu0
    %v2496 = vadd.f32 %v2035, %v2380
    %v2497 = vadd.f32 %v2036, %v2382
    %v2498 = vadd.f32 %v2037, %v2384
    %v2499 = vadd.f32 %v2038, %v2386
    %v2500 = vadd.f32 %v2039, %v2390
    %v2501 = vadd.f32 %v2040, %v2392
    %v2502 = vadd.f32 %v2041, %v2394
    %v2503 = vadd.f32 %v2042, %v2396
    %v2504 = vadd.f32 %v2043, %v2400
    %v2505 = vadd.f32 %v2044, %v2402
    %v2506 = vadd.f32 %v2045, %v2404
    %v2507 = vadd.f32 %v2046, %v2406
    %v2508 = vadd.f32 %v2047, %v2410
    %v2509 = vadd.f32 %v2048, %v2412
    %v2510 = vadd.f32 %v2049, %v2414
    %v2511 = vadd.f32 %v2050, %v2416
    %v2512 = vadd.f32 %v2051, %v2420
    %v2513 = vadd.f32 %v2052, %v2422
    %v2514 = vadd.f32 %v2053, %v2424
    %v2515 = vadd.f32 %v2054, %v2426
    %v2516 = vadd.f32 %v2055, %v2430
    %v2517 = vadd.f32 %v2056, %v2432
    %v2518 = vadd.f32 %v2057, %v2434
    %v2519 = vadd.f32 %v2058, %v2436
    %v2520 = vadd.f32 %v2059, %v2440
    %v2521 = vadd.f32 %v2060, %v2442
    %v2522 = vadd.f32 %v2061, %v2444
    %v2523 = vadd.f32 %v2062, %v2446
    %v2524 = vadd.f32 %v2063, %v2450
    %v2525 = vadd.f32 %v2064, %v2452
    %v2526 = vadd.f32 %v2065, %v2454
    %v2527 = vadd.f32 %v2066, %v2456
    %v2528 = vadd.f32 %v2067, %v2460
    %v2529 = vadd.f32 %v2068, %v2462
    %v2530 = vadd.f32 %v2069, %v2464
    %v2531 = vadd.f32 %v2070, %v2466
    %v2532 = vadd.f32 %v2071, %v2470
    %v2533 = vadd.f32 %v2072, %v2472
    %v2534 = vadd.f32 %v2073, %v2474
    %v2535 = vadd.f32 %v2074, %v2476
    %v2536 = vadd.f32 %v2075, %v2480
    %v2537 = vadd.f32 %v2076, %v2482
    %v2538 = vadd.f32 %v2077, %v2484
    %v2539 = vadd.f32 %v2078, %v2486
    %v2540 = vadd.f32 %v2079, %v2490
    %v2541 = vadd.f32 %v2080, %v2492
    %s2542 = scalar_lea.vmem [#allocation5], 1280
    %v2543 = vld [vmem:[%s2542] sm:$0xff]
    %v2544 = vld [vmem:[%s2542 + $0x8] sm:$0xff]
    %v2545 = vld [vmem:[%s2542 + $0x10] sm:$0xff]
    %v2546 = vld [vmem:[%s2542 + $0x18] sm:$0xff]
    %v2547 = vld [vmem:[%s2542 + $0x20] sm:$0xff]
    %v2548 = vld [vmem:[%s2542 + $0x28] sm:$0xff]
    %v2549 = vld [vmem:[%s2542 + $0x30] sm:$0xff]
    %v2550 = vld [vmem:[%s2542 + $0x38] sm:$0xff]
    %v2551 = vld [vmem:[%s2542 + $0x40] sm:$0xff]
    %v2552 = vld [vmem:[%s2542 + $0x48] sm:$0xff]
    %v2553 = vld [vmem:[%s2542 + $0x50] sm:$0xff]
    %v2554 = vld [vmem:[%s2542 + $0x58] sm:$0xff]
    %v2555 = vld [vmem:[%s2542 + $0x60] sm:$0xff]
    %v2556 = vld [vmem:[%s2542 + $0x68] sm:$0xff]
    %v2557 = vld [vmem:[%s2542 + $0x70] sm:$0xff]
    %v2558 = vld [vmem:[%s2542 + $0x78] sm:$0xff]
    %v2559 = vld [vmem:[%s2542 + $0x80] sm:$0xff]
    %v2560 = vld [vmem:[%s2542 + $0x88] sm:$0xff]
    %v2561 = vld [vmem:[%s2542 + $0x90] sm:$0xff]
    %v2562 = vld [vmem:[%s2542 + $0x98] sm:$0xff]
    %v2563 = vld [vmem:[%s2542 + $0xa0] sm:$0xff]
    %v2564 = vld [vmem:[%s2542 + $0xa8] sm:$0xff]
    %v2565 = vld [vmem:[%s2542 + $0xb0] sm:$0xff]
    %v2566 = vld [vmem:[%s2542 + $0xb8] sm:$0xff]
    %v2567 = vld [vmem:[%s2542 + $0xc0] sm:$0xff]
    %v2568 = vld [vmem:[%s2542 + $0xc8] sm:$0xff]
    %v2569 = vld [vmem:[%s2542 + $0xd0] sm:$0xff]
    %v2570 = vld [vmem:[%s2542 + $0xd8] sm:$0xff]
    %v2571 = vld [vmem:[%s2542 + $0xe0] sm:$0xff]
    %v2572 = vld [vmem:[%s2542 + $0xe8] sm:$0xff]
    %v2573 = vld [vmem:[%s2542 + $0xf0] sm:$0xff]
    %v2574 = vld [vmem:[%s2542 + $0xf8] sm:$0xff]
    %vm2575 = vsmask.f32 5376
    %v2576 = vrot.slane %v250, 2
    %v2577 = vrot.slane %v252, 3
    %v2578 = vor.u32 %v2576, %v2577
    %v2579 = vrot.slane %v273, 2
    %v2580 = vrot.slane %v257, 3
    %v2581 = vor.u32 %v2579, %v2580
    %v2582 = vsel %vm2575, %v2578, %v2581
    %v2583 = vrot.slane %v262, 2
    %v2584 = vrot.slane %v264, 3
    %v2585 = vor.u32 %v2583, %v2584
    %v2586 = vrot.slane %v281, 2
    %v2587 = vrot.slane %v269, 3
    %v2588 = vor.u32 %v2586, %v2587
    %v2589 = vsel %vm2575, %v2585, %v2588
    %v2590 = vrot.slane %v289, 2
    %v2591 = vrot.slane %v277, 3
    %v2592 = vor.u32 %v2590, %v2591
    %v2593 = vsel %vm2575, %v2581, %v2592
    %v2594 = vrot.slane %v297, 2
    %v2595 = vrot.slane %v285, 3
    %v2596 = vor.u32 %v2594, %v2595
    %v2597 = vsel %vm2575, %v2588, %v2596
    %v2598 = vrot.slane %v305, 2
    %v2599 = vrot.slane %v293, 3
    %v2600 = vor.u32 %v2598, %v2599
    %v2601 = vsel %vm2575, %v2592, %v2600
    %v2602 = vrot.slane %v313, 2
    %v2603 = vrot.slane %v301, 3
    %v2604 = vor.u32 %v2602, %v2603
    %v2605 = vsel %vm2575, %v2596, %v2604
    %v2606 = vrot.slane %v321, 2
    %v2607 = vrot.slane %v309, 3
    %v2608 = vor.u32 %v2606, %v2607
    %v2609 = vsel %vm2575, %v2600, %v2608
    %v2610 = vrot.slane %v329, 2
    %v2611 = vrot.slane %v317, 3
    %v2612 = vor.u32 %v2610, %v2611
    %v2613 = vsel %vm2575, %v2604, %v2612
    %v2614 = vrot.slane %v337, 2
    %v2615 = vrot.slane %v325, 3
    %v2616 = vor.u32 %v2614, %v2615
    %v2617 = vsel %vm2575, %v2608, %v2616
    %v2618 = vrot.slane %v345, 2
    %v2619 = vrot.slane %v333, 3
    %v2620 = vor.u32 %v2618, %v2619
    %v2621 = vsel %vm2575, %v2612, %v2620
    %v2622 = vrot.slane %v353, 2
    %v2623 = vrot.slane %v341, 3
    %v2624 = vor.u32 %v2622, %v2623
    %v2625 = vsel %vm2575, %v2616, %v2624
    %v2626 = vrot.slane %v361, 2
    %v2627 = vrot.slane %v349, 3
    %v2628 = vor.u32 %v2626, %v2627
    %v2629 = vsel %vm2575, %v2620, %v2628
    %v2630 = vrot.slane %v369, 2
    %v2631 = vrot.slane %v357, 3
    %v2632 = vor.u32 %v2630, %v2631
    %v2633 = vsel %vm2575, %v2624, %v2632
    %v2634 = vrot.slane %v377, 2
    %v2635 = vrot.slane %v365, 3
    %v2636 = vor.u32 %v2634, %v2635
    %v2637 = vsel %vm2575, %v2628, %v2636
    %v2638 = vrot.slane %v385, 2
    %v2639 = vrot.slane %v373, 3
    %v2640 = vor.u32 %v2638, %v2639
    %v2641 = vsel %vm2575, %v2632, %v2640
    %v2642 = vrot.slane %v393, 2
    %v2643 = vrot.slane %v381, 3
    %v2644 = vor.u32 %v2642, %v2643
    %v2645 = vsel %vm2575, %v2636, %v2644
    %v2646 = vrot.slane %v401, 2
    %v2647 = vrot.slane %v389, 3
    %v2648 = vor.u32 %v2646, %v2647
    %v2649 = vsel %vm2575, %v2640, %v2648
    %v2650 = vrot.slane %v409, 2
    %v2651 = vrot.slane %v397, 3
    %v2652 = vor.u32 %v2650, %v2651
    %v2653 = vsel %vm2575, %v2644, %v2652
    %v2654 = vrot.slane %v417, 2
    %v2655 = vrot.slane %v405, 3
    %v2656 = vor.u32 %v2654, %v2655
    %v2657 = vsel %vm2575, %v2648, %v2656
    %v2658 = vrot.slane %v425, 2
    %v2659 = vrot.slane %v413, 3
    %v2660 = vor.u32 %v2658, %v2659
    %v2661 = vsel %vm2575, %v2652, %v2660
    %v2662 = vrot.slane %v433, 2
    %v2663 = vrot.slane %v421, 3
    %v2664 = vor.u32 %v2662, %v2663
    %v2665 = vsel %vm2575, %v2656, %v2664
    %v2666 = vrot.slane %v436, 2
    %v2667 = vrot.slane %v429, 3
    %v2668 = vor.u32 %v2666, %v2667
    %v2669 = vsel %vm2575, %v2660, %v2668
    %v2726 = vunpack.c.l.b16 %v2543
    %v2727 = vunpack.c.h.b16 %v2543
    %v2728 = vunpack.c.l.b16 %v2544
    %v2729 = vunpack.c.h.b16 %v2544
    %v2730 = vunpack.c.l.b16 %v2545
    %v2731 = vunpack.c.h.b16 %v2545
    %v2732 = vunpack.c.l.b16 %v2546
    %v2733 = vunpack.c.h.b16 %v2546
    %v2734 = vunpack.c.l.b16 %v2547
    %v2735 = vunpack.c.h.b16 %v2547
    %v2736 = vunpack.c.l.b16 %v2548
    %v2737 = vunpack.c.h.b16 %v2548
    %v2738 = vunpack.c.l.b16 %v2549
    %v2739 = vunpack.c.h.b16 %v2549
    %v2740 = vunpack.c.l.b16 %v2550
    %v2741 = vunpack.c.h.b16 %v2550
    %v2742 = vunpack.c.l.b16 %v2551
    %v2743 = vunpack.c.h.b16 %v2551
    %v2744 = vunpack.c.l.b16 %v2552
    %v2745 = vunpack.c.h.b16 %v2552
    %v2746 = vunpack.c.l.b16 %v2553
    %v2747 = vunpack.c.h.b16 %v2553
    %v2748 = vunpack.c.l.b16 %v2554
    %v2749 = vunpack.c.h.b16 %v2554
    %v2750 = vunpack.c.l.b16 %v2555
    %v2751 = vunpack.c.h.b16 %v2555
    %v2752 = vunpack.c.l.b16 %v2556
    %v2753 = vunpack.c.h.b16 %v2556
    %v2754 = vunpack.c.l.b16 %v2557
    %v2755 = vunpack.c.h.b16 %v2557
    %v2756 = vunpack.c.l.b16 %v2558
    %v2757 = vunpack.c.h.b16 %v2558
    %v2758 = vunpack.c.l.b16 %v2559
    %v2759 = vunpack.c.h.b16 %v2559
    %v2760 = vunpack.c.l.b16 %v2560
    %v2761 = vunpack.c.h.b16 %v2560
    %v2762 = vunpack.c.l.b16 %v2561
    %v2763 = vunpack.c.h.b16 %v2561
    %v2764 = vunpack.c.l.b16 %v2562
    %v2765 = vunpack.c.h.b16 %v2562
    %v2766 = vunpack.c.l.b16 %v2563
    %v2767 = vunpack.c.h.b16 %v2563
    %v2768 = vunpack.c.l.b16 %v2564
    %v2769 = vunpack.c.h.b16 %v2564
    %v2770 = vunpack.c.l.b16 %v2565
    %v2771 = vunpack.c.h.b16 %v2565
    %v2772 = vunpack.c.l.b16 %v2566
    %v2773 = vunpack.c.h.b16 %v2566
    %v2774 = vunpack.c.l.b16 %v2567
    %v2775 = vunpack.c.h.b16 %v2567
    %v2776 = vunpack.c.l.b16 %v2568
    %v2777 = vunpack.c.h.b16 %v2568
    %v2778 = vunpack.c.l.b16 %v2569
    %v2779 = vunpack.c.h.b16 %v2569
    %v2780 = vunpack.c.l.b16 %v2570
    %v2781 = vunpack.c.h.b16 %v2570
    %v2782 = vunpack.c.l.b16 %v2571
    %v2783 = vunpack.c.h.b16 %v2571
    %v2784 = vunpack.c.l.b16 %v2572
    %v2785 = vunpack.c.h.b16 %v2572
    %v2786 = vunpack.c.l.b16 %v2573
    %v2787 = vunpack.c.h.b16 %v2573
    %v2788 = vunpack.c.l.b16 %v2574
    %v2789 = vunpack.c.h.b16 %v2574
    %v2790 = vpack.c.b16 %v2728, %v2726
    %v2791 = vpack.c.b16 %v2729, %v2727
    %v2792 = vpack.c.b16 %v2732, %v2730
    %v2793 = vpack.c.b16 %v2733, %v2731
    %v2794 = vpack.c.b16 %v2736, %v2734
    %v2795 = vpack.c.b16 %v2737, %v2735
    %v2796 = vpack.c.b16 %v2740, %v2738
    %v2797 = vpack.c.b16 %v2741, %v2739
    %v2798 = vpack.c.b16 %v2744, %v2742
    %v2799 = vpack.c.b16 %v2745, %v2743
    %v2800 = vpack.c.b16 %v2748, %v2746
    %v2801 = vpack.c.b16 %v2749, %v2747
    %v2802 = vpack.c.b16 %v2752, %v2750
    %v2803 = vpack.c.b16 %v2753, %v2751
    %v2804 = vpack.c.b16 %v2756, %v2754
    %v2805 = vpack.c.b16 %v2757, %v2755
    %v2806 = vpack.c.b16 %v2760, %v2758
    %v2807 = vpack.c.b16 %v2761, %v2759
    %v2808 = vpack.c.b16 %v2764, %v2762
    %v2809 = vpack.c.b16 %v2765, %v2763
    %v2810 = vpack.c.b16 %v2768, %v2766
    %v2811 = vpack.c.b16 %v2769, %v2767
    %v2812 = vpack.c.b16 %v2772, %v2770
    %v2813 = vpack.c.b16 %v2773, %v2771
    %v2814 = vpack.c.b16 %v2776, %v2774
    %v2815 = vpack.c.b16 %v2777, %v2775
    %v2816 = vpack.c.b16 %v2780, %v2778
    %v2817 = vpack.c.b16 %v2781, %v2779
    %v2818 = vpack.c.b16 %v2784, %v2782
    %v2819 = vpack.c.b16 %v2785, %v2783
    %v2820 = vpack.c.b16 %v2788, %v2786
    %v2821 = vpack.c.b16 %v2789, %v2787
    %2854 = vmatprep.subr.bf16.mxu0 %v2791
    %2855 = vmatpush1.bf16.msra.mxu0 %v2790
    %2856 = vmatprep.subr.bf16.mxu0 %v2793
    %2857 = vmatpush1.bf16.msra.mxu0 %v2792
    %2858 = vmatprep.subr.bf16.mxu0 %v2795
    %2859 = vmatpush1.bf16.msra.mxu0 %v2794
    %2860 = vmatprep.subr.bf16.mxu0 %v2797
    %2861 = vmatpush1.bf16.msra.mxu0 %v2796
    %2862 = vmatprep.subr.bf16.mxu0 %v2799
    %2863 = vmatpush1.bf16.msra.mxu0 %v2798
    %2864 = vmatprep.subr.bf16.mxu0 %v2801
    %2865 = vmatpush1.bf16.msra.mxu0 %v2800
    %2866 = vmatprep.subr.bf16.mxu0 %v2803
    %2867 = vmatpush1.bf16.msra.mxu0 %v2802
    %2868 = vmatprep.subr.bf16.mxu0 %v2805
    %2869 = vmatpush1.bf16.msra.mxu0 %v2804
    %2870 = vmatprep.subr.bf16.mxu0 %v2807
    %2871 = vmatpush1.bf16.msra.mxu0 %v2806
    %2872 = vmatprep.subr.bf16.mxu0 %v2809
    %2873 = vmatpush1.bf16.msra.mxu0 %v2808
    %2874 = vmatprep.subr.bf16.mxu0 %v2811
    %2875 = vmatpush1.bf16.msra.mxu0 %v2810
    %2876 = vmatprep.subr.bf16.mxu0 %v2813
    %2877 = vmatpush1.bf16.msra.mxu0 %v2812
    %2878 = vmatprep.subr.bf16.mxu0 %v2815
    %2879 = vmatpush1.bf16.msra.mxu0 %v2814
    %2880 = vmatprep.subr.bf16.mxu0 %v2817
    %2881 = vmatpush1.bf16.msra.mxu0 %v2816
    %2882 = vmatprep.subr.bf16.mxu0 %v2819
    %2883 = vmatpush1.bf16.msra.mxu0 %v2818
    %2884 = vmatprep.subr.bf16.mxu0 %v2821
    %2885 = vmatpush1.bf16.msra.mxu0 %v2820
    %2886 = vmatprep.mubr.bf16.mxu0 %v2589
    %2887 = vmatmul.mubr.bf16.gmra.mrb[0].mxu0 %v2582
    %v2888 = vpop.f32.mrb[0].mxu0
    %v2889 = vadd.f32 0.0, %v2888
    %v2890 = vpop.f32.mrb[0].mxu0
    %v2891 = vadd.f32 0.0, %v2890
    %v2892 = vpop.f32.mrb[0].mxu0
    %v2893 = vadd.f32 0.0, %v2892
    %v2894 = vpop.f32.mrb[0].mxu0
    %v2895 = vadd.f32 0.0, %v2894
    %2896 = vmatprep.mubr.bf16.mxu0 %v2597
    %2897 = vmatmul.mubr.bf16.gmra.mrb[0].mxu0 %v2593
    %v2898 = vpop.f32.mrb[0].mxu0
    %v2899 = vadd.f32 0.0, %v2898
    %v2900 = vpop.f32.mrb[0].mxu0
    %v2901 = vadd.f32 0.0, %v2900
    %v2902 = vpop.f32.mrb[0].mxu0
    %v2903 = vadd.f32 0.0, %v2902
    %v2904 = vpop.f32.mrb[0].mxu0
    %v2905 = vadd.f32 0.0, %v2904
    %2906 = vmatprep.mubr.bf16.mxu0 %v2605
    %2907 = vmatmul.mubr.bf16.gmra.mrb[0].mxu0 %v2601
    %v2908 = vpop.f32.mrb[0].mxu0
    %v2909 = vadd.f32 0.0, %v2908
    %v2910 = vpop.f32.mrb[0].mxu0
    %v2911 = vadd.f32 0.0, %v2910
    %v2912 = vpop.f32.mrb[0].mxu0
    %v2913 = vadd.f32 0.0, %v2912
    %v2914 = vpop.f32.mrb[0].mxu0
    %v2915 = vadd.f32 0.0, %v2914
    %2916 = vmatprep.mubr.bf16.mxu0 %v2613
    %2917 = vmatmul.mubr.bf16.gmra.mrb[0].mxu0 %v2609
    %v2918 = vpop.f32.mrb[0].mxu0
    %v2919 = vadd.f32 0.0, %v2918
    %v2920 = vpop.f32.mrb[0].mxu0
    %v2921 = vadd.f32 0.0, %v2920
    %v2922 = vpop.f32.mrb[0].mxu0
    %v2923 = vadd.f32 0.0, %v2922
    %v2924 = vpop.f32.mrb[0].mxu0
    %v2925 = vadd.f32 0.0, %v2924
    %2926 = vmatprep.mubr.bf16.mxu0 %v2621
    %2927 = vmatmul.mubr.bf16.gmra.mrb[0].mxu0 %v2617
    %v2928 = vpop.f32.mrb[0].mxu0
    %v2929 = vadd.f32 0.0, %v2928
    %v2930 = vpop.f32.mrb[0].mxu0
    %v2931 = vadd.f32 0.0, %v2930
    %v2932 = vpop.f32.mrb[0].mxu0
    %v2933 = vadd.f32 0.0, %v2932
    %v2934 = vpop.f32.mrb[0].mxu0
    %v2935 = vadd.f32 0.0, %v2934
    %2936 = vmatprep.mubr.bf16.mxu0 %v2629
    %2937 = vmatmul.mubr.bf16.gmra.mrb[0].mxu0 %v2625
    %v2938 = vpop.f32.mrb[0].mxu0
    %v2939 = vadd.f32 0.0, %v2938
    %v2940 = vpop.f32.mrb[0].mxu0
    %v2941 = vadd.f32 0.0, %v2940
    %v2942 = vpop.f32.mrb[0].mxu0
    %v2943 = vadd.f32 0.0, %v2942
    %v2944 = vpop.f32.mrb[0].mxu0
    %v2945 = vadd.f32 0.0, %v2944
    %2946 = vmatprep.mubr.bf16.mxu0 %v2637
    %2947 = vmatmul.mubr.bf16.gmra.mrb[0].mxu0 %v2633
    %v2948 = vpop.f32.mrb[0].mxu0
    %v2949 = vadd.f32 0.0, %v2948
    %v2950 = vpop.f32.mrb[0].mxu0
    %v2951 = vadd.f32 0.0, %v2950
    %v2952 = vpop.f32.mrb[0].mxu0
    %v2953 = vadd.f32 0.0, %v2952
    %v2954 = vpop.f32.mrb[0].mxu0
    %v2955 = vadd.f32 0.0, %v2954
    %2956 = vmatprep.mubr.bf16.mxu0 %v2645
    %2957 = vmatmul.mubr.bf16.gmra.mrb[0].mxu0 %v2641
    %v2958 = vpop.f32.mrb[0].mxu0
    %v2959 = vadd.f32 0.0, %v2958
    %v2960 = vpop.f32.mrb[0].mxu0
    %v2961 = vadd.f32 0.0, %v2960
    %v2962 = vpop.f32.mrb[0].mxu0
    %v2963 = vadd.f32 0.0, %v2962
    %v2964 = vpop.f32.mrb[0].mxu0
    %v2965 = vadd.f32 0.0, %v2964
    %2966 = vmatprep.mubr.bf16.mxu0 %v2653
    %2967 = vmatmul.mubr.bf16.gmra.mrb[0].mxu0 %v2649
    %v2968 = vpop.f32.mrb[0].mxu0
    %v2969 = vadd.f32 0.0, %v2968
    %v2970 = vpop.f32.mrb[0].mxu0
    %v2971 = vadd.f32 0.0, %v2970
    %v2972 = vpop.f32.mrb[0].mxu0
    %v2973 = vadd.f32 0.0, %v2972
    %v2974 = vpop.f32.mrb[0].mxu0
    %v2975 = vadd.f32 0.0, %v2974
    %2976 = vmatprep.mubr.bf16.mxu0 %v2661
    %2977 = vmatmul.mubr.bf16.gmra.mrb[0].mxu0 %v2657
    %v2978 = vpop.f32.mrb[0].mxu0
    %v2979 = vadd.f32 0.0, %v2978
    %v2980 = vpop.f32.mrb[0].mxu0
    %v2981 = vadd.f32 0.0, %v2980
    %v2982 = vpop.f32.mrb[0].mxu0
    %v2983 = vadd.f32 0.0, %v2982
    %v2984 = vpop.f32.mrb[0].mxu0
    %v2985 = vadd.f32 0.0, %v2984
    %2986 = vmatprep.mubr.bf16.mxu0 %v2669
    %2987 = vmatmul.mubr.bf16.gmra.mrb[0].mxu0 %v2665
    %v2988 = vpop.f32.mrb[0].mxu0
    %v2989 = vadd.f32 0.0, %v2988
    %v2990 = vpop.f32.mrb[0].mxu0
    %v2991 = vadd.f32 0.0, %v2990
    %v2992 = vpop.f32.mrb[0].mxu0
    %v2993 = vadd.f32 0.0, %v2992
    %v2994 = vpop.f32.mrb[0].mxu0
    %v2995 = vadd.f32 0.0, %v2994
    %2996 = vmatprep.mubr.bf16.mxu0 %v2668
    %2997 = vmatmul.mubr.bf16.gmra.mrb[0].mxu0 %v2664
    %v2998 = vpop.f32.mrb[0].mxu0
    %v2999 = vadd.f32 0.0, %v2998
    %v3000 = vpop.f32.mrb[0].mxu0
    %v3001 = vadd.f32 0.0, %v3000
    %v3002 = vpop.f32.mrb[0].mxu0
    %v3003 = vpop.f32.mrb[0].mxu0
    %3004 = vdwg.mxu0
    %v3005 = vadd.f32 %v2496, %v2889
    %v3006 = vadd.f32 %v2497, %v2891
    %v3007 = vadd.f32 %v2498, %v2893
    %v3008 = vadd.f32 %v2499, %v2895
    %v3009 = vadd.f32 %v2500, %v2899
    %v3010 = vadd.f32 %v2501, %v2901
    %v3011 = vadd.f32 %v2502, %v2903
    %v3012 = vadd.f32 %v2503, %v2905
    %v3013 = vadd.f32 %v2504, %v2909
    %v3014 = vadd.f32 %v2505, %v2911
    %v3015 = vadd.f32 %v2506, %v2913
    %v3016 = vadd.f32 %v2507, %v2915
    %v3017 = vadd.f32 %v2508, %v2919
    %v3018 = vadd.f32 %v2509, %v2921
    %v3019 = vadd.f32 %v2510, %v2923
    %v3020 = vadd.f32 %v2511, %v2925
    %v3021 = vadd.f32 %v2512, %v2929
    %v3022 = vadd.f32 %v2513, %v2931
    %v3023 = vadd.f32 %v2514, %v2933
    %v3024 = vadd.f32 %v2515, %v2935
    %v3025 = vadd.f32 %v2516, %v2939
    %v3026 = vadd.f32 %v2517, %v2941
    %v3027 = vadd.f32 %v2518, %v2943
    %v3028 = vadd.f32 %v2519, %v2945
    %v3029 = vadd.f32 %v2520, %v2949
    %v3030 = vadd.f32 %v2521, %v2951
    %v3031 = vadd.f32 %v2522, %v2953
    %v3032 = vadd.f32 %v2523, %v2955
    %v3033 = vadd.f32 %v2524, %v2959
    %v3034 = vadd.f32 %v2525, %v2961
    %v3035 = vadd.f32 %v2526, %v2963
    %v3036 = vadd.f32 %v2527, %v2965
    %v3037 = vadd.f32 %v2528, %v2969
    %v3038 = vadd.f32 %v2529, %v2971
    %v3039 = vadd.f32 %v2530, %v2973
    %v3040 = vadd.f32 %v2531, %v2975
    %v3041 = vadd.f32 %v2532, %v2979
    %v3042 = vadd.f32 %v2533, %v2981
    %v3043 = vadd.f32 %v2534, %v2983
    %v3044 = vadd.f32 %v2535, %v2985
    %v3045 = vadd.f32 %v2536, %v2989
    %v3046 = vadd.f32 %v2537, %v2991
    %v3047 = vadd.f32 %v2538, %v2993
    %v3048 = vadd.f32 %v2539, %v2995
    %v3049 = vadd.f32 %v2540, %v2999
    %v3050 = vadd.f32 %v2541, %v3001
    %v3051 = vld [vmem:[%s2] sm:$0x3]
    %v3053 = vlaneseq
    %v3054 = vshrl.u32 %v3053, 7
    %v3055 = vsub.s32 0, %v3054
    %v3056 = vrot.slane %v3051, %v3055
    %v3057 = vlaneseq
    %v3058 = vshrl.u32 %v3057, 7
    %v3059 = vsub.s32 1, %v3058
    %v3060 = vrot.slane %v3051, %v3059
    %v3063 = vadd.f32 %v3005, %v3056
    %v3064 = vadd.f32 %v3006, %v3060
    %v3065 = vadd.f32 %v3007, %v3056
    %v3066 = vadd.f32 %v3008, %v3060
    %v3067 = vadd.f32 %v3009, %v3056
    %v3068 = vadd.f32 %v3010, %v3060
    %v3069 = vadd.f32 %v3011, %v3056
    %v3070 = vadd.f32 %v3012, %v3060
    %v3071 = vadd.f32 %v3013, %v3056
    %v3072 = vadd.f32 %v3014, %v3060
    %v3073 = vadd.f32 %v3015, %v3056
    %v3074 = vadd.f32 %v3016, %v3060
    %v3075 = vadd.f32 %v3017, %v3056
    %v3076 = vadd.f32 %v3018, %v3060
    %v3077 = vadd.f32 %v3019, %v3056
    %v3078 = vadd.f32 %v3020, %v3060
    %v3079 = vadd.f32 %v3021, %v3056
    %v3080 = vadd.f32 %v3022, %v3060
    %v3081 = vadd.f32 %v3023, %v3056
    %v3082 = vadd.f32 %v3024, %v3060
    %v3083 = vadd.f32 %v3025, %v3056
    %v3084 = vadd.f32 %v3026, %v3060
    %v3085 = vadd.f32 %v3027, %v3056
    %v3086 = vadd.f32 %v3028, %v3060
    %v3087 = vadd.f32 %v3029, %v3056
    %v3088 = vadd.f32 %v3030, %v3060
    %v3089 = vadd.f32 %v3031, %v3056
    %v3090 = vadd.f32 %v3032, %v3060
    %v3091 = vadd.f32 %v3033, %v3056
    %v3092 = vadd.f32 %v3034, %v3060
    %v3093 = vadd.f32 %v3035, %v3056
    %v3094 = vadd.f32 %v3036, %v3060
    %v3095 = vadd.f32 %v3037, %v3056
    %v3096 = vadd.f32 %v3038, %v3060
    %v3097 = vadd.f32 %v3039, %v3056
    %v3098 = vadd.f32 %v3040, %v3060
    %v3099 = vadd.f32 %v3041, %v3056
    %v3100 = vadd.f32 %v3042, %v3060
    %v3101 = vadd.f32 %v3043, %v3056
    %v3102 = vadd.f32 %v3044, %v3060
    %v3103 = vadd.f32 %v3045, %v3056
    %v3104 = vadd.f32 %v3046, %v3060
    %v3105 = vadd.f32 %v3047, %v3056
    %v3106 = vadd.f32 %v3048, %v3060
    %v3107 = vadd.f32 %v3049, %v3056
    %v3108 = vadd.f32 %v3050, %v3060
    %v3109 = vtanh.pop %v3063
    %v3110 = vtanh.pop %v3064
    %v3111 = vtanh.pop %v3065
    %v3112 = vtanh.pop %v3066
    %v3113 = vtanh.pop %v3067
    %v3114 = vtanh.pop %v3068
    %v3115 = vtanh.pop %v3069
    %v3116 = vtanh.pop %v3070
    %v3117 = vtanh.pop %v3071
    %v3118 = vtanh.pop %v3072
    %v3119 = vtanh.pop %v3073
    %v3120 = vtanh.pop %v3074
    %v3121 = vtanh.pop %v3075
    %v3122 = vtanh.pop %v3076
    %v3123 = vtanh.pop %v3077
    %v3124 = vtanh.pop %v3078
    %v3125 = vtanh.pop %v3079
    %v3126 = vtanh.pop %v3080
    %v3127 = vtanh.pop %v3081
    %v3128 = vtanh.pop %v3082
    %v3129 = vtanh.pop %v3083
    %v3130 = vtanh.pop %v3084
    %v3131 = vtanh.pop %v3085
    %v3132 = vtanh.pop %v3086
    %v3133 = vtanh.pop %v3087
    %v3134 = vtanh.pop %v3088
    %v3135 = vtanh.pop %v3089
    %v3136 = vtanh.pop %v3090
    %v3137 = vtanh.pop %v3091
    %v3138 = vtanh.pop %v3092
    %v3139 = vtanh.pop %v3093
    %v3140 = vtanh.pop %v3094
    %v3141 = vtanh.pop %v3095
    %v3142 = vtanh.pop %v3096
    %v3143 = vtanh.pop %v3097
    %v3144 = vtanh.pop %v3098
    %v3145 = vtanh.pop %v3099
    %v3146 = vtanh.pop %v3100
    %v3147 = vtanh.pop %v3101
    %v3148 = vtanh.pop %v3102
    %v3149 = vtanh.pop %v3103
    %v3150 = vtanh.pop %v3104
    %v3151 = vtanh.pop %v3105
    %v3152 = vtanh.pop %v3106
    %v3153 = vtanh.pop %v3107
    %v3154 = vtanh.pop %v3108
    %v3155 = vlaneseq
    %v3156 = vshrl.u32 %v3155, 7
    %v3157 = vadd.s32 %v3156, 8
    %v3158 = vadd.s32 %v3156, 16
    %v3159 = vlaneseq
    %v3160 = vand.u32 %v3159, 127
    %v3161 = vadd.s32 %v3160, 128
    %vm3162 = vcmp.lt.s32.totalorder %v3160, 128
    %vm3163 = vcmp.lt.s32.totalorder %v3161, 128
    %v3164 = vsel %vm3162, 12, 15
    %v3165 = vsel %vm3163, 12, 15
    %vm3166 = vcmp.lt.s32.totalorder %v3156, %v3164
    %vm3167 = vcmp.lt.s32.totalorder %v3156, %v3165
    %vm3168 = vcmp.lt.s32.totalorder %v3157, %v3164
    %vm3169 = vcmp.lt.s32.totalorder %v3157, %v3165
    %vm3170 = vcmp.lt.s32.totalorder %v3158, %v3164
    %vm3171 = vcmp.lt.s32.totalorder %v3158, %v3165
    %v3172 = vsel %vm3166, %v3109, -2.0
    %v3173 = vsel %vm3167, %v3110, -2.0
    %v3174 = vsel %vm3168, %v3111, -2.0
    %v3175 = vsel %vm3169, %v3112, -2.0
    %v3176 = vsel %vm3170, %v3113, -2.0
    %v3177 = vsel %vm3171, %v3114, -2.0
    %v3178 = vsel %vm3166, %v3115, -2.0
    %v3179 = vsel %vm3167, %v3116, -2.0
    %v3180 = vsel %vm3168, %v3117, -2.0
    %v3181 = vsel %vm3169, %v3118, -2.0
    %v3182 = vsel %vm3170, %v3119, -2.0
    %v3183 = vsel %vm3171, %v3120, -2.0
    %v3184 = vsel %vm3166, %v3121, -2.0
    %v3185 = vsel %vm3167, %v3122, -2.0
    %v3186 = vsel %vm3168, %v3123, -2.0
    %v3187 = vsel %vm3169, %v3124, -2.0
    %v3188 = vsel %vm3170, %v3125, -2.0
    %v3189 = vsel %vm3171, %v3126, -2.0
    %v3190 = vsel %vm3166, %v3127, -2.0
    %v3191 = vsel %vm3167, %v3128, -2.0
    %v3192 = vsel %vm3168, %v3129, -2.0
    %v3193 = vsel %vm3169, %v3130, -2.0
    %v3194 = vsel %vm3170, %v3131, -2.0
    %v3195 = vsel %vm3171, %v3132, -2.0
    %v3196 = vsel %vm3166, %v3133, -2.0
    %v3197 = vsel %vm3167, %v3134, -2.0
    %v3198 = vsel %vm3168, %v3135, -2.0
    %v3199 = vsel %vm3169, %v3136, -2.0
    %v3200 = vsel %vm3170, %v3137, -2.0
    %v3201 = vsel %vm3171, %v3138, -2.0
    %v3202 = vsel %vm3166, %v3139, -2.0
    %v3203 = vsel %vm3167, %v3140, -2.0
    %v3204 = vsel %vm3168, %v3141, -2.0
    %v3205 = vsel %vm3169, %v3142, -2.0
    %v3206 = vsel %vm3170, %v3143, -2.0
    %v3207 = vsel %vm3171, %v3144, -2.0
    %v3208 = vsel %vm3166, %v3145, -2.0
    %v3209 = vsel %vm3167, %v3146, -2.0
    %v3210 = vsel %vm3168, %v3147, -2.0
    %v3211 = vsel %vm3169, %v3148, -2.0
    %v3212 = vsel %vm3170, %v3149, -2.0
    %v3213 = vsel %vm3171, %v3150, -2.0
    %v3214 = vsel %vm3166, %v3151, -2.0
    %v3215 = vsel %vm3167, %v3152, -2.0
    %v3216 = vsel %vm3168, %v3153, -2.0
    %v3217 = vsel %vm3169, %v3154, -2.0
    %v3218 = vsel %vm3170, 0.0, -2.0
    %v3219 = vsel %vm3171, 0.0, -2.0
    %v3220 = vmax.f32 %v3172, %v3174
    %v3221 = vmax.f32 %v3220, %v3176
    %v3222 = vrot.slane %v3221, 4
    %v3223 = vmax.f32 %v3221, %v3222
    %v3224 = vrot.slane %v3223, 2
    %v3225 = vmax.f32 %v3223, %v3224
    %v3226 = vrot.slane %v3225, 1
    %v3227 = vmax.f32 %v3225, %v3226
    %v3228 = vmax.f32 %v3173, %v3175
    %v3229 = vmax.f32 %v3228, %v3177
    %v3230 = vrot.slane %v3229, 4
    %v3231 = vmax.f32 %v3229, %v3230
    %v3232 = vrot.slane %v3231, 2
    %v3233 = vmax.f32 %v3231, %v3232
    %v3234 = vrot.slane %v3233, 1
    %v3235 = vmax.f32 %v3233, %v3234
    %v3236 = vmax.f32 %v3178, %v3180
    %v3237 = vmax.f32 %v3236, %v3182
    %v3238 = vrot.slane %v3237, 4
    %v3239 = vmax.f32 %v3237, %v3238
    %v3240 = vrot.slane %v3239, 2
    %v3241 = vmax.f32 %v3239, %v3240
    %v3242 = vrot.slane %v3241, 1
    %v3243 = vmax.f32 %v3241, %v3242
    %v3244 = vmax.f32 %v3179, %v3181
    %v3245 = vmax.f32 %v3244, %v3183
    %v3246 = vrot.slane %v3245, 4
    %v3247 = vmax.f32 %v3245, %v3246
    %v3248 = vrot.slane %v3247, 2
    %v3249 = vmax.f32 %v3247, %v3248
    %v3250 = vrot.slane %v3249, 1
    %v3251 = vmax.f32 %v3249, %v3250
    %v3252 = vmax.f32 %v3184, %v3186
    %v3253 = vmax.f32 %v3252, %v3188
    %v3254 = vrot.slane %v3253, 4
    %v3255 = vmax.f32 %v3253, %v3254
    %v3256 = vrot.slane %v3255, 2
    %v3257 = vmax.f32 %v3255, %v3256
    %v3258 = vrot.slane %v3257, 1
    %v3259 = vmax.f32 %v3257, %v3258
    %v3260 = vmax.f32 %v3185, %v3187
    %v3261 = vmax.f32 %v3260, %v3189
    %v3262 = vrot.slane %v3261, 4
    %v3263 = vmax.f32 %v3261, %v3262
    %v3264 = vrot.slane %v3263, 2
    %v3265 = vmax.f32 %v3263, %v3264
    %v3266 = vrot.slane %v3265, 1
    %v3267 = vmax.f32 %v3265, %v3266
    %v3268 = vmax.f32 %v3190, %v3192
    %v3269 = vmax.f32 %v3268, %v3194
    %v3270 = vrot.slane %v3269, 4
    %v3271 = vmax.f32 %v3269, %v3270
    %v3272 = vrot.slane %v3271, 2
    %v3273 = vmax.f32 %v3271, %v3272
    %v3274 = vrot.slane %v3273, 1
    %v3275 = vmax.f32 %v3273, %v3274
    %v3276 = vmax.f32 %v3191, %v3193
    %v3277 = vmax.f32 %v3276, %v3195
    %v3278 = vrot.slane %v3277, 4
    %v3279 = vmax.f32 %v3277, %v3278
    %v3280 = vrot.slane %v3279, 2
    %v3281 = vmax.f32 %v3279, %v3280
    %v3282 = vrot.slane %v3281, 1
    %v3283 = vmax.f32 %v3281, %v3282
    %v3284 = vmax.f32 %v3196, %v3198
    %v3285 = vmax.f32 %v3284, %v3200
    %v3286 = vrot.slane %v3285, 4
    %v3287 = vmax.f32 %v3285, %v3286
    %v3288 = vrot.slane %v3287, 2
    %v3289 = vmax.f32 %v3287, %v3288
    %v3290 = vrot.slane %v3289, 1
    %v3291 = vmax.f32 %v3289, %v3290
    %v3292 = vmax.f32 %v3197, %v3199
    %v3293 = vmax.f32 %v3292, %v3201
    %v3294 = vrot.slane %v3293, 4
    %v3295 = vmax.f32 %v3293, %v3294
    %v3296 = vrot.slane %v3295, 2
    %v3297 = vmax.f32 %v3295, %v3296
    %v3298 = vrot.slane %v3297, 1
    %v3299 = vmax.f32 %v3297, %v3298
    %v3300 = vmax.f32 %v3202, %v3204
    %v3301 = vmax.f32 %v3300, %v3206
    %v3302 = vrot.slane %v3301, 4
    %v3303 = vmax.f32 %v3301, %v3302
    %v3304 = vrot.slane %v3303, 2
    %v3305 = vmax.f32 %v3303, %v3304
    %v3306 = vrot.slane %v3305, 1
    %v3307 = vmax.f32 %v3305, %v3306
    %v3308 = vmax.f32 %v3203, %v3205
    %v3309 = vmax.f32 %v3308, %v3207
    %v3310 = vrot.slane %v3309, 4
    %v3311 = vmax.f32 %v3309, %v3310
    %v3312 = vrot.slane %v3311, 2
    %v3313 = vmax.f32 %v3311, %v3312
    %v3314 = vrot.slane %v3313, 1
    %v3315 = vmax.f32 %v3313, %v3314
    %v3316 = vmax.f32 %v3208, %v3210
    %v3317 = vmax.f32 %v3316, %v3212
    %v3318 = vrot.slane %v3317, 4
    %v3319 = vmax.f32 %v3317, %v3318
    %v3320 = vrot.slane %v3319, 2
    %v3321 = vmax.f32 %v3319, %v3320
    %v3322 = vrot.slane %v3321, 1
    %v3323 = vmax.f32 %v3321, %v3322
    %v3324 = vmax.f32 %v3209, %v3211
    %v3325 = vmax.f32 %v3324, %v3213
    %v3326 = vrot.slane %v3325, 4
    %v3327 = vmax.f32 %v3325, %v3326
    %v3328 = vrot.slane %v3327, 2
    %v3329 = vmax.f32 %v3327, %v3328
    %v3330 = vrot.slane %v3329, 1
    %v3331 = vmax.f32 %v3329, %v3330
    %v3332 = vmax.f32 %v3214, %v3216
    %v3333 = vmax.f32 %v3332, %v3218
    %v3334 = vrot.slane %v3333, 4
    %v3335 = vmax.f32 %v3333, %v3334
    %v3336 = vrot.slane %v3335, 2
    %v3337 = vmax.f32 %v3335, %v3336
    %v3338 = vrot.slane %v3337, 1
    %v3339 = vmax.f32 %v3337, %v3338
    %v3340 = vmax.f32 %v3215, %v3217
    %v3341 = vmax.f32 %v3340, %v3219
    %v3342 = vrot.slane %v3341, 4
    %v3343 = vmax.f32 %v3341, %v3342
    %v3344 = vrot.slane %v3343, 2
    %v3345 = vmax.f32 %v3343, %v3344
    %v3346 = vrot.slane %v3345, 1
    %v3347 = vmax.f32 %v3345, %v3346
    %v3348 = vpack.c.bf16 %v3227, %v3227
    %v3349 = vpack.c.bf16 %v3235, %v3235
    %v3350 = vpack.c.bf16 %v3243, %v3243
    %v3351 = vpack.c.bf16 %v3251, %v3251
    %v3352 = vpack.c.bf16 %v3259, %v3259
    %v3353 = vpack.c.bf16 %v3267, %v3267
    %v3354 = vpack.c.bf16 %v3275, %v3275
    %v3355 = vpack.c.bf16 %v3283, %v3283
    %v3356 = vpack.c.bf16 %v3291, %v3291
    %v3357 = vpack.c.bf16 %v3299, %v3299
    %v3358 = vpack.c.bf16 %v3307, %v3307
    %v3359 = vpack.c.bf16 %v3315, %v3315
    %v3360 = vpack.c.bf16 %v3323, %v3323
    %v3361 = vpack.c.bf16 %v3331, %v3331
    %v3362 = vpack.c.bf16 %v3339, %v3339
    %v3363 = vpack.c.bf16 %v3347, %v3347
    %v3364 = vld [vmem:[#allocation7] sm:$0xf]
    %v3365 = vld [vmem:[#allocation7 + $0x4] sm:$0xf]
    %v3366 = vld [vmem:[#allocation7 + $0x8] sm:$0xf]
    %v3367 = vld [vmem:[#allocation7 + $0xc] sm:$0xf]
    %v3368 = vld [vmem:[#allocation7 + $0x10] sm:$0xf]
    %v3369 = vld [vmem:[#allocation7 + $0x14] sm:$0xf]
    %v3370 = vld [vmem:[#allocation7 + $0x18] sm:$0xf]
    %v3371 = vld [vmem:[#allocation7 + $0x1c] sm:$0xf]
    %v3372 = vld [vmem:[#allocation7 + $0x20] sm:$0xf]
    %v3373 = vld [vmem:[#allocation7 + $0x24] sm:$0xf]
    %v3374 = vld [vmem:[#allocation7 + $0x28] sm:$0xf]
    %v3375 = vld [vmem:[#allocation7 + $0x2c] sm:$0xf]
    %v3376 = vld [vmem:[#allocation7 + $0x30] sm:$0xf]
    %v3377 = vld [vmem:[#allocation7 + $0x34] sm:$0xf]
    %v3378 = vld [vmem:[#allocation7 + $0x38] sm:$0xf]
    %v3379 = vld [vmem:[#allocation7 + $0x3c] sm:$0xf]
    %v3380 = vld [vmem:[#allocation7 + $0x40] sm:$0xf]
    %v3381 = vld [vmem:[#allocation7 + $0x44] sm:$0xf]
    %v3382 = vld [vmem:[#allocation7 + $0x48] sm:$0xf]
    %v3383 = vld [vmem:[#allocation7 + $0x4c] sm:$0xf]
    %v3384 = vld [vmem:[#allocation7 + $0x50] sm:$0xf]
    %v3385 = vld [vmem:[#allocation7 + $0x54] sm:$0xf]
    %v3386 = vld [vmem:[#allocation7 + $0x58] sm:$0xf]
    %v3387 = vld [vmem:[#allocation7 + $0x5c] sm:$0xf]
    %v3388 = vld [vmem:[#allocation7 + $0x60] sm:$0xf]
    %v3389 = vld [vmem:[#allocation7 + $0x64] sm:$0xf]
    %v3390 = vld [vmem:[#allocation7 + $0x68] sm:$0xf]
    %v3391 = vld [vmem:[#allocation7 + $0x6c] sm:$0xf]
    %v3392 = vld [vmem:[#allocation7 + $0x70] sm:$0xf]
    %v3393 = vld [vmem:[#allocation7 + $0x74] sm:$0xf]
    %v3394 = vld [vmem:[#allocation7 + $0x78] sm:$0xf]
    %v3395 = vld [vmem:[#allocation7 + $0x7c] sm:$0xf]
    %v3396 = vld [vmem:[%s4] sm:$0x1]
    %v3398 = vlaneseq
    %v3399 = vshrl.u32 %v3398, 7
    %v3400 = vsub.s32 0, %v3399
    %v3401 = vrot.slane %v3396, %v3400
    %v3419 = vunpack.c.l.b16 %v3348
    %v3420 = vunpack.c.l.b16 %v3349
    %v3421 = vunpack.c.l.b16 %v3350
    %v3422 = vunpack.c.l.b16 %v3351
    %v3423 = vunpack.c.l.b16 %v3352
    %v3424 = vunpack.c.l.b16 %v3353
    %v3425 = vunpack.c.l.b16 %v3354
    %v3426 = vunpack.c.l.b16 %v3355
    %v3427 = vunpack.c.l.b16 %v3356
    %v3428 = vunpack.c.l.b16 %v3357
    %v3429 = vunpack.c.l.b16 %v3358
    %v3430 = vunpack.c.l.b16 %v3359
    %v3431 = vunpack.c.l.b16 %v3360
    %v3432 = vunpack.c.l.b16 %v3361
    %v3433 = vunpack.c.l.b16 %v3362
    %v3434 = vunpack.c.l.b16 %v3363
    %vm3435 = vcmask 1041409
    %v3436 = vsel %vm3435, %v3421, %v3419
    %vm3437 = vcmask 1042434
    %v3438 = vsel %vm3437, %v3423, %v3436
    %vm3439 = vcmask 1043459
    %v3440 = vsel %vm3439, %v3425, %v3438
    %vm3441 = vcmask 1044484
    %v3442 = vsel %vm3441, %v3427, %v3440
    %vm3443 = vcmask 1045509
    %v3444 = vsel %vm3443, %v3429, %v3442
    %vm3445 = vcmask 1046534
    %v3446 = vsel %vm3445, %v3431, %v3444
    %vm3447 = vcmask 1047559
    %v3448 = vsel %vm3447, %v3433, %v3446
    %v3449 = vsel %vm3435, %v3422, %v3420
    %v3450 = vsel %vm3437, %v3424, %v3449
    %v3451 = vsel %vm3439, %v3426, %v3450
    %v3452 = vsel %vm3441, %v3428, %v3451
    %v3453 = vsel %vm3443, %v3430, %v3452
    %v3454 = vsel %vm3445, %v3432, %v3453
    %v3455 = vsel %vm3447, %v3434, %v3454
    %v3456 = vpack.c.b16 %v3448, %v3448
    %v3457 = vpack.c.b16 %v3455, %v3455
    %v3492 = vunpack.c.l.b16 %v3364
    %v3493 = vunpack.c.l.b16 %v3365
    %v3494 = vunpack.c.l.b16 %v3366
    %v3495 = vunpack.c.l.b16 %v3367
    %v3496 = vunpack.c.l.b16 %v3368
    %v3497 = vunpack.c.l.b16 %v3369
    %v3498 = vunpack.c.l.b16 %v3370
    %v3499 = vunpack.c.l.b16 %v3371
    %v3500 = vunpack.c.l.b16 %v3372
    %v3501 = vunpack.c.l.b16 %v3373
    %v3502 = vunpack.c.l.b16 %v3374
    %v3503 = vunpack.c.l.b16 %v3375
    %v3504 = vunpack.c.l.b16 %v3376
    %v3505 = vunpack.c.l.b16 %v3377
    %v3506 = vunpack.c.l.b16 %v3378
    %v3507 = vunpack.c.l.b16 %v3379
    %v3508 = vunpack.c.l.b16 %v3380
    %v3509 = vunpack.c.l.b16 %v3381
    %v3510 = vunpack.c.l.b16 %v3382
    %v3511 = vunpack.c.l.b16 %v3383
    %v3512 = vunpack.c.l.b16 %v3384
    %v3513 = vunpack.c.l.b16 %v3385
    %v3514 = vunpack.c.l.b16 %v3386
    %v3515 = vunpack.c.l.b16 %v3387
    %v3516 = vunpack.c.l.b16 %v3388
    %v3517 = vunpack.c.l.b16 %v3389
    %v3518 = vunpack.c.l.b16 %v3390
    %v3519 = vunpack.c.l.b16 %v3391
    %v3520 = vunpack.c.l.b16 %v3392
    %v3521 = vunpack.c.l.b16 %v3393
    %v3522 = vunpack.c.l.b16 %v3394
    %v3523 = vunpack.c.l.b16 %v3395
    %v3524 = vpack.c.b16 %v3493, %v3492
    %v3525 = vpack.c.b16 %v3495, %v3494
    %v3526 = vpack.c.b16 %v3497, %v3496
    %v3527 = vpack.c.b16 %v3499, %v3498
    %v3528 = vpack.c.b16 %v3501, %v3500
    %v3529 = vpack.c.b16 %v3503, %v3502
    %v3530 = vpack.c.b16 %v3505, %v3504
    %v3531 = vpack.c.b16 %v3507, %v3506
    %v3532 = vpack.c.b16 %v3509, %v3508
    %v3533 = vpack.c.b16 %v3511, %v3510
    %v3534 = vpack.c.b16 %v3513, %v3512
    %v3535 = vpack.c.b16 %v3515, %v3514
    %v3536 = vpack.c.b16 %v3517, %v3516
    %v3537 = vpack.c.b16 %v3519, %v3518
    %v3538 = vpack.c.b16 %v3521, %v3520
    %v3539 = vpack.c.b16 %v3523, %v3522
    %3556 = vmatprep.subr.bf16.mxu0 0
    %3557 = vmatpush1.bf16.msra.mxu0 %v3524
    %3558 = vmatprep.subr.bf16.mxu0 0
    %3559 = vmatpush1.bf16.msra.mxu0 %v3525
    %3560 = vmatprep.subr.bf16.mxu0 0
    %3561 = vmatpush1.bf16.msra.mxu0 %v3526
    %3562 = vmatprep.subr.bf16.mxu0 0
    %3563 = vmatpush1.bf16.msra.mxu0 %v3527
    %3564 = vmatprep.subr.bf16.mxu0 0
    %3565 = vmatpush1.bf16.msra.mxu0 %v3528
    %3566 = vmatprep.subr.bf16.mxu0 0
    %3567 = vmatpush1.bf16.msra.mxu0 %v3529
    %3568 = vmatprep.subr.bf16.mxu0 0
    %3569 = vmatpush1.bf16.msra.mxu0 %v3530
    %3570 = vmatprep.subr.bf16.mxu0 0
    %3571 = vmatpush1.bf16.msra.mxu0 %v3531
    %3572 = vmatprep.subr.bf16.mxu0 0
    %3573 = vmatpush1.bf16.msra.mxu0 %v3532
    %3574 = vmatprep.subr.bf16.mxu0 0
    %3575 = vmatpush1.bf16.msra.mxu0 %v3533
    %3576 = vmatprep.subr.bf16.mxu0 0
    %3577 = vmatpush1.bf16.msra.mxu0 %v3534
    %3578 = vmatprep.subr.bf16.mxu0 0
    %3579 = vmatpush1.bf16.msra.mxu0 %v3535
    %3580 = vmatprep.subr.bf16.mxu0 0
    %3581 = vmatpush1.bf16.msra.mxu0 %v3536
    %3582 = vmatprep.subr.bf16.mxu0 0
    %3583 = vmatpush1.bf16.msra.mxu0 %v3537
    %3584 = vmatprep.subr.bf16.mxu0 0
    %3585 = vmatpush1.bf16.msra.mxu0 %v3538
    %3586 = vmatprep.subr.bf16.mxu0 0
    %3587 = vmatpush1.bf16.msra.mxu0 %v3539
    %3588 = vmatprep.mubr.bf16.mxu0 %v3457
    %3589 = vmatmul.mubr.bf16.gmra.mrb[0].mxu0 %v3456
    %v3590 = vpop.f32.mrb[0].mxu0
    %v3591 = vadd.f32 %v3401, %v3590
    %v3592 = vpop.f32.mrb[0].mxu0
    %v3593 = vpop.f32.mrb[0].mxu0
    %v3594 = vpop.f32.mrb[0].mxu0
    %3595 = vdwg.mxu0
    %3596 = vmax.xlane.f32.xlu0 %v3591
    %v3597 = vpop.xlane.xlu0 %3596
    %v3598 = vsub.f32 %v3591, %v3597
    %v3599 = vmul.f32 %v3598, 1.442695
    %v3600 = vpow.pop %v3599
    %3601 = vadd.xlane.f32.xlu0 %v3600
    %v3602 = vpop.xlane.xlu0 %3601
    %v3603 = vlog2.pop %v3602
    %v3604 = vmul.f32 %v3603, 0.6931472
    %v3605 = vadd.f32 %v3604, %v3597
    %v3606 = vsub.f32 %v3591, %v3605
    %3607 = vst [vmem:[#allocation8] sm:$0xff] %v3606
    // Predicated region
    $region34: #{tpu_custom_call.1} parent=1 // pred_check
      _
    $region35: #{tpu_custom_call.1} parent=1 // pred_check_branch
      %3609 = sbr.rel (0) target = $region37
    $region36: #{tpu_custom_call.1} parent=1 // pred_region
      %s3611 = ssub.s32 128, 128
      %3612 = vsyncadd [#allocation4], %s3611
      %s3614 = sshll.u32 [#allocation8], 4
      %s3615 = int_to_ptr.vmem [resolvable:$true] %s3614
      %3617 = dma.vmem_to_hbm [thread:$0]  %s3615, 128, %s5, [#allocation4]
    $region37: #{tpu_custom_call.1} parent=1 // pred_fallthru
      _
    // Predicated region
    $region38: #{tpu_custom_call.1} parent=1 // pred_check
      _
    $region39: #{tpu_custom_call.1} parent=1 // pred_check_branch
      %3619 = sbr.rel (0) target = $region41
    $region40: #{tpu_custom_call.1} parent=1 // pred_region
      %3620 = dma.done [#allocation4], 128
    $region41: #{tpu_custom_call.1} parent=1 // pred_fallthru
      _
    %3621 = vsyncpa [#allocation3], 1
    %3622 = vsyncpa [#allocation6], 1
    %3623 = vsyncpa [#allocation4], 1

</llo_original>
